<compile_context>
chip_gen: v5e
topology: v5e:2x2
jax: 0.10.0
libtpu: 0.0.40
codegen_flags: <defaults>
</compile_context>

<pallas_src>
import math
from collections import namedtuple

import numpy as np
import jax
import jax.numpy as jnp
from jax.experimental import pallas as pl
from jax.experimental.pallas import tpu as pltpu

Genotype = namedtuple("Genotype", ["edges", "steps"])

NUM_INPUT_NODES = 8

# Backbone stand-in stage configs (channels match ntu features[-5:-1])
VIS_HW = [(8, 8), (4, 4), (2, 2), (1, 1)]
VIS_CH = [512, 1024, 2048, 2048]
SPE_T = [8, 4, 2, 1]
SPE_CH = [128, 256, 512, 512]


class Args:
    C = 32             # fusion channel width
    L = 8              # fusion sequence length
    multiplier = 2
    steps = 2
    num_outputs = 10


def _const_spec(shape):
    zeros = (0,) * len(shape)
    return pl.BlockSpec(shape, lambda b: zeros)


# --------------------------------------------------------------------------
# Single fused Pallas kernel (one grid step == one batch element)
# --------------------------------------------------------------------------
def build_forward_kernel(live_nodes, node_nsp, edges, n_steps, multiplier, L, C):
    n_nodes = len(live_nodes)
    inv_sqrt_c = 1.0 / math.sqrt(C)

    def kernel(*refs):
        flat_ref = refs[-1]                       # VMEM scratch (1, mult*L*C)
        o_ref = refs[-2]                          # (1, 1, NO)
        node_refs = refs[:5 * n_nodes]
        step_refs = refs[5 * n_nodes:5 * n_nodes + 2 * n_steps]
        wcls_ref = refs[5 * n_nodes + 2 * n_steps]
        clsb_ref = refs[5 * n_nodes + 2 * n_steps + 1]

        # ---- reshape_input_features: only genotype-selected nodes are live ----
        states = [None] * NUM_INPUT_NODES
        for j, node in enumerate(live_nodes):
            xp_ref, w1_ref, pool_ref, w2_ref, b2_ref = node_refs[5 * j:5 * j + 5]
            xp = xp_ref[0]                        # (Nsp, 3) pooled raw input, f32
            w1 = w1_ref[...]                      # (3, Cin) backbone stage 1x1 conv, f32
            # K=3 channel mix on the VPU (f32) + ReLU
            y = jnp.maximum(
                xp[:, 0:1] * w1[0:1, :]
                + xp[:, 1:2] * w1[1:2, :]
                + xp[:, 2:3] * w1[2:3, :], 0.0)   # (Nsp, Cin)
            nsp = node_nsp[j]
            if nsp >= L:
                # pool first: fewer rows into the big-K matmul
                pooled = jnp.dot(pool_ref[...], y,
                                 preferred_element_type=jnp.float32)          # (L, Cin)
                t = jnp.dot(pooled.astype(jnp.bfloat16), w2_ref[...],
                            preferred_element_type=jnp.float32)               # (L, C)
            else:
                # conv first (exact by associativity), tiny pool as VPU outer products
                t0 = jnp.dot(y.astype(jnp.bfloat16), w2_ref[...],
                             preferred_element_type=jnp.float32)              # (Nsp, C)
                t = pool_ref[:, 0:1] * t0[0:1, :]
                for n in range(1, nsp):
                    t = t + pool_ref[:, n:n + 1] * t0[n:n + 1, :]             # (L, C)
            # folded eval-mode BN bias + ReLU (after the pool, as in the reference)
            states[node] = jnp.maximum(t + b2_ref[...], 0.0)                  # (L, C)

        # ---- Found_FusionNetwork: scaled-dot-attention steps (per batch) ----
        for s in range(n_steps):
            wq_ref, wkv_ref = step_refs[2 * s], step_refs[2 * s + 1]
            i0, i1 = edges[2 * s][1], edges[2 * s + 1][1]
            xs, ys = states[i0], states[i1]
            q = jnp.dot(xs.astype(jnp.bfloat16), wq_ref[...],
                        preferred_element_type=jnp.float32)                   # (L, C)
            kv = jnp.dot(ys.astype(jnp.bfloat16), wkv_ref[...],
                         preferred_element_type=jnp.float32)                  # (L, 2C)
            k = kv[:, :C]
            v = kv[:, C:]
            scr = jax.lax.dot_general(q, k, (((1,), (1,)), ((), ())),
                                      preferred_element_type=jnp.float32) * inv_sqrt_c
            m = jnp.max(scr, axis=-1, keepdims=True)
            p = jnp.exp(scr - m)
            denom = jnp.sum(p, axis=-1, keepdims=True)
            a = p * pl.reciprocal(denom, approx=True)                         # EUP recip
            states.append(jnp.dot(a, v, preferred_element_type=jnp.float32))  # (L, C)

        # ---- central_classifier: single fused matmul over flattened states ----
        # Flatten order: s*L*C + l*C + c (classifier weight pre-permuted in wrapper).
        final_states = states[-multiplier:]
        for si, st in enumerate(final_states):
            base = si * L * C
            for l in range(L):
                flat_ref[:, base + l * C: base + (l + 1) * C] = st[l:l + 1, :]
        x_flat = flat_ref[...]                                                # (1, mult*L*C)
        logits = jnp.dot(x_flat.astype(jnp.bfloat16), wcls_ref[...],
                         preferred_element_type=jnp.float32) + clsb_ref[...]  # (1, NO)
        o_ref[0] = logits

    return kernel


# --------------------------------------------------------------------------
# Wrapper glue (raw-input pooling, weight folding, per-batch grid launch)
# --------------------------------------------------------------------------
def avg_pool_2d_to(x, hw):
    B, Cc, H, W = x.shape
    h, w = hw
    return x.reshape(B, Cc, h, H // h, w, W // w).mean(axis=(3, 5))


def adaptive_pool_matrix(N, L):
    """(L, N) matrix matching torch.nn.functional.adaptive_avg_pool1d."""
    P = np.zeros((L, N), np.float32)
    for l in range(L):
        s = (l * N) // L
        e = -((-((l + 1) * N)) // L)
        P[l, s:e] = 1.0 / (e - s)
    return jnp.asarray(P)


def node_spatial_feature(image, skeleton, node):
    """Backbone stand-in pooling of the 3-channel raw input for one stage.
    Returns ((B, Nsp, 3), Nsp) with the per-stage 1x1 conv applied in-kernel."""
    # TODO(synk): ntu.Visual (ResNet) / ntu.Spectrum (HCN) backbones unavailable;
    # stand-in = spatial/temporal pool + per-stage 1x1 conv.
    if node < 4:
        h, w = VIS_HW[node]
        x = avg_pool_2d_to(image, (h, w)).reshape(image.shape[0], 3, h * w)
    else:
        t = SPE_T[node - 4]
        xt = skeleton.mean(axis=-1)                                  # (B, 3, T)
        x = xt.reshape(xt.shape[0], 3, t, xt.shape[-1] // t).mean(axis=-1)
    nsp = x.shape[-1]
    return jnp.transpose(x, (0, 2, 1)).astype(jnp.float32), nsp     # (B, Nsp, 3)


def found_skeleton_image_net_forward(tensor_tuple, params, args, genotype):
    # forward(): skeleton, image = tensor_tuple[1], tensor_tuple[0]
    image, skeleton = tensor_tuple[0], tensor_tuple[1]
    B = image.shape[0]
    C, L, NO = args.C, args.L, args.num_outputs
    eps = 1e-5                                                       # eval-mode BatchNorm1d

    # Only backbone nodes selected by the genotype reach the logits; the rest
    # feed dead nn.ReLU branches and are skipped explicitly.
    live_nodes = sorted({e[1] for e in genotype.edges if e[1] < NUM_INPUT_NODES})

    kernel_inputs, in_specs, node_nsp = [], [], []
    for node in live_nodes:
        xp, nsp = node_spatial_feature(image, skeleton, node)               # (B, Nsp, 3)
        w1 = (params["visual"][node] if node < 4
              else params["spectrum"][node - 4]).astype(jnp.float32)        # (3, Cin)
        poolm = adaptive_pool_matrix(nsp, L)                                 # (L, Nsp)
        rp = params["reshape"][node]
        scale = rp["gamma"] / jnp.sqrt(rp["var"] + eps)
        bias = rp["beta"] - rp["mean"] * scale
        w2 = (rp["w"] * scale[None, :]).astype(jnp.bfloat16)                 # (Cin, C), unpadded
        b2 = bias.reshape(1, C).astype(jnp.float32)
        kernel_inputs += [xp, w1, poolm, w2, b2]
        in_specs += [pl.BlockSpec((1, nsp, 3), lambda b: (b, 0, 0)),
                     _const_spec(w1.shape), _const_spec(poolm.shape),
                     _const_spec(w2.shape), _const_spec(b2.shape)]
        node_nsp.append(nsp)

    for sp in params["steps"]:
        wq = sp["wq"].astype(jnp.bfloat16)                                   # (C, C)
        wkv = jnp.concatenate([sp["wk"], sp["wv"]], axis=1).astype(jnp.bfloat16)  # (C, 2C)
        kernel_inputs += [wq, wkv]
        in_specs += [_const_spec(wq.shape), _const_spec(wkv.shape)]

    # Classifier weight permuted from the torch per-state channel-major (C, L)
    # flatten (row = s*C*L + c*L + l) to the kernel's row-major (L, C) flatten
    # (row = s*L*C + l*C + c); unpadded, bf16.
    wc = params["cls_w"].reshape(args.multiplier, C, L, NO)
    wc = jnp.transpose(wc, (0, 2, 1, 3)).reshape(args.multiplier * L * C, NO)
    wc = wc.astype(jnp.bfloat16)
    cb = params["cls_b"].reshape(1, NO).astype(jnp.float32)
    kernel_inputs += [wc, cb]
    in_specs += [_const_spec(wc.shape), _const_spec(cb.shape)]

    kernel = build_forward_kernel(tuple(live_nodes), tuple(node_nsp),
                                  tuple(genotype.edges), args.steps,
                                  args.multiplier, L, C)

    # grid=(B,): one batch per grid step, both TensorCores used on v7x.
    # Weights have constant index_maps so they are DMA'd once; total weight
    # traffic is ~0.3 MiB (bf16, unpadded) and fits VMEM on all generations.
    logits = pl.pallas_call(
        kernel,
        out_shape=jax.ShapeDtypeStruct((B, 1, NO), jnp.float32),
        grid=(B,),
        in_specs=in_specs,
        out_specs=pl.BlockSpec((1, 1, NO), lambda b: (b, 0, 0)),
        scratch_shapes=[pltpu.VMEM((1, args.multiplier * L * C), jnp.float32)],
        compiler_params=pltpu.CompilerParams(dimension_semantics=("parallel",)),
    )(*kernel_inputs)
    return logits[:, 0, :]


# --------------------------------------------------------------------------
# Parameter init (same structure / math as the reference stand-in)
# --------------------------------------------------------------------------
def init_params(key, args, genotype):
    C_ins = VIS_CH + SPE_CH
    input_nodes = set(e[1] for e in genotype.edges if e[1] < NUM_INPUT_NODES)
    keys = iter(jax.random.split(key, 64))
    params = {}
    params["visual"] = [jax.random.normal(next(keys), (3, c), jnp.float32) / math.sqrt(3.0)
                        for c in VIS_CH]
    params["spectrum"] = [jax.random.normal(next(keys), (3, c), jnp.float32) / math.sqrt(3.0)
                          for c in SPE_CH]
    reshape = {}
    for i, cin in enumerate(C_ins):
        if i in input_nodes:
            reshape[i] = dict(
                w=jax.random.normal(next(keys), (cin, args.C), jnp.float32) / math.sqrt(cin),
                gamma=1.0 + 0.1 * jax.random.normal(next(keys), (args.C,), jnp.float32),
                beta=0.1 * jax.random.normal(next(keys), (args.C,), jnp.float32),
                mean=jnp.zeros((args.C,), jnp.float32),
                var=jnp.ones((args.C,), jnp.float32),
            )
    params["reshape"] = reshape
    params["steps"] = [dict(
        wq=jax.random.normal(next(keys), (args.C, args.C), jnp.float32) / math.sqrt(args.C),
        wk=jax.random.normal(next(keys), (args.C, args.C), jnp.float32) / math.sqrt(args.C),
        wv=jax.random.normal(next(keys), (args.C, args.C), jnp.float32) / math.sqrt(args.C),
    ) for _ in range(args.steps)]
    D = args.C * args.L * args.multiplier
    params["cls_w"] = jax.random.normal(next(keys), (D, args.num_outputs), jnp.float32) / math.sqrt(D)
    params["cls_b"] = jnp.zeros((args.num_outputs,), jnp.float32)
    return params


if __name__ == "__main__":
    args = Args()
    # genotype: edges = [(op, input_node)], 2 edges / step; node 8 == step-0 output
    genotype = Genotype(
        edges=[("skip", 1), ("skip", 6), ("skip", 3), ("skip", 8)],
        steps=["scaled_dot_attn", "scaled_dot_attn"],
    )
    key = jax.random.PRNGKey(0)
    k_img, k_skel, k_par = jax.random.split(key, 3)
    image = jax.random.normal(k_img, (2, 3, 32, 32), jnp.float32)     # NCHW
    skeleton = jax.random.normal(k_skel, (2, 3, 16, 8), jnp.float32)  # (B, coord, T, joints)
    params = init_params(k_par, args, genotype)

    logits = found_skeleton_image_net_forward((image, skeleton), params, args, genotype)
    jax.block_until_ready(logits)
    assert logits.shape == (2, args.num_outputs)
    assert bool(jnp.all(jnp.isfinite(logits)))
    print("KERNEL_OK")
</pallas_src>

<mosaic_0001>
module attributes {stable_mosaic.version = 11 : i64} {
  func.func @kernel(%arg0: i32, %arg1: memref<1x16x3xf32, #tpu.memory_space<vmem>>, %arg2: memref<3x1024xf32, #tpu.memory_space<vmem>>, %arg3: memref<8x16xf32, #tpu.memory_space<vmem>>, %arg4: memref<1024x32xbf16, #tpu.memory_space<vmem>>, %arg5: memref<1x32xf32, #tpu.memory_space<vmem>>, %arg6: memref<1x1x3xf32, #tpu.memory_space<vmem>>, %arg7: memref<3x2048xf32, #tpu.memory_space<vmem>>, %arg8: memref<8x1xf32, #tpu.memory_space<vmem>>, %arg9: memref<2048x32xbf16, #tpu.memory_space<vmem>>, %arg10: memref<1x32xf32, #tpu.memory_space<vmem>>, %arg11: memref<1x2x3xf32, #tpu.memory_space<vmem>>, %arg12: memref<3x512xf32, #tpu.memory_space<vmem>>, %arg13: memref<8x2xf32, #tpu.memory_space<vmem>>, %arg14: memref<512x32xbf16, #tpu.memory_space<vmem>>, %arg15: memref<1x32xf32, #tpu.memory_space<vmem>>, %arg16: memref<32x32xbf16, #tpu.memory_space<vmem>>, %arg17: memref<32x64xbf16, #tpu.memory_space<vmem>>, %arg18: memref<32x32xbf16, #tpu.memory_space<vmem>>, %arg19: memref<32x64xbf16, #tpu.memory_space<vmem>>, %arg20: memref<512x10xbf16, #tpu.memory_space<vmem>>, %arg21: memref<1x10xf32, #tpu.memory_space<vmem>>, %arg22: memref<1x1x10xf32, #tpu.memory_space<vmem>>, %arg23: memref<1x512xf32, #tpu.memory_space<vmem>>) attributes {dimension_semantics = [#tpu.dimension_semantics<parallel>], iteration_bounds = array<i64: 2>, scalar_prefetch = 0 : i64, scratch_operands = 1 : i64, tpu.core_type = #tpu.core_type<tc>, window_params = [{transform_indices = @transform_0, window_bounds = array<i64: 1, 16, 3>}, {pipeline_mode = #tpu.pipeline_mode<synchronous>, transform_indices = @transform_1, window_bounds = array<i64: 3, 1024>}, {pipeline_mode = #tpu.pipeline_mode<synchronous>, transform_indices = @transform_2, window_bounds = array<i64: 8, 16>}, {pipeline_mode = #tpu.pipeline_mode<synchronous>, transform_indices = @transform_3, window_bounds = array<i64: 1024, 32>}, {pipeline_mode = #tpu.pipeline_mode<synchronous>, transform_indices = @transform_4, window_bounds = array<i64: 1, 32>}, {transform_indices = @transform_5, window_bounds = array<i64: 1, 1, 3>}, {pipeline_mode = #tpu.pipeline_mode<synchronous>, transform_indices = @transform_6, window_bounds = array<i64: 3, 2048>}, {pipeline_mode = #tpu.pipeline_mode<synchronous>, transform_indices = @transform_7, window_bounds = array<i64: 8, 1>}, {pipeline_mode = #tpu.pipeline_mode<synchronous>, transform_indices = @transform_8, window_bounds = array<i64: 2048, 32>}, {pipeline_mode = #tpu.pipeline_mode<synchronous>, transform_indices = @transform_9, window_bounds = array<i64: 1, 32>}, {transform_indices = @transform_10, window_bounds = array<i64: 1, 2, 3>}, {pipeline_mode = #tpu.pipeline_mode<synchronous>, transform_indices = @transform_11, window_bounds = array<i64: 3, 512>}, {pipeline_mode = #tpu.pipeline_mode<synchronous>, transform_indices = @transform_12, window_bounds = array<i64: 8, 2>}, {pipeline_mode = #tpu.pipeline_mode<synchronous>, transform_indices = @transform_13, window_bounds = array<i64: 512, 32>}, {pipeline_mode = #tpu.pipeline_mode<synchronous>, transform_indices = @transform_14, window_bounds = array<i64: 1, 32>}, {pipeline_mode = #tpu.pipeline_mode<synchronous>, transform_indices = @transform_15, window_bounds = array<i64: 32, 32>}, {pipeline_mode = #tpu.pipeline_mode<synchronous>, transform_indices = @transform_16, window_bounds = array<i64: 32, 64>}, {pipeline_mode = #tpu.pipeline_mode<synchronous>, transform_indices = @transform_17, window_bounds = array<i64: 32, 32>}, {pipeline_mode = #tpu.pipeline_mode<synchronous>, transform_indices = @transform_18, window_bounds = array<i64: 32, 64>}, {pipeline_mode = #tpu.pipeline_mode<synchronous>, transform_indices = @transform_19, window_bounds = array<i64: 512, 10>}, {pipeline_mode = #tpu.pipeline_mode<synchronous>, transform_indices = @transform_20, window_bounds = array<i64: 1, 10>}, {transform_indices = @transform_21, window_bounds = array<i64: 1, 1, 10>}]} {
    %c0 = arith.constant 0 : index
    %c0_0 = arith.constant 0 : index
    %c0_1 = arith.constant 0 : index
    %0 = vector.load %arg1[%c0, %c0_0, %c0_1] : memref<1x16x3xf32, #tpu.memory_space<vmem>>, vector<1x16x3xf32>
    %1 = vector.shape_cast %0 : vector<1x16x3xf32> to vector<16x3xf32>
    %c0_2 = arith.constant 0 : index
    %c0_3 = arith.constant 0 : index
    %2 = vector.load %arg2[%c0_2, %c0_3] : memref<3x1024xf32, #tpu.memory_space<vmem>>, vector<3x1024xf32>
    %3 = vector.extract_strided_slice %1 {offsets = [0, 0], sizes = [16, 1], strides = [1, 1]} : vector<16x3xf32> to vector<16x1xf32>
    %4 = vector.extract_strided_slice %2 {offsets = [0, 0], sizes = [1, 1024], strides = [1, 1]} : vector<3x1024xf32> to vector<1x1024xf32>
    %5 = vector.broadcast %3 : vector<16x1xf32> to vector<16x1024xf32>
    %6 = vector.broadcast %4 : vector<1x1024xf32> to vector<16x1024xf32>
    %7 = arith.mulf %5, %6 : vector<16x1024xf32>
    %8 = vector.extract_strided_slice %1 {offsets = [0, 1], sizes = [16, 1], strides = [1, 1]} : vector<16x3xf32> to vector<16x1xf32>
    %9 = vector.extract_strided_slice %2 {offsets = [1, 0], sizes = [1, 1024], strides = [1, 1]} : vector<3x1024xf32> to vector<1x1024xf32>
    %10 = vector.broadcast %8 : vector<16x1xf32> to vector<16x1024xf32>
    %11 = vector.broadcast %9 : vector<1x1024xf32> to vector<16x1024xf32>
    %12 = arith.mulf %10, %11 : vector<16x1024xf32>
    %13 = arith.addf %7, %12 : vector<16x1024xf32>
    %14 = vector.extract_strided_slice %1 {offsets = [0, 2], sizes = [16, 1], strides = [1, 1]} : vector<16x3xf32> to vector<16x1xf32>
    %15 = vector.extract_strided_slice %2 {offsets = [2, 0], sizes = [1, 1024], strides = [1, 1]} : vector<3x1024xf32> to vector<1x1024xf32>
    %16 = vector.broadcast %14 : vector<16x1xf32> to vector<16x1024xf32>
    %17 = vector.broadcast %15 : vector<1x1024xf32> to vector<16x1024xf32>
    %18 = arith.mulf %16, %17 : vector<16x1024xf32>
    %19 = arith.addf %13, %18 : vector<16x1024xf32>
    %cst = arith.constant 0.000000e+00 : f32
    %20 = vector.broadcast %cst : f32 to vector<16x1024xf32>
    %21 = arith.maximumf %19, %20 : vector<16x1024xf32>
    %c0_4 = arith.constant 0 : index
    %c0_5 = arith.constant 0 : index
    %22 = vector.load %arg3[%c0_4, %c0_5] : memref<8x16xf32, #tpu.memory_space<vmem>>, vector<8x16xf32>
    %cst_6 = arith.constant dense<0.000000e+00> : vector<8x1024xf32>
    %23 = tpu.matmul %22, %21, %cst_6 {dimension_numbers = #tpu.dot_dimension_numbers<[1], [0], [0], [1], [0, 0, 1, 1], [], []>} : vector<8x16xf32>, vector<16x1024xf32>, vector<8x1024xf32> -> vector<8x1024xf32>
    %24 = arith.truncf %23 : vector<8x1024xf32> to vector<8x1024xbf16>
    %c0_7 = arith.constant 0 : index
    %c0_8 = arith.constant 0 : index
    %25 = vector.load %arg4[%c0_7, %c0_8] : memref<1024x32xbf16, #tpu.memory_space<vmem>>, vector<1024x32xbf16>
    %cst_9 = arith.constant dense<0.000000e+00> : vector<8x32xf32>
    %26 = tpu.matmul %24, %25, %cst_9 {dimension_numbers = #tpu.dot_dimension_numbers<[1], [0], [0], [1], [0, 0, 1, 1], [], []>} : vector<8x1024xbf16>, vector<1024x32xbf16>, vector<8x32xf32> -> vector<8x32xf32>
    %c0_10 = arith.constant 0 : index
    %c0_11 = arith.constant 0 : index
    %27 = vector.load %arg5[%c0_10, %c0_11] : memref<1x32xf32, #tpu.memory_space<vmem>>, vector<1x32xf32>
    %28 = vector.broadcast %27 : vector<1x32xf32> to vector<8x32xf32>
    %29 = arith.addf %26, %28 : vector<8x32xf32>
    %cst_12 = arith.constant 0.000000e+00 : f32
    %30 = vector.broadcast %cst_12 : f32 to vector<8x32xf32>
    %31 = arith.maximumf %29, %30 : vector<8x32xf32>
    %c0_13 = arith.constant 0 : index
    %c0_14 = arith.constant 0 : index
    %c0_15 = arith.constant 0 : index
    %32 = vector.load %arg6[%c0_13, %c0_14, %c0_15] : memref<1x1x3xf32, #tpu.memory_space<vmem>>, vector<1x1x3xf32>
    %33 = vector.shape_cast %32 : vector<1x1x3xf32> to vector<1x3xf32>
    %c0_16 = arith.constant 0 : index
    %c0_17 = arith.constant 0 : index
    %34 = vector.load %arg7[%c0_16, %c0_17] : memref<3x2048xf32, #tpu.memory_space<vmem>>, vector<3x2048xf32>
    %35 = vector.extract_strided_slice %33 {offsets = [0, 0], sizes = [1, 1], strides = [1, 1]} : vector<1x3xf32> to vector<1x1xf32>
    %36 = vector.extract_strided_slice %34 {offsets = [0, 0], sizes = [1, 2048], strides = [1, 1]} : vector<3x2048xf32> to vector<1x2048xf32>
    %37 = vector.broadcast %35 : vector<1x1xf32> to vector<1x2048xf32>
    %38 = arith.mulf %37, %36 : vector<1x2048xf32>
    %39 = vector.extract_strided_slice %33 {offsets = [0, 1], sizes = [1, 1], strides = [1, 1]} : vector<1x3xf32> to vector<1x1xf32>
    %40 = vector.extract_strided_slice %34 {offsets = [1, 0], sizes = [1, 2048], strides = [1, 1]} : vector<3x2048xf32> to vector<1x2048xf32>
    %41 = vector.broadcast %39 : vector<1x1xf32> to vector<1x2048xf32>
    %42 = arith.mulf %41, %40 : vector<1x2048xf32>
    %43 = arith.addf %38, %42 : vector<1x2048xf32>
    %44 = vector.extract_strided_slice %33 {offsets = [0, 2], sizes = [1, 1], strides = [1, 1]} : vector<1x3xf32> to vector<1x1xf32>
    %45 = vector.extract_strided_slice %34 {offsets = [2, 0], sizes = [1, 2048], strides = [1, 1]} : vector<3x2048xf32> to vector<1x2048xf32>
    %46 = vector.broadcast %44 : vector<1x1xf32> to vector<1x2048xf32>
    %47 = arith.mulf %46, %45 : vector<1x2048xf32>
    %48 = arith.addf %43, %47 : vector<1x2048xf32>
    %cst_18 = arith.constant 0.000000e+00 : f32
    %49 = vector.broadcast %cst_18 : f32 to vector<1x2048xf32>
    %50 = arith.maximumf %48, %49 : vector<1x2048xf32>
    %51 = arith.truncf %50 : vector<1x2048xf32> to vector<1x2048xbf16>
    %c0_19 = arith.constant 0 : index
    %c0_20 = arith.constant 0 : index
    %52 = vector.load %arg9[%c0_19, %c0_20] : memref<2048x32xbf16, #tpu.memory_space<vmem>>, vector<2048x32xbf16>
    %cst_21 = arith.constant dense<0.000000e+00> : vector<1x32xf32>
    %53 = tpu.matmul %51, %52, %cst_21 {dimension_numbers = #tpu.dot_dimension_numbers<[1], [0], [0], [1], [0, 0, 1, 1], [], []>} : vector<1x2048xbf16>, vector<2048x32xbf16>, vector<1x32xf32> -> vector<1x32xf32>
    %c0_22 = arith.constant 0 : index
    %c0_23 = arith.constant 0 : index
    %54 = vector.load %arg8[%c0_22, %c0_23] : memref<8x1xf32, #tpu.memory_space<vmem>>, vector<8x1xf32>
    %55 = vector.broadcast %54 : vector<8x1xf32> to vector<8x32xf32>
    %56 = vector.broadcast %53 : vector<1x32xf32> to vector<8x32xf32>
    %57 = arith.mulf %55, %56 : vector<8x32xf32>
    %c0_24 = arith.constant 0 : index
    %c0_25 = arith.constant 0 : index
    %58 = vector.load %arg10[%c0_24, %c0_25] : memref<1x32xf32, #tpu.memory_space<vmem>>, vector<1x32xf32>
    %59 = vector.broadcast %58 : vector<1x32xf32> to vector<8x32xf32>
    %60 = arith.addf %57, %59 : vector<8x32xf32>
    %cst_26 = arith.constant 0.000000e+00 : f32
    %61 = vector.broadcast %cst_26 : f32 to vector<8x32xf32>
    %62 = arith.maximumf %60, %61 : vector<8x32xf32>
    %c0_27 = arith.constant 0 : index
    %c0_28 = arith.constant 0 : index
    %c0_29 = arith.constant 0 : index
    %63 = vector.load %arg11[%c0_27, %c0_28, %c0_29] : memref<1x2x3xf32, #tpu.memory_space<vmem>>, vector<1x2x3xf32>
    %64 = vector.shape_cast %63 : vector<1x2x3xf32> to vector<2x3xf32>
    %c0_30 = arith.constant 0 : index
    %c0_31 = arith.constant 0 : index
    %65 = vector.load %arg12[%c0_30, %c0_31] : memref<3x512xf32, #tpu.memory_space<vmem>>, vector<3x512xf32>
    %66 = vector.extract_strided_slice %64 {offsets = [0, 0], sizes = [2, 1], strides = [1, 1]} : vector<2x3xf32> to vector<2x1xf32>
    %67 = vector.extract_strided_slice %65 {offsets = [0, 0], sizes = [1, 512], strides = [1, 1]} : vector<3x512xf32> to vector<1x512xf32>
    %68 = vector.broadcast %66 : vector<2x1xf32> to vector<2x512xf32>
    %69 = vector.broadcast %67 : vector<1x512xf32> to vector<2x512xf32>
    %70 = arith.mulf %68, %69 : vector<2x512xf32>
    %71 = vector.extract_strided_slice %64 {offsets = [0, 1], sizes = [2, 1], strides = [1, 1]} : vector<2x3xf32> to vector<2x1xf32>
    %72 = vector.extract_strided_slice %65 {offsets = [1, 0], sizes = [1, 512], strides = [1, 1]} : vector<3x512xf32> to vector<1x512xf32>
    %73 = vector.broadcast %71 : vector<2x1xf32> to vector<2x512xf32>
    %74 = vector.broadcast %72 : vector<1x512xf32> to vector<2x512xf32>
    %75 = arith.mulf %73, %74 : vector<2x512xf32>
    %76 = arith.addf %70, %75 : vector<2x512xf32>
    %77 = vector.extract_strided_slice %64 {offsets = [0, 2], sizes = [2, 1], strides = [1, 1]} : vector<2x3xf32> to vector<2x1xf32>
    %78 = vector.extract_strided_slice %65 {offsets = [2, 0], sizes = [1, 512], strides = [1, 1]} : vector<3x512xf32> to vector<1x512xf32>
    %79 = vector.broadcast %77 : vector<2x1xf32> to vector<2x512xf32>
    %80 = vector.broadcast %78 : vector<1x512xf32> to vector<2x512xf32>
    %81 = arith.mulf %79, %80 : vector<2x512xf32>
    %82 = arith.addf %76, %81 : vector<2x512xf32>
    %cst_32 = arith.constant 0.000000e+00 : f32
    %83 = vector.broadcast %cst_32 : f32 to vector<2x512xf32>
    %84 = arith.maximumf %82, %83 : vector<2x512xf32>
    %85 = arith.truncf %84 : vector<2x512xf32> to vector<2x512xbf16>
    %c0_33 = arith.constant 0 : index
    %c0_34 = arith.constant 0 : index
    %86 = vector.load %arg14[%c0_33, %c0_34] : memref<512x32xbf16, #tpu.memory_space<vmem>>, vector<512x32xbf16>
    %cst_35 = arith.constant dense<0.000000e+00> : vector<2x32xf32>
    %87 = tpu.matmul %85, %86, %cst_35 {dimension_numbers = #tpu.dot_dimension_numbers<[1], [0], [0], [1], [0, 0, 1, 1], [], []>} : vector<2x512xbf16>, vector<512x32xbf16>, vector<2x32xf32> -> vector<2x32xf32>
    %c0_36 = arith.constant 0 : index
    %c0_37 = arith.constant 0 : index
    %88 = vector.load %arg13[%c0_36, %c0_37] : memref<8x2xf32, #tpu.memory_space<vmem>>, vector<8x1xf32>
    %89 = vector.extract_strided_slice %87 {offsets = [0, 0], sizes = [1, 32], strides = [1, 1]} : vector<2x32xf32> to vector<1x32xf32>
    %90 = vector.broadcast %88 : vector<8x1xf32> to vector<8x32xf32>
    %91 = vector.broadcast %89 : vector<1x32xf32> to vector<8x32xf32>
    %92 = arith.mulf %90, %91 : vector<8x32xf32>
    %c0_38 = arith.constant 0 : index
    %c1 = arith.constant 1 : index
    %93 = vector.load %arg13[%c0_38, %c1] : memref<8x2xf32, #tpu.memory_space<vmem>>, vector<8x1xf32>
    %94 = vector.extract_strided_slice %87 {offsets = [1, 0], sizes = [1, 32], strides = [1, 1]} : vector<2x32xf32> to vector<1x32xf32>
    %95 = vector.broadcast %93 : vector<8x1xf32> to vector<8x32xf32>
    %96 = vector.broadcast %94 : vector<1x32xf32> to vector<8x32xf32>
    %97 = arith.mulf %95, %96 : vector<8x32xf32>
    %98 = arith.addf %92, %97 : vector<8x32xf32>
    %c0_39 = arith.constant 0 : index
    %c0_40 = arith.constant 0 : index
    %99 = vector.load %arg15[%c0_39, %c0_40] : memref<1x32xf32, #tpu.memory_space<vmem>>, vector<1x32xf32>
    %100 = vector.broadcast %99 : vector<1x32xf32> to vector<8x32xf32>
    %101 = arith.addf %98, %100 : vector<8x32xf32>
    %cst_41 = arith.constant 0.000000e+00 : f32
    %102 = vector.broadcast %cst_41 : f32 to vector<8x32xf32>
    %103 = arith.maximumf %101, %102 : vector<8x32xf32>
    %104 = arith.truncf %31 : vector<8x32xf32> to vector<8x32xbf16>
    %c0_42 = arith.constant 0 : index
    %c0_43 = arith.constant 0 : index
    %105 = vector.load %arg16[%c0_42, %c0_43] : memref<32x32xbf16, #tpu.memory_space<vmem>>, vector<32x32xbf16>
    %cst_44 = arith.constant dense<0.000000e+00> : vector<8x32xf32>
    %106 = tpu.matmul %104, %105, %cst_44 {dimension_numbers = #tpu.dot_dimension_numbers<[1], [0], [0], [1], [0, 0, 1, 1], [], []>} : vector<8x32xbf16>, vector<32x32xbf16>, vector<8x32xf32> -> vector<8x32xf32>
    %107 = arith.truncf %103 : vector<8x32xf32> to vector<8x32xbf16>
    %c0_45 = arith.constant 0 : index
    %c0_46 = arith.constant 0 : index
    %108 = vector.load %arg17[%c0_45, %c0_46] : memref<32x64xbf16, #tpu.memory_space<vmem>>, vector<32x64xbf16>
    %cst_47 = arith.constant dense<0.000000e+00> : vector<8x64xf32>
    %109 = tpu.matmul %107, %108, %cst_47 {dimension_numbers = #tpu.dot_dimension_numbers<[1], [0], [0], [1], [0, 0, 1, 1], [], []>} : vector<8x32xbf16>, vector<32x64xbf16>, vector<8x64xf32> -> vector<8x64xf32>
    %110 = vector.extract_strided_slice %109 {offsets = [0, 0], sizes = [8, 32], strides = [1, 1]} : vector<8x64xf32> to vector<8x32xf32>
    %111 = vector.extract_strided_slice %109 {offsets = [0, 32], sizes = [8, 32], strides = [1, 1]} : vector<8x64xf32> to vector<8x32xf32>
    %cst_48 = arith.constant dense<0.000000e+00> : vector<8x8xf32>
    %112 = tpu.matmul %106, %110, %cst_48 {dimension_numbers = #tpu.dot_dimension_numbers<[1], [1], [0], [0], [0, 0, 1, 0], [], []>} : vector<8x32xf32>, vector<8x32xf32>, vector<8x8xf32> -> vector<8x8xf32>
    %cst_49 = arith.constant 0.176776692 : f32
    %113 = vector.broadcast %cst_49 : f32 to vector<8x8xf32>
    %114 = arith.mulf %112, %113 : vector<8x8xf32>
    %cst_50 = arith.constant dense<0xFF800000> : vector<8xf32>
    %115 = vector.multi_reduction <maximumf>, %114, %cst_50 [1] : vector<8x8xf32> to vector<8xf32>
    %116 = vector.shape_cast %115 : vector<8xf32> to vector<8x1xf32>
    %117 = vector.broadcast %116 : vector<8x1xf32> to vector<8x8xf32>
    %118 = arith.subf %114, %117 : vector<8x8xf32>
    %119 = math.exp %118 : vector<8x8xf32>
    %cst_51 = arith.constant dense<0.000000e+00> : vector<8xf32>
    %120 = vector.multi_reduction <add>, %119, %cst_51 [1] : vector<8x8xf32> to vector<8xf32>
    %121 = vector.shape_cast %120 : vector<8xf32> to vector<8x1xf32>
    %122 = tpu.reciprocal %121 {approx = true} : vector<8x1xf32> -> vector<8x1xf32>
    %123 = vector.broadcast %122 : vector<8x1xf32> to vector<8x8xf32>
    %124 = arith.mulf %119, %123 : vector<8x8xf32>
    %cst_52 = arith.constant dense<0.000000e+00> : vector<8x32xf32>
    %125 = tpu.matmul %124, %111, %cst_52 {dimension_numbers = #tpu.dot_dimension_numbers<[1], [0], [0], [1], [0, 0, 1, 1], [], []>} : vector<8x8xf32>, vector<8x32xf32>, vector<8x32xf32> -> vector<8x32xf32>
    %126 = arith.truncf %62 : vector<8x32xf32> to vector<8x32xbf16>
    %c0_53 = arith.constant 0 : index
    %c0_54 = arith.constant 0 : index
    %127 = vector.load %arg18[%c0_53, %c0_54] : memref<32x32xbf16, #tpu.memory_space<vmem>>, vector<32x32xbf16>
    %cst_55 = arith.constant dense<0.000000e+00> : vector<8x32xf32>
    %128 = tpu.matmul %126, %127, %cst_55 {dimension_numbers = #tpu.dot_dimension_numbers<[1], [0], [0], [1], [0, 0, 1, 1], [], []>} : vector<8x32xbf16>, vector<32x32xbf16>, vector<8x32xf32> -> vector<8x32xf32>
    %129 = arith.truncf %125 : vector<8x32xf32> to vector<8x32xbf16>
    %c0_56 = arith.constant 0 : index
    %c0_57 = arith.constant 0 : index
    %130 = vector.load %arg19[%c0_56, %c0_57] : memref<32x64xbf16, #tpu.memory_space<vmem>>, vector<32x64xbf16>
    %cst_58 = arith.constant dense<0.000000e+00> : vector<8x64xf32>
    %131 = tpu.matmul %129, %130, %cst_58 {dimension_numbers = #tpu.dot_dimension_numbers<[1], [0], [0], [1], [0, 0, 1, 1], [], []>} : vector<8x32xbf16>, vector<32x64xbf16>, vector<8x64xf32> -> vector<8x64xf32>
    %132 = vector.extract_strided_slice %131 {offsets = [0, 0], sizes = [8, 32], strides = [1, 1]} : vector<8x64xf32> to vector<8x32xf32>
    %133 = vector.extract_strided_slice %131 {offsets = [0, 32], sizes = [8, 32], strides = [1, 1]} : vector<8x64xf32> to vector<8x32xf32>
    %cst_59 = arith.constant dense<0.000000e+00> : vector<8x8xf32>
    %134 = tpu.matmul %128, %132, %cst_59 {dimension_numbers = #tpu.dot_dimension_numbers<[1], [1], [0], [0], [0, 0, 1, 0], [], []>} : vector<8x32xf32>, vector<8x32xf32>, vector<8x8xf32> -> vector<8x8xf32>
    %cst_60 = arith.constant 0.176776692 : f32
    %135 = vector.broadcast %cst_60 : f32 to vector<8x8xf32>
    %136 = arith.mulf %134, %135 : vector<8x8xf32>
    %cst_61 = arith.constant dense<0xFF800000> : vector<8xf32>
    %137 = vector.multi_reduction <maximumf>, %136, %cst_61 [1] : vector<8x8xf32> to vector<8xf32>
    %138 = vector.shape_cast %137 : vector<8xf32> to vector<8x1xf32>
    %139 = vector.broadcast %138 : vector<8x1xf32> to vector<8x8xf32>
    %140 = arith.subf %136, %139 : vector<8x8xf32>
    %141 = math.exp %140 : vector<8x8xf32>
    %cst_62 = arith.constant dense<0.000000e+00> : vector<8xf32>
    %142 = vector.multi_reduction <add>, %141, %cst_62 [1] : vector<8x8xf32> to vector<8xf32>
    %143 = vector.shape_cast %142 : vector<8xf32> to vector<8x1xf32>
    %144 = tpu.reciprocal %143 {approx = true} : vector<8x1xf32> -> vector<8x1xf32>
    %145 = vector.broadcast %144 : vector<8x1xf32> to vector<8x8xf32>
    %146 = arith.mulf %141, %145 : vector<8x8xf32>
    %cst_63 = arith.constant dense<0.000000e+00> : vector<8x32xf32>
    %147 = tpu.matmul %146, %133, %cst_63 {dimension_numbers = #tpu.dot_dimension_numbers<[1], [0], [0], [1], [0, 0, 1, 1], [], []>} : vector<8x8xf32>, vector<8x32xf32>, vector<8x32xf32> -> vector<8x32xf32>
    %148 = vector.extract_strided_slice %125 {offsets = [0, 0], sizes = [1, 32], strides = [1, 1]} : vector<8x32xf32> to vector<1x32xf32>
    %c0_64 = arith.constant 0 : index
    %c0_65 = arith.constant 0 : index
    %149 = vector.load %arg23[%c0_64, %c0_65] : memref<1x512xf32, #tpu.memory_space<vmem>>, vector<1x32xf32>
    tpu.vector_store %arg23[%c0_64, %c0_65], %148 {strides = array<i32>} : memref<1x512xf32, #tpu.memory_space<vmem>>, vector<1x32xf32>,
    %150 = vector.extract_strided_slice %125 {offsets = [1, 0], sizes = [1, 32], strides = [1, 1]} : vector<8x32xf32> to vector<1x32xf32>
    %c0_66 = arith.constant 0 : index
    %c32 = arith.constant 32 : index
    %151 = vector.load %arg23[%c0_66, %c32] : memref<1x512xf32, #tpu.memory_space<vmem>>, vector<1x32xf32>
    tpu.vector_store %arg23[%c0_66, %c32], %150 {strides = array<i32>} : memref<1x512xf32, #tpu.memory_space<vmem>>, vector<1x32xf32>,
    %152 = vector.extract_strided_slice %125 {offsets = [2, 0], sizes = [1, 32], strides = [1, 1]} : vector<8x32xf32> to vector<1x32xf32>
    %c0_67 = arith.constant 0 : index
    %c64 = arith.constant 64 : index
    %153 = vector.load %arg23[%c0_67, %c64] : memref<1x512xf32, #tpu.memory_space<vmem>>, vector<1x32xf32>
    tpu.vector_store %arg23[%c0_67, %c64], %152 {strides = array<i32>} : memref<1x512xf32, #tpu.memory_space<vmem>>, vector<1x32xf32>,
    %154 = vector.extract_strided_slice %125 {offsets = [3, 0], sizes = [1, 32], strides = [1, 1]} : vector<8x32xf32> to vector<1x32xf32>
    %c0_68 = arith.constant 0 : index
    %c96 = arith.constant 96 : index
    %155 = vector.load %arg23[%c0_68, %c96] : memref<1x512xf32, #tpu.memory_space<vmem>>, vector<1x32xf32>
    tpu.vector_store %arg23[%c0_68, %c96], %154 {strides = array<i32>} : memref<1x512xf32, #tpu.memory_space<vmem>>, vector<1x32xf32>,
    %156 = vector.extract_strided_slice %125 {offsets = [4, 0], sizes = [1, 32], strides = [1, 1]} : vector<8x32xf32> to vector<1x32xf32>
    %c0_69 = arith.constant 0 : index
    %c128 = arith.constant 128 : index
    %157 = vector.load %arg23[%c0_69, %c128] : memref<1x512xf32, #tpu.memory_space<vmem>>, vector<1x32xf32>
    tpu.vector_store %arg23[%c0_69, %c128], %156 {strides = array<i32>} : memref<1x512xf32, #tpu.memory_space<vmem>>, vector<1x32xf32>,
    %158 = vector.extract_strided_slice %125 {offsets = [5, 0], sizes = [1, 32], strides = [1, 1]} : vector<8x32xf32> to vector<1x32xf32>
    %c0_70 = arith.constant 0 : index
    %c160 = arith.constant 160 : index
    %159 = vector.load %arg23[%c0_70, %c160] : memref<1x512xf32, #tpu.memory_space<vmem>>, vector<1x32xf32>
    tpu.vector_store %arg23[%c0_70, %c160], %158 {strides = array<i32>} : memref<1x512xf32, #tpu.memory_space<vmem>>, vector<1x32xf32>,
    %160 = vector.extract_strided_slice %125 {offsets = [6, 0], sizes = [1, 32], strides = [1, 1]} : vector<8x32xf32> to vector<1x32xf32>
    %c0_71 = arith.constant 0 : index
    %c192 = arith.constant 192 : index
    %161 = vector.load %arg23[%c0_71, %c192] : memref<1x512xf32, #tpu.memory_space<vmem>>, vector<1x32xf32>
    tpu.vector_store %arg23[%c0_71, %c192], %160 {strides = array<i32>} : memref<1x512xf32, #tpu.memory_space<vmem>>, vector<1x32xf32>,
    %162 = vector.extract_strided_slice %125 {offsets = [7, 0], sizes = [1, 32], strides = [1, 1]} : vector<8x32xf32> to vector<1x32xf32>
    %c0_72 = arith.constant 0 : index
    %c224 = arith.constant 224 : index
    %163 = vector.load %arg23[%c0_72, %c224] : memref<1x512xf32, #tpu.memory_space<vmem>>, vector<1x32xf32>
    tpu.vector_store %arg23[%c0_72, %c224], %162 {strides = array<i32>} : memref<1x512xf32, #tpu.memory_space<vmem>>, vector<1x32xf32>,
    %164 = vector.extract_strided_slice %147 {offsets = [0, 0], sizes = [1, 32], strides = [1, 1]} : vector<8x32xf32> to vector<1x32xf32>
    %c0_73 = arith.constant 0 : index
    %c256 = arith.constant 256 : index
    %165 = vector.load %arg23[%c0_73, %c256] : memref<1x512xf32, #tpu.memory_space<vmem>>, vector<1x32xf32>
    tpu.vector_store %arg23[%c0_73, %c256], %164 {strides = array<i32>} : memref<1x512xf32, #tpu.memory_space<vmem>>, vector<1x32xf32>,
    %166 = vector.extract_strided_slice %147 {offsets = [1, 0], sizes = [1, 32], strides = [1, 1]} : vector<8x32xf32> to vector<1x32xf32>
    %c0_74 = arith.constant 0 : index
    %c288 = arith.constant 288 : index
    %167 = vector.load %arg23[%c0_74, %c288] : memref<1x512xf32, #tpu.memory_space<vmem>>, vector<1x32xf32>
    tpu.vector_store %arg23[%c0_74, %c288], %166 {strides = array<i32>} : memref<1x512xf32, #tpu.memory_space<vmem>>, vector<1x32xf32>,
    %168 = vector.extract_strided_slice %147 {offsets = [2, 0], sizes = [1, 32], strides = [1, 1]} : vector<8x32xf32> to vector<1x32xf32>
    %c0_75 = arith.constant 0 : index
    %c320 = arith.constant 320 : index
    %169 = vector.load %arg23[%c0_75, %c320] : memref<1x512xf32, #tpu.memory_space<vmem>>, vector<1x32xf32>
    tpu.vector_store %arg23[%c0_75, %c320], %168 {strides = array<i32>} : memref<1x512xf32, #tpu.memory_space<vmem>>, vector<1x32xf32>,
    %170 = vector.extract_strided_slice %147 {offsets = [3, 0], sizes = [1, 32], strides = [1, 1]} : vector<8x32xf32> to vector<1x32xf32>
    %c0_76 = arith.constant 0 : index
    %c352 = arith.constant 352 : index
    %171 = vector.load %arg23[%c0_76, %c352] : memref<1x512xf32, #tpu.memory_space<vmem>>, vector<1x32xf32>
    tpu.vector_store %arg23[%c0_76, %c352], %170 {strides = array<i32>} : memref<1x512xf32, #tpu.memory_space<vmem>>, vector<1x32xf32>,
    %172 = vector.extract_strided_slice %147 {offsets = [4, 0], sizes = [1, 32], strides = [1, 1]} : vector<8x32xf32> to vector<1x32xf32>
    %c0_77 = arith.constant 0 : index
    %c384 = arith.constant 384 : index
    %173 = vector.load %arg23[%c0_77, %c384] : memref<1x512xf32, #tpu.memory_space<vmem>>, vector<1x32xf32>
    tpu.vector_store %arg23[%c0_77, %c384], %172 {strides = array<i32>} : memref<1x512xf32, #tpu.memory_space<vmem>>, vector<1x32xf32>,
    %174 = vector.extract_strided_slice %147 {offsets = [5, 0], sizes = [1, 32], strides = [1, 1]} : vector<8x32xf32> to vector<1x32xf32>
    %c0_78 = arith.constant 0 : index
    %c416 = arith.constant 416 : index
    %175 = vector.load %arg23[%c0_78, %c416] : memref<1x512xf32, #tpu.memory_space<vmem>>, vector<1x32xf32>
    tpu.vector_store %arg23[%c0_78, %c416], %174 {strides = array<i32>} : memref<1x512xf32, #tpu.memory_space<vmem>>, vector<1x32xf32>,
    %176 = vector.extract_strided_slice %147 {offsets = [6, 0], sizes = [1, 32], strides = [1, 1]} : vector<8x32xf32> to vector<1x32xf32>
    %c0_79 = arith.constant 0 : index
    %c448 = arith.constant 448 : index
    %177 = vector.load %arg23[%c0_79, %c448] : memref<1x512xf32, #tpu.memory_space<vmem>>, vector<1x32xf32>
    tpu.vector_store %arg23[%c0_79, %c448], %176 {strides = array<i32>} : memref<1x512xf32, #tpu.memory_space<vmem>>, vector<1x32xf32>,
    %178 = vector.extract_strided_slice %147 {offsets = [7, 0], sizes = [1, 32], strides = [1, 1]} : vector<8x32xf32> to vector<1x32xf32>
    %c0_80 = arith.constant 0 : index
    %c480 = arith.constant 480 : index
    %179 = vector.load %arg23[%c0_80, %c480] : memref<1x512xf32, #tpu.memory_space<vmem>>, vector<1x32xf32>
    tpu.vector_store %arg23[%c0_80, %c480], %178 {strides = array<i32>} : memref<1x512xf32, #tpu.memory_space<vmem>>, vector<1x32xf32>,
    %c0_81 = arith.constant 0 : index
    %c0_82 = arith.constant 0 : index
    %180 = vector.load %arg23[%c0_81, %c0_82] : memref<1x512xf32, #tpu.memory_space<vmem>>, vector<1x512xf32>
    %181 = arith.truncf %180 : vector<1x512xf32> to vector<1x512xbf16>
    %c0_83 = arith.constant 0 : index
    %c0_84 = arith.constant 0 : index
    %182 = vector.load %arg20[%c0_83, %c0_84] : memref<512x10xbf16, #tpu.memory_space<vmem>>, vector<512x10xbf16>
    %cst_85 = arith.constant dense<0.000000e+00> : vector<1x10xf32>
    %183 = tpu.matmul %181, %182, %cst_85 {dimension_numbers = #tpu.dot_dimension_numbers<[1], [0], [0], [1], [0, 0, 1, 1], [], []>} : vector<1x512xbf16>, vector<512x10xbf16>, vector<1x10xf32> -> vector<1x10xf32>
    %c0_86 = arith.constant 0 : index
    %c0_87 = arith.constant 0 : index
    %184 = vector.load %arg21[%c0_86, %c0_87] : memref<1x10xf32, #tpu.memory_space<vmem>>, vector<1x10xf32>
    %185 = arith.addf %183, %184 : vector<1x10xf32>
    %c0_88 = arith.constant 0 : index
    %c0_89 = arith.constant 0 : index
    %c0_90 = arith.constant 0 : index
    %186 = vector.load %arg22[%c0_88, %c0_89, %c0_90] : memref<1x1x10xf32, #tpu.memory_space<vmem>>, vector<1x1x10xf32>
    %187 = vector.shape_cast %186 : vector<1x1x10xf32> to vector<1x10xf32>
    %188 = vector.shape_cast %185 : vector<1x10xf32> to vector<1x1x10xf32>
    tpu.vector_store %arg22[%c0_88, %c0_89, %c0_90], %188 {strides = array<i32>} : memref<1x1x10xf32, #tpu.memory_space<vmem>>, vector<1x1x10xf32>,
    return
  }
  func.func @transform_0(%arg0: i32) -> (i32, i32, i32) {
    %c0_i32 = arith.constant 0 : i32
    %c0_i32_0 = arith.constant 0 : i32
    %c0_i32_1 = arith.constant 0 : i32
    return %arg0, %c0_i32, %c0_i32_0 : i32, i32, i32
  }
  func.func @transform_1(%arg0: i32) -> (i32, i32) {
    %c0_i32 = arith.constant 0 : i32
    %c0_i32_0 = arith.constant 0 : i32
    %c0_i32_1 = arith.constant 0 : i32
    return %c0_i32, %c0_i32_0 : i32, i32
  }
  func.func @transform_2(%arg0: i32) -> (i32, i32) {
    %c0_i32 = arith.constant 0 : i32
    %c0_i32_0 = arith.constant 0 : i32
    %c0_i32_1 = arith.constant 0 : i32
    return %c0_i32, %c0_i32_0 : i32, i32
  }
  func.func @transform_3(%arg0: i32) -> (i32, i32) {
    %c0_i32 = arith.constant 0 : i32
    %c0_i32_0 = arith.constant 0 : i32
    %c0_i32_1 = arith.constant 0 : i32
    return %c0_i32, %c0_i32_0 : i32, i32
  }
  func.func @transform_4(%arg0: i32) -> (i32, i32) {
    %c0_i32 = arith.constant 0 : i32
    %c0_i32_0 = arith.constant 0 : i32
    %c0_i32_1 = arith.constant 0 : i32
    return %c0_i32, %c0_i32_0 : i32, i32
  }
  func.func @transform_5(%arg0: i32) -> (i32, i32, i32) {
    %c0_i32 = arith.constant 0 : i32
    %c0_i32_0 = arith.constant 0 : i32
    %c0_i32_1 = arith.constant 0 : i32
    return %arg0, %c0_i32, %c0_i32_0 : i32, i32, i32
  }
  func.func @transform_6(%arg0: i32) -> (i32, i32) {
    %c0_i32 = arith.constant 0 : i32
    %c0_i32_0 = arith.constant 0 : i32
    %c0_i32_1 = arith.constant 0 : i32
    return %c0_i32, %c0_i32_0 : i32, i32
  }
  func.func @transform_7(%arg0: i32) -> (i32, i32) {
    %c0_i32 = arith.constant 0 : i32
    %c0_i32_0 = arith.constant 0 : i32
    %c0_i32_1 = arith.constant 0 : i32
    return %c0_i32, %c0_i32_0 : i32, i32
  }
  func.func @transform_8(%arg0: i32) -> (i32, i32) {
    %c0_i32 = arith.constant 0 : i32
    %c0_i32_0 = arith.constant 0 : i32
    %c0_i32_1 = arith.constant 0 : i32
    return %c0_i32, %c0_i32_0 : i32, i32
  }
  func.func @transform_9(%arg0: i32) -> (i32, i32) {
    %c0_i32 = arith.constant 0 : i32
    %c0_i32_0 = arith.constant 0 : i32
    %c0_i32_1 = arith.constant 0 : i32
    return %c0_i32, %c0_i32_0 : i32, i32
  }
  func.func @transform_10(%arg0: i32) -> (i32, i32, i32) {
    %c0_i32 = arith.constant 0 : i32
    %c0_i32_0 = arith.constant 0 : i32
    %c0_i32_1 = arith.constant 0 : i32
    return %arg0, %c0_i32, %c0_i32_0 : i32, i32, i32
  }
  func.func @transform_11(%arg0: i32) -> (i32, i32) {
    %c0_i32 = arith.constant 0 : i32
    %c0_i32_0 = arith.constant 0 : i32
    %c0_i32_1 = arith.constant 0 : i32
    return %c0_i32, %c0_i32_0 : i32, i32
  }
  func.func @transform_12(%arg0: i32) -> (i32, i32) {
    %c0_i32 = arith.constant 0 : i32
    %c0_i32_0 = arith.constant 0 : i32
    %c0_i32_1 = arith.constant 0 : i32
    return %c0_i32, %c0_i32_0 : i32, i32
  }
  func.func @transform_13(%arg0: i32) -> (i32, i32) {
    %c0_i32 = arith.constant 0 : i32
    %c0_i32_0 = arith.constant 0 : i32
    %c0_i32_1 = arith.constant 0 : i32
    return %c0_i32, %c0_i32_0 : i32, i32
  }
  func.func @transform_14(%arg0: i32) -> (i32, i32) {
    %c0_i32 = arith.constant 0 : i32
    %c0_i32_0 = arith.constant 0 : i32
    %c0_i32_1 = arith.constant 0 : i32
    return %c0_i32, %c0_i32_0 : i32, i32
  }
  func.func @transform_15(%arg0: i32) -> (i32, i32) {
    %c0_i32 = arith.constant 0 : i32
    %c0_i32_0 = arith.constant 0 : i32
    %c0_i32_1 = arith.constant 0 : i32
    return %c0_i32, %c0_i32_0 : i32, i32
  }
  func.func @transform_16(%arg0: i32) -> (i32, i32) {
    %c0_i32 = arith.constant 0 : i32
    %c0_i32_0 = arith.constant 0 : i32
    %c0_i32_1 = arith.constant 0 : i32
    return %c0_i32, %c0_i32_0 : i32, i32
  }
  func.func @transform_17(%arg0: i32) -> (i32, i32) {
    %c0_i32 = arith.constant 0 : i32
    %c0_i32_0 = arith.constant 0 : i32
    %c0_i32_1 = arith.constant 0 : i32
    return %c0_i32, %c0_i32_0 : i32, i32
  }
  func.func @transform_18(%arg0: i32) -> (i32, i32) {
    %c0_i32 = arith.constant 0 : i32
    %c0_i32_0 = arith.constant 0 : i32
    %c0_i32_1 = arith.constant 0 : i32
    return %c0_i32, %c0_i32_0 : i32, i32
  }
  func.func @transform_19(%arg0: i32) -> (i32, i32) {
    %c0_i32 = arith.constant 0 : i32
    %c0_i32_0 = arith.constant 0 : i32
    %c0_i32_1 = arith.constant 0 : i32
    return %c0_i32, %c0_i32_0 : i32, i32
  }
  func.func @transform_20(%arg0: i32) -> (i32, i32) {
    %c0_i32 = arith.constant 0 : i32
    %c0_i32_0 = arith.constant 0 : i32
    %c0_i32_1 = arith.constant 0 : i32
    return %c0_i32, %c0_i32_0 : i32, i32
  }
  func.func @transform_21(%arg0: i32) -> (i32, i32, i32) {
    %c0_i32 = arith.constant 0 : i32
    %c0_i32_0 = arith.constant 0 : i32
    %c0_i32_1 = arith.constant 0 : i32
    return %arg0, %c0_i32, %c0_i32_0 : i32, i32, i32
  }
}

</mosaic_0001>

<llo_original>
// kernel: tpu_custom_call.1
$region0: #{tpu_custom_call.1}
  #allocation0 [shape = 'u32[]', space=smem, size = 0x4, offset = 0x4, fixed_abs, tag = 'smem constant byte address 0x4 - core index']
  #allocation1 [shape = 'u32[72,128]{1,0:T(1,128)}', space=vmem, size = 0x9000, scoped, tag = 'internal scratch']
  #allocation2 [shape = 'f32[1,512]{1,0:T(1,128)}', space=vmem, size = 0x800, scoped, tag = 'scratch operand']
  %s0 = inlined_call_operand.vmem [shape: f32[2,16,3], index: 0, kind: input, shape index: {}]
  %s1 = inlined_call_operand.vmem [shape: f32[3,1024], index: 1, kind: input, shape index: {}]
  %s2 = inlined_call_operand.vmem [shape: f32[8,16], index: 2, kind: input, shape index: {}]
  %s3 = inlined_call_operand.vmem [shape: bf16[1024,32], index: 3, kind: input, shape index: {}]
  %s4 = inlined_call_operand.vmem [shape: f32[1,32], index: 4, kind: input, shape index: {}]
  %s5 = inlined_call_operand.vmem [shape: f32[2,1,3], index: 5, kind: input, shape index: {}]
  %s6 = inlined_call_operand.vmem [shape: f32[3,2048], index: 6, kind: input, shape index: {}]
  %s7 = inlined_call_operand.vmem [shape: f32[8,1], index: 7, kind: input, shape index: {}]
  %s8 = inlined_call_operand.vmem [shape: bf16[2048,32], index: 8, kind: input, shape index: {}]
  %s9 = inlined_call_operand.vmem [shape: f32[1,32], index: 9, kind: input, shape index: {}]
  %s10 = inlined_call_operand.vmem [shape: f32[2,2,3], index: 10, kind: input, shape index: {}]
  %s11 = inlined_call_operand.vmem [shape: f32[3,512], index: 11, kind: input, shape index: {}]
  %s12 = inlined_call_operand.vmem [shape: f32[8,2], index: 12, kind: input, shape index: {}]
  %s13 = inlined_call_operand.vmem [shape: bf16[512,32], index: 13, kind: input, shape index: {}]
  %s14 = inlined_call_operand.vmem [shape: f32[1,32], index: 14, kind: input, shape index: {}]
  %s15 = inlined_call_operand.vmem [shape: bf16[32,32], index: 15, kind: input, shape index: {}]
  %s16 = inlined_call_operand.vmem [shape: bf16[32,64], index: 16, kind: input, shape index: {}]
  %s17 = inlined_call_operand.vmem [shape: bf16[32,32], index: 17, kind: input, shape index: {}]
  %s18 = inlined_call_operand.vmem [shape: bf16[32,64], index: 18, kind: input, shape index: {}]
  %s19 = inlined_call_operand.vmem [shape: bf16[512,10], index: 19, kind: input, shape index: {}]
  %s20 = inlined_call_operand.vmem [shape: f32[1,10], index: 20, kind: input, shape index: {}]
  %s21 = inlined_call_operand.hbm [shape: f32[2,1,10], index: 21, kind: output, shape index: {}]
  %s22 = sld [smem:[#allocation0]]
  $region117: #{tpu_custom_call.1} parent=0
    _
  %s24 = ssub.s32 1, %s22
  %s25 = scalar_select 0, %s24, %s22
  $region1: #{tpu_custom_call.1} parent=0
    #allocation3 [shape = 'u8[1024]{0}', space=vmem, size = 0x400, scoped, tag = 'output window, operand 0']
    #allocation4 [shape = 's32[2]{0}', space=sflag, size = 0x8, scoped, tag = 'scoped memory for tpu_custom_call.1']
    %26 = vsyncpa [#allocation4], 0
    %s27 = scalar_lea.sflag [#allocation4], 1
    %28 = vsyncpa %s27, 0
    loop: start=0, step=1, limit=4
    $region2: #{tpu_custom_call.1} parent=1 // loop_pre_header
      _
    $region3: #{tpu_custom_call.1} parent=1 // loop_header
      %s30 = sphi 0, %s34
      %p31 = scmp.ge.s32.totalorder %s30, 4
      %s40 = sphi 0, %s42
      %s43 = sphi 0, %s40
      %s44 = sphi 0, %s43
      %s60 = sphi 0, %s44
      %s64 = sphi 0, %s64
      %s66 = sphi 0, %s64
      %s67 = sphi 0, %s66
      %s81 = sphi 0, %s67
      %s85 = sphi 0, %s85
      %s87 = sphi 0, %s85
      %s88 = sphi 0, %s87
      %s102 = sphi 0, %s88
      %s106 = sphi 0, %s106
      %s108 = sphi 0, %s106
      %s109 = sphi 0, %s108
      %s123 = sphi 0, %s109
      %s127 = sphi 0, %s127
      %s129 = sphi 0, %s127
      %s130 = sphi 0, %s129
      %s144 = sphi 0, %s130
      %s150 = sphi 0, %s152
      %s153 = sphi 0, %s150
      %s154 = sphi 0, %s153
      %s170 = sphi 0, %s154
      %s174 = sphi 0, %s174
      %s176 = sphi 0, %s174
      %s177 = sphi 0, %s176
      %s191 = sphi 0, %s177
      %s195 = sphi 0, %s195
      %s197 = sphi 0, %s195
      %s198 = sphi 0, %s197
      %s212 = sphi 0, %s198
      %s216 = sphi 0, %s216
      %s218 = sphi 0, %s216
      %s219 = sphi 0, %s218
      %s233 = sphi 0, %s219
      %s237 = sphi 0, %s237
      %s239 = sphi 0, %s237
      %s240 = sphi 0, %s239
      %s254 = sphi 0, %s240
      %s260 = sphi 0, %s262
      %s263 = sphi 0, %s260
      %s264 = sphi 0, %s263
      %s280 = sphi 0, %s264
      %s284 = sphi 0, %s284
      %s286 = sphi 0, %s284
      %s287 = sphi 0, %s286
      %s301 = sphi 0, %s287
      %s305 = sphi 0, %s305
      %s307 = sphi 0, %s305
      %s308 = sphi 0, %s307
      %s322 = sphi 0, %s308
      %s326 = sphi 0, %s326
      %s328 = sphi 0, %s326
      %s329 = sphi 0, %s328
      %s343 = sphi 0, %s329
      %s347 = sphi 0, %s347
      %s349 = sphi 0, %s347
      %s350 = sphi 0, %s349
      %s364 = sphi 0, %s350
      %s368 = sphi 0, %s368
      %s370 = sphi 0, %s368
      %s371 = sphi 0, %s370
      %s385 = sphi 0, %s371
      %s389 = sphi 0, %s389
      %s391 = sphi 0, %s389
      %s392 = sphi 0, %s391
      %s406 = sphi 0, %s392
      %s410 = sphi 0, %s410
      %s412 = sphi 0, %s410
      %s413 = sphi 0, %s412
      %s427 = sphi 0, %s413
      %s431 = sphi 0, %s431
      %s433 = sphi 0, %s431
      %s434 = sphi 0, %s433
      %s448 = sphi 0, %s434
      %s452 = sphi 0, %s452
      %s454 = sphi 0, %s452
      %s455 = sphi 0, %s454
      %s469 = sphi 0, %s455
      %s473 = sphi 0, %s473
      %s475 = sphi 0, %s473
      %s476 = sphi 0, %s475
      %s490 = sphi 0, %s476
      %s496 = sphi 0, %s498
      %s499 = sphi 0, %s496
      %s500 = sphi 0, %s499
      %s516 = sphi 0, %s500
    $region4: #{tpu_custom_call.1} parent=1 // loop_header_branch
      %33 = sbr.rel (%p31) target = $region8
    $region5: #{tpu_custom_call.1} parent=1 // loop_body
      %s35 = ssub.s32 %s30, 1
      %s36 = ssub.s32 %s30, 2
      %s37 = sadd.s32 %s30, 1
      %s38 = ssub.s32 %s30, %s37
      %p39 = scmp.eq.s32.totalorder %s38, 0
      %s41 = sadd.s32 %s40, 1
      %s42 = scalar_select %p39, %s40, %s41
      %p45 = pneg %p39
      %p46 = scmp.eq.s32.totalorder %s30, 1
      %p47 = por %p45, %p46
      %p48 = scmp.ne.s32.totalorder %s40, %s43
      %p49 = scmp.eq.s32.totalorder %s30, 0
      %p50 = por %p48, %p49
      %p51 = scmp.ne.s32.totalorder %s40, %s43
      %p52 = scmp.eq.s32.totalorder %s35, 1
      %p53 = por %p51, %p52
      %p54 = scmp.ne.s32.totalorder %s43, %s44
      %p55 = scmp.eq.s32.totalorder %s35, 0
      %p56 = por %p54, %p55
      %p57 = scmp.ne.s32.totalorder %s43, %s44
      %p58 = scmp.eq.s32.totalorder %s36, 1
      %p59 = por %p57, %p58
      %p61 = scmp.ne.s32.totalorder %s44, %s60
      %p62 = scmp.eq.s32.totalorder %s36, 0
      %p63 = por %p61, %p62
      %s65 = sadd.s32 %s64, 1
      %p68 = scmp.eq.s32.totalorder %s30, 1
      %p69 = scmp.ne.s32.totalorder %s64, %s66
      %p70 = scmp.eq.s32.totalorder %s30, 0
      %p71 = por %p69, %p70
      %p72 = scmp.ne.s32.totalorder %s64, %s66
      %p73 = scmp.eq.s32.totalorder %s35, 1
      %p74 = por %p72, %p73
      %p75 = scmp.ne.s32.totalorder %s66, %s67
      %p76 = scmp.eq.s32.totalorder %s35, 0
      %p77 = por %p75, %p76
      %p78 = scmp.ne.s32.totalorder %s66, %s67
      %p79 = scmp.eq.s32.totalorder %s36, 1
      %p80 = por %p78, %p79
      %p82 = scmp.ne.s32.totalorder %s67, %s81
      %p83 = scmp.eq.s32.totalorder %s36, 0
      %p84 = por %p82, %p83
      %s86 = sadd.s32 %s85, 1
      %p89 = scmp.eq.s32.totalorder %s30, 1
      %p90 = scmp.ne.s32.totalorder %s85, %s87
      %p91 = scmp.eq.s32.totalorder %s30, 0
      %p92 = por %p90, %p91
      %p93 = scmp.ne.s32.totalorder %s85, %s87
      %p94 = scmp.eq.s32.totalorder %s35, 1
      %p95 = por %p93, %p94
      %p96 = scmp.ne.s32.totalorder %s87, %s88
      %p97 = scmp.eq.s32.totalorder %s35, 0
      %p98 = por %p96, %p97
      %p99 = scmp.ne.s32.totalorder %s87, %s88
      %p100 = scmp.eq.s32.totalorder %s36, 1
      %p101 = por %p99, %p100
      %p103 = scmp.ne.s32.totalorder %s88, %s102
      %p104 = scmp.eq.s32.totalorder %s36, 0
      %p105 = por %p103, %p104
      %s107 = sadd.s32 %s106, 1
      %p110 = scmp.eq.s32.totalorder %s30, 1
      %p111 = scmp.ne.s32.totalorder %s106, %s108
      %p112 = scmp.eq.s32.totalorder %s30, 0
      %p113 = por %p111, %p112
      %p114 = scmp.ne.s32.totalorder %s106, %s108
      %p115 = scmp.eq.s32.totalorder %s35, 1
      %p116 = por %p114, %p115
      %p117 = scmp.ne.s32.totalorder %s108, %s109
      %p118 = scmp.eq.s32.totalorder %s35, 0
      %p119 = por %p117, %p118
      %p120 = scmp.ne.s32.totalorder %s108, %s109
      %p121 = scmp.eq.s32.totalorder %s36, 1
      %p122 = por %p120, %p121
      %p124 = scmp.ne.s32.totalorder %s109, %s123
      %p125 = scmp.eq.s32.totalorder %s36, 0
      %p126 = por %p124, %p125
      %s128 = sadd.s32 %s127, 1
      %p131 = scmp.eq.s32.totalorder %s30, 1
      %p132 = scmp.ne.s32.totalorder %s127, %s129
      %p133 = scmp.eq.s32.totalorder %s30, 0
      %p134 = por %p132, %p133
      %p135 = scmp.ne.s32.totalorder %s127, %s129
      %p136 = scmp.eq.s32.totalorder %s35, 1
      %p137 = por %p135, %p136
      %p138 = scmp.ne.s32.totalorder %s129, %s130
      %p139 = scmp.eq.s32.totalorder %s35, 0
      %p140 = por %p138, %p139
      %p141 = scmp.ne.s32.totalorder %s129, %s130
      %p142 = scmp.eq.s32.totalorder %s36, 1
      %p143 = por %p141, %p142
      %p145 = scmp.ne.s32.totalorder %s130, %s144
      %p146 = scmp.eq.s32.totalorder %s36, 0
      %p147 = por %p145, %p146
      %s148 = ssub.s32 %s30, %s37
      %p149 = scmp.eq.s32.totalorder %s148, 0
      %s151 = sadd.s32 %s150, 1
      %s152 = scalar_select %p149, %s150, %s151
      %p155 = pneg %p149
      %p156 = scmp.eq.s32.totalorder %s30, 1
      %p157 = por %p155, %p156
      %p158 = scmp.ne.s32.totalorder %s150, %s153
      %p159 = scmp.eq.s32.totalorder %s30, 0
      %p160 = por %p158, %p159
      %p161 = scmp.ne.s32.totalorder %s150, %s153
      %p162 = scmp.eq.s32.totalorder %s35, 1
      %p163 = por %p161, %p162
      %p164 = scmp.ne.s32.totalorder %s153, %s154
      %p165 = scmp.eq.s32.totalorder %s35, 0
      %p166 = por %p164, %p165
      %p167 = scmp.ne.s32.totalorder %s153, %s154
      %p168 = scmp.eq.s32.totalorder %s36, 1
      %p169 = por %p167, %p168
      %p171 = scmp.ne.s32.totalorder %s154, %s170
      %p172 = scmp.eq.s32.totalorder %s36, 0
      %p173 = por %p171, %p172
      %s175 = sadd.s32 %s174, 1
      %p178 = scmp.eq.s32.totalorder %s30, 1
      %p179 = scmp.ne.s32.totalorder %s174, %s176
      %p180 = scmp.eq.s32.totalorder %s30, 0
      %p181 = por %p179, %p180
      %p182 = scmp.ne.s32.totalorder %s174, %s176
      %p183 = scmp.eq.s32.totalorder %s35, 1
      %p184 = por %p182, %p183
      %p185 = scmp.ne.s32.totalorder %s176, %s177
      %p186 = scmp.eq.s32.totalorder %s35, 0
      %p187 = por %p185, %p186
      %p188 = scmp.ne.s32.totalorder %s176, %s177
      %p189 = scmp.eq.s32.totalorder %s36, 1
      %p190 = por %p188, %p189
      %p192 = scmp.ne.s32.totalorder %s177, %s191
      %p193 = scmp.eq.s32.totalorder %s36, 0
      %p194 = por %p192, %p193
      %s196 = sadd.s32 %s195, 1
      %p199 = scmp.eq.s32.totalorder %s30, 1
      %p200 = scmp.ne.s32.totalorder %s195, %s197
      %p201 = scmp.eq.s32.totalorder %s30, 0
      %p202 = por %p200, %p201
      %p203 = scmp.ne.s32.totalorder %s195, %s197
      %p204 = scmp.eq.s32.totalorder %s35, 1
      %p205 = por %p203, %p204
      %p206 = scmp.ne.s32.totalorder %s197, %s198
      %p207 = scmp.eq.s32.totalorder %s35, 0
      %p208 = por %p206, %p207
      %p209 = scmp.ne.s32.totalorder %s197, %s198
      %p210 = scmp.eq.s32.totalorder %s36, 1
      %p211 = por %p209, %p210
      %p213 = scmp.ne.s32.totalorder %s198, %s212
      %p214 = scmp.eq.s32.totalorder %s36, 0
      %p215 = por %p213, %p214
      %s217 = sadd.s32 %s216, 1
      %p220 = scmp.eq.s32.totalorder %s30, 1
      %p221 = scmp.ne.s32.totalorder %s216, %s218
      %p222 = scmp.eq.s32.totalorder %s30, 0
      %p223 = por %p221, %p222
      %p224 = scmp.ne.s32.totalorder %s216, %s218
      %p225 = scmp.eq.s32.totalorder %s35, 1
      %p226 = por %p224, %p225
      %p227 = scmp.ne.s32.totalorder %s218, %s219
      %p228 = scmp.eq.s32.totalorder %s35, 0
      %p229 = por %p227, %p228
      %p230 = scmp.ne.s32.totalorder %s218, %s219
      %p231 = scmp.eq.s32.totalorder %s36, 1
      %p232 = por %p230, %p231
      %p234 = scmp.ne.s32.totalorder %s219, %s233
      %p235 = scmp.eq.s32.totalorder %s36, 0
      %p236 = por %p234, %p235
      %s238 = sadd.s32 %s237, 1
      %p241 = scmp.eq.s32.totalorder %s30, 1
      %p242 = scmp.ne.s32.totalorder %s237, %s239
      %p243 = scmp.eq.s32.totalorder %s30, 0
      %p244 = por %p242, %p243
      %p245 = scmp.ne.s32.totalorder %s237, %s239
      %p246 = scmp.eq.s32.totalorder %s35, 1
      %p247 = por %p245, %p246
      %p248 = scmp.ne.s32.totalorder %s239, %s240
      %p249 = scmp.eq.s32.totalorder %s35, 0
      %p250 = por %p248, %p249
      %p251 = scmp.ne.s32.totalorder %s239, %s240
      %p252 = scmp.eq.s32.totalorder %s36, 1
      %p253 = por %p251, %p252
      %p255 = scmp.ne.s32.totalorder %s240, %s254
      %p256 = scmp.eq.s32.totalorder %s36, 0
      %p257 = por %p255, %p256
      %s258 = ssub.s32 %s30, %s37
      %p259 = scmp.eq.s32.totalorder %s258, 0
      %s261 = sadd.s32 %s260, 1
      %s262 = scalar_select %p259, %s260, %s261
      %p265 = pneg %p259
      %p266 = scmp.eq.s32.totalorder %s30, 1
      %p267 = por %p265, %p266
      %p268 = scmp.ne.s32.totalorder %s260, %s263
      %p269 = scmp.eq.s32.totalorder %s30, 0
      %p270 = por %p268, %p269
      %p271 = scmp.ne.s32.totalorder %s260, %s263
      %p272 = scmp.eq.s32.totalorder %s35, 1
      %p273 = por %p271, %p272
      %p274 = scmp.ne.s32.totalorder %s263, %s264
      %p275 = scmp.eq.s32.totalorder %s35, 0
      %p276 = por %p274, %p275
      %p277 = scmp.ne.s32.totalorder %s263, %s264
      %p278 = scmp.eq.s32.totalorder %s36, 1
      %p279 = por %p277, %p278
      %p281 = scmp.ne.s32.totalorder %s264, %s280
      %p282 = scmp.eq.s32.totalorder %s36, 0
      %p283 = por %p281, %p282
      %s285 = sadd.s32 %s284, 1
      %p288 = scmp.eq.s32.totalorder %s30, 1
      %p289 = scmp.ne.s32.totalorder %s284, %s286
      %p290 = scmp.eq.s32.totalorder %s30, 0
      %p291 = por %p289, %p290
      %p292 = scmp.ne.s32.totalorder %s284, %s286
      %p293 = scmp.eq.s32.totalorder %s35, 1
      %p294 = por %p292, %p293
      %p295 = scmp.ne.s32.totalorder %s286, %s287
      %p296 = scmp.eq.s32.totalorder %s35, 0
      %p297 = por %p295, %p296
      %p298 = scmp.ne.s32.totalorder %s286, %s287
      %p299 = scmp.eq.s32.totalorder %s36, 1
      %p300 = por %p298, %p299
      %p302 = scmp.ne.s32.totalorder %s287, %s301
      %p303 = scmp.eq.s32.totalorder %s36, 0
      %p304 = por %p302, %p303
      %s306 = sadd.s32 %s305, 1
      %p309 = scmp.eq.s32.totalorder %s30, 1
      %p310 = scmp.ne.s32.totalorder %s305, %s307
      %p311 = scmp.eq.s32.totalorder %s30, 0
      %p312 = por %p310, %p311
      %p313 = scmp.ne.s32.totalorder %s305, %s307
      %p314 = scmp.eq.s32.totalorder %s35, 1
      %p315 = por %p313, %p314
      %p316 = scmp.ne.s32.totalorder %s307, %s308
      %p317 = scmp.eq.s32.totalorder %s35, 0
      %p318 = por %p316, %p317
      %p319 = scmp.ne.s32.totalorder %s307, %s308
      %p320 = scmp.eq.s32.totalorder %s36, 1
      %p321 = por %p319, %p320
      %p323 = scmp.ne.s32.totalorder %s308, %s322
      %p324 = scmp.eq.s32.totalorder %s36, 0
      %p325 = por %p323, %p324
      %s327 = sadd.s32 %s326, 1
      %p330 = scmp.eq.s32.totalorder %s30, 1
      %p331 = scmp.ne.s32.totalorder %s326, %s328
      %p332 = scmp.eq.s32.totalorder %s30, 0
      %p333 = por %p331, %p332
      %p334 = scmp.ne.s32.totalorder %s326, %s328
      %p335 = scmp.eq.s32.totalorder %s35, 1
      %p336 = por %p334, %p335
      %p337 = scmp.ne.s32.totalorder %s328, %s329
      %p338 = scmp.eq.s32.totalorder %s35, 0
      %p339 = por %p337, %p338
      %p340 = scmp.ne.s32.totalorder %s328, %s329
      %p341 = scmp.eq.s32.totalorder %s36, 1
      %p342 = por %p340, %p341
      %p344 = scmp.ne.s32.totalorder %s329, %s343
      %p345 = scmp.eq.s32.totalorder %s36, 0
      %p346 = por %p344, %p345
      %s348 = sadd.s32 %s347, 1
      %p351 = scmp.eq.s32.totalorder %s30, 1
      %p352 = scmp.ne.s32.totalorder %s347, %s349
      %p353 = scmp.eq.s32.totalorder %s30, 0
      %p354 = por %p352, %p353
      %p355 = scmp.ne.s32.totalorder %s347, %s349
      %p356 = scmp.eq.s32.totalorder %s35, 1
      %p357 = por %p355, %p356
      %p358 = scmp.ne.s32.totalorder %s349, %s350
      %p359 = scmp.eq.s32.totalorder %s35, 0
      %p360 = por %p358, %p359
      %p361 = scmp.ne.s32.totalorder %s349, %s350
      %p362 = scmp.eq.s32.totalorder %s36, 1
      %p363 = por %p361, %p362
      %p365 = scmp.ne.s32.totalorder %s350, %s364
      %p366 = scmp.eq.s32.totalorder %s36, 0
      %p367 = por %p365, %p366
      %s369 = sadd.s32 %s368, 1
      %p372 = scmp.eq.s32.totalorder %s30, 1
      %p373 = scmp.ne.s32.totalorder %s368, %s370
      %p374 = scmp.eq.s32.totalorder %s30, 0
      %p375 = por %p373, %p374
      %p376 = scmp.ne.s32.totalorder %s368, %s370
      %p377 = scmp.eq.s32.totalorder %s35, 1
      %p378 = por %p376, %p377
      %p379 = scmp.ne.s32.totalorder %s370, %s371
      %p380 = scmp.eq.s32.totalorder %s35, 0
      %p381 = por %p379, %p380
      %p382 = scmp.ne.s32.totalorder %s370, %s371
      %p383 = scmp.eq.s32.totalorder %s36, 1
      %p384 = por %p382, %p383
      %p386 = scmp.ne.s32.totalorder %s371, %s385
      %p387 = scmp.eq.s32.totalorder %s36, 0
      %p388 = por %p386, %p387
      %s390 = sadd.s32 %s389, 1
      %p393 = scmp.eq.s32.totalorder %s30, 1
      %p394 = scmp.ne.s32.totalorder %s389, %s391
      %p395 = scmp.eq.s32.totalorder %s30, 0
      %p396 = por %p394, %p395
      %p397 = scmp.ne.s32.totalorder %s389, %s391
      %p398 = scmp.eq.s32.totalorder %s35, 1
      %p399 = por %p397, %p398
      %p400 = scmp.ne.s32.totalorder %s391, %s392
      %p401 = scmp.eq.s32.totalorder %s35, 0
      %p402 = por %p400, %p401
      %p403 = scmp.ne.s32.totalorder %s391, %s392
      %p404 = scmp.eq.s32.totalorder %s36, 1
      %p405 = por %p403, %p404
      %p407 = scmp.ne.s32.totalorder %s392, %s406
      %p408 = scmp.eq.s32.totalorder %s36, 0
      %p409 = por %p407, %p408
      %s411 = sadd.s32 %s410, 1
      %p414 = scmp.eq.s32.totalorder %s30, 1
      %p415 = scmp.ne.s32.totalorder %s410, %s412
      %p416 = scmp.eq.s32.totalorder %s30, 0
      %p417 = por %p415, %p416
      %p418 = scmp.ne.s32.totalorder %s410, %s412
      %p419 = scmp.eq.s32.totalorder %s35, 1
      %p420 = por %p418, %p419
      %p421 = scmp.ne.s32.totalorder %s412, %s413
      %p422 = scmp.eq.s32.totalorder %s35, 0
      %p423 = por %p421, %p422
      %p424 = scmp.ne.s32.totalorder %s412, %s413
      %p425 = scmp.eq.s32.totalorder %s36, 1
      %p426 = por %p424, %p425
      %p428 = scmp.ne.s32.totalorder %s413, %s427
      %p429 = scmp.eq.s32.totalorder %s36, 0
      %p430 = por %p428, %p429
      %s432 = sadd.s32 %s431, 1
      %p435 = scmp.eq.s32.totalorder %s30, 1
      %p436 = scmp.ne.s32.totalorder %s431, %s433
      %p437 = scmp.eq.s32.totalorder %s30, 0
      %p438 = por %p436, %p437
      %p439 = scmp.ne.s32.totalorder %s431, %s433
      %p440 = scmp.eq.s32.totalorder %s35, 1
      %p441 = por %p439, %p440
      %p442 = scmp.ne.s32.totalorder %s433, %s434
      %p443 = scmp.eq.s32.totalorder %s35, 0
      %p444 = por %p442, %p443
      %p445 = scmp.ne.s32.totalorder %s433, %s434
      %p446 = scmp.eq.s32.totalorder %s36, 1
      %p447 = por %p445, %p446
      %p449 = scmp.ne.s32.totalorder %s434, %s448
      %p450 = scmp.eq.s32.totalorder %s36, 0
      %p451 = por %p449, %p450
      %s453 = sadd.s32 %s452, 1
      %p456 = scmp.eq.s32.totalorder %s30, 1
      %p457 = scmp.ne.s32.totalorder %s452, %s454
      %p458 = scmp.eq.s32.totalorder %s30, 0
      %p459 = por %p457, %p458
      %p460 = scmp.ne.s32.totalorder %s452, %s454
      %p461 = scmp.eq.s32.totalorder %s35, 1
      %p462 = por %p460, %p461
      %p463 = scmp.ne.s32.totalorder %s454, %s455
      %p464 = scmp.eq.s32.totalorder %s35, 0
      %p465 = por %p463, %p464
      %p466 = scmp.ne.s32.totalorder %s454, %s455
      %p467 = scmp.eq.s32.totalorder %s36, 1
      %p468 = por %p466, %p467
      %p470 = scmp.ne.s32.totalorder %s455, %s469
      %p471 = scmp.eq.s32.totalorder %s36, 0
      %p472 = por %p470, %p471
      %s474 = sadd.s32 %s473, 1
      %p477 = scmp.eq.s32.totalorder %s30, 1
      %p478 = scmp.ne.s32.totalorder %s473, %s475
      %p479 = scmp.eq.s32.totalorder %s30, 0
      %p480 = por %p478, %p479
      %p481 = scmp.ne.s32.totalorder %s473, %s475
      %p482 = scmp.eq.s32.totalorder %s35, 1
      %p483 = por %p481, %p482
      %p484 = scmp.ne.s32.totalorder %s475, %s476
      %p485 = scmp.eq.s32.totalorder %s35, 0
      %p486 = por %p484, %p485
      %p487 = scmp.ne.s32.totalorder %s475, %s476
      %p488 = scmp.eq.s32.totalorder %s36, 1
      %p489 = por %p487, %p488
      %p491 = scmp.ne.s32.totalorder %s476, %s490
      %p492 = scmp.eq.s32.totalorder %s36, 0
      %p493 = por %p491, %p492
      %s494 = ssub.s32 %s30, %s37
      %p495 = scmp.eq.s32.totalorder %s494, 0
      %s497 = sadd.s32 %s496, 1
      %s498 = scalar_select %p495, %s496, %s497
      %p501 = pneg %p495
      %p502 = scmp.eq.s32.totalorder %s30, 1
      %p503 = por %p501, %p502
      %p504 = scmp.ne.s32.totalorder %s496, %s499
      %p505 = scmp.eq.s32.totalorder %s30, 0
      %p506 = por %p504, %p505
      %p507 = scmp.ne.s32.totalorder %s496, %s499
      %p508 = scmp.eq.s32.totalorder %s35, 1
      %p509 = por %p507, %p508
      %p510 = scmp.ne.s32.totalorder %s499, %s500
      %p511 = scmp.eq.s32.totalorder %s35, 0
      %p512 = por %p510, %p511
      %p513 = scmp.ne.s32.totalorder %s499, %s500
      %p514 = scmp.eq.s32.totalorder %s36, 1
      %p515 = por %p513, %p514
      %p517 = scmp.ne.s32.totalorder %s500, %s516
      %p518 = scmp.eq.s32.totalorder %s36, 0
      %p519 = por %p517, %p518
      %p520 = scmp.le.s32.totalorder 1, %s30
      %p521 = scmp.lt.s32.totalorder %s30, 3
      %p522 = pnand %p520, %p521
      %p523 = pneg %p522
      // Predicated region
      $region9: #{tpu_custom_call.1} parent=5 // pred_check
        _
      $region10: #{tpu_custom_call.1} parent=5 // pred_check_branch
        %525 = sbr.rel (%p522) target = $region12
      $region11: #{tpu_custom_call.1} parent=5 // pred_region
        %s526 = ssub.s32 %s30, 1
        // Predicated region
        $region13: #{tpu_custom_call.1} parent=11 // pred_check
          %p527 = pneg %p77
        $region14: #{tpu_custom_call.1} parent=11 // pred_check_branch
          %529 = sbr.rel (%p527) target = $region16
        $region15: #{tpu_custom_call.1} parent=11 // pred_region
          _
        $region16: #{tpu_custom_call.1} parent=11 // pred_fallthru
          _
        // Predicated region
        $region17: #{tpu_custom_call.1} parent=11 // pred_check
          %p530 = pneg %p98
        $region18: #{tpu_custom_call.1} parent=11 // pred_check_branch
          %532 = sbr.rel (%p530) target = $region20
        $region19: #{tpu_custom_call.1} parent=11 // pred_region
          _
        $region20: #{tpu_custom_call.1} parent=11 // pred_fallthru
          _
        // Predicated region
        $region21: #{tpu_custom_call.1} parent=11 // pred_check
          %p533 = pneg %p119
        $region22: #{tpu_custom_call.1} parent=11 // pred_check_branch
          %535 = sbr.rel (%p533) target = $region24
        $region23: #{tpu_custom_call.1} parent=11 // pred_region
          _
        $region24: #{tpu_custom_call.1} parent=11 // pred_fallthru
          _
        // Predicated region
        $region25: #{tpu_custom_call.1} parent=11 // pred_check
          %p536 = pneg %p140
        $region26: #{tpu_custom_call.1} parent=11 // pred_check_branch
          %538 = sbr.rel (%p536) target = $region28
        $region27: #{tpu_custom_call.1} parent=11 // pred_region
          _
        $region28: #{tpu_custom_call.1} parent=11 // pred_fallthru
          _
        // Predicated region
        $region29: #{tpu_custom_call.1} parent=11 // pred_check
          %p539 = pneg %p187
        $region30: #{tpu_custom_call.1} parent=11 // pred_check_branch
          %541 = sbr.rel (%p539) target = $region32
        $region31: #{tpu_custom_call.1} parent=11 // pred_region
          _
        $region32: #{tpu_custom_call.1} parent=11 // pred_fallthru
          _
        // Predicated region
        $region33: #{tpu_custom_call.1} parent=11 // pred_check
          %p542 = pneg %p208
        $region34: #{tpu_custom_call.1} parent=11 // pred_check_branch
          %544 = sbr.rel (%p542) target = $region36
        $region35: #{tpu_custom_call.1} parent=11 // pred_region
          _
        $region36: #{tpu_custom_call.1} parent=11 // pred_fallthru
          _
        // Predicated region
        $region37: #{tpu_custom_call.1} parent=11 // pred_check
          %p545 = pneg %p229
        $region38: #{tpu_custom_call.1} parent=11 // pred_check_branch
          %547 = sbr.rel (%p545) target = $region40
        $region39: #{tpu_custom_call.1} parent=11 // pred_region
          _
        $region40: #{tpu_custom_call.1} parent=11 // pred_fallthru
          _
        // Predicated region
        $region41: #{tpu_custom_call.1} parent=11 // pred_check
          %p548 = pneg %p250
        $region42: #{tpu_custom_call.1} parent=11 // pred_check_branch
          %550 = sbr.rel (%p548) target = $region44
        $region43: #{tpu_custom_call.1} parent=11 // pred_region
          _
        $region44: #{tpu_custom_call.1} parent=11 // pred_fallthru
          _
        // Predicated region
        $region45: #{tpu_custom_call.1} parent=11 // pred_check
          %p551 = pneg %p297
        $region46: #{tpu_custom_call.1} parent=11 // pred_check_branch
          %553 = sbr.rel (%p551) target = $region48
        $region47: #{tpu_custom_call.1} parent=11 // pred_region
          _
        $region48: #{tpu_custom_call.1} parent=11 // pred_fallthru
          _
        // Predicated region
        $region49: #{tpu_custom_call.1} parent=11 // pred_check
          %p554 = pneg %p318
        $region50: #{tpu_custom_call.1} parent=11 // pred_check_branch
          %556 = sbr.rel (%p554) target = $region52
        $region51: #{tpu_custom_call.1} parent=11 // pred_region
          _
        $region52: #{tpu_custom_call.1} parent=11 // pred_fallthru
          _
        // Predicated region
        $region53: #{tpu_custom_call.1} parent=11 // pred_check
          %p557 = pneg %p339
        $region54: #{tpu_custom_call.1} parent=11 // pred_check_branch
          %559 = sbr.rel (%p557) target = $region56
        $region55: #{tpu_custom_call.1} parent=11 // pred_region
          _
        $region56: #{tpu_custom_call.1} parent=11 // pred_fallthru
          _
        // Predicated region
        $region57: #{tpu_custom_call.1} parent=11 // pred_check
          %p560 = pneg %p360
        $region58: #{tpu_custom_call.1} parent=11 // pred_check_branch
          %562 = sbr.rel (%p560) target = $region60
        $region59: #{tpu_custom_call.1} parent=11 // pred_region
          _
        $region60: #{tpu_custom_call.1} parent=11 // pred_fallthru
          _
        // Predicated region
        $region61: #{tpu_custom_call.1} parent=11 // pred_check
          %p563 = pneg %p381
        $region62: #{tpu_custom_call.1} parent=11 // pred_check_branch
          %565 = sbr.rel (%p563) target = $region64
        $region63: #{tpu_custom_call.1} parent=11 // pred_region
          _
        $region64: #{tpu_custom_call.1} parent=11 // pred_fallthru
          _
        // Predicated region
        $region65: #{tpu_custom_call.1} parent=11 // pred_check
          %p566 = pneg %p402
        $region66: #{tpu_custom_call.1} parent=11 // pred_check_branch
          %568 = sbr.rel (%p566) target = $region68
        $region67: #{tpu_custom_call.1} parent=11 // pred_region
          _
        $region68: #{tpu_custom_call.1} parent=11 // pred_fallthru
          _
        // Predicated region
        $region69: #{tpu_custom_call.1} parent=11 // pred_check
          %p569 = pneg %p423
        $region70: #{tpu_custom_call.1} parent=11 // pred_check_branch
          %571 = sbr.rel (%p569) target = $region72
        $region71: #{tpu_custom_call.1} parent=11 // pred_region
          _
        $region72: #{tpu_custom_call.1} parent=11 // pred_fallthru
          _
        // Predicated region
        $region73: #{tpu_custom_call.1} parent=11 // pred_check
          %p572 = pneg %p444
        $region74: #{tpu_custom_call.1} parent=11 // pred_check_branch
          %574 = sbr.rel (%p572) target = $region76
        $region75: #{tpu_custom_call.1} parent=11 // pred_region
          _
        $region76: #{tpu_custom_call.1} parent=11 // pred_fallthru
          _
        // Predicated region
        $region77: #{tpu_custom_call.1} parent=11 // pred_check
          %p575 = pneg %p465
        $region78: #{tpu_custom_call.1} parent=11 // pred_check_branch
          %577 = sbr.rel (%p575) target = $region80
        $region79: #{tpu_custom_call.1} parent=11 // pred_region
          _
        $region80: #{tpu_custom_call.1} parent=11 // pred_fallthru
          _
        // Predicated region
        $region81: #{tpu_custom_call.1} parent=11 // pred_check
          %p578 = pneg %p486
        $region82: #{tpu_custom_call.1} parent=11 // pred_check_branch
          %580 = sbr.rel (%p578) target = $region84
        $region83: #{tpu_custom_call.1} parent=11 // pred_region
          _
        $region84: #{tpu_custom_call.1} parent=11 // pred_fallthru
          _
      $region12: #{tpu_custom_call.1} parent=5 // pred_fallthru
        _
      %p581 = scmp.lt.s32.totalorder %s30, 2
      // Predicated region
      $region85: #{tpu_custom_call.1} parent=5 // pred_check
        %p582 = pneg %p581
      $region86: #{tpu_custom_call.1} parent=5 // pred_check_branch
        %584 = sbr.rel (%p582) target = $region88
      $region87: #{tpu_custom_call.1} parent=5 // pred_region
        // Predicated region
        $region89: #{tpu_custom_call.1} parent=87 // pred_check
          %p585 = pneg %p50
        $region90: #{tpu_custom_call.1} parent=87 // pred_check_branch
          %587 = sbr.rel (%p585) target = $region92
        $region91: #{tpu_custom_call.1} parent=87 // pred_region
          %p588 = scmp.lt.s32.totalorder %s30, 1
          %s589 = scalar_select %p588, %s30, 1
          %s590 = smul.addr %s589, 2
          %s591 = smul.addr %s590, 8
          %s592 = scalar_lea.vmem %s0, %s591
        $region92: #{tpu_custom_call.1} parent=87 // pred_fallthru
          _
        // Predicated region
        $region93: #{tpu_custom_call.1} parent=87 // pred_check
          %p593 = pneg %p160
        $region94: #{tpu_custom_call.1} parent=87 // pred_check_branch
          %595 = sbr.rel (%p593) target = $region96
        $region95: #{tpu_custom_call.1} parent=87 // pred_region
          %p596 = scmp.lt.s32.totalorder %s30, 1
          %s597 = scalar_select %p596, %s30, 1
          %s598 = scalar_lea.vmem %s5, %s597
        $region96: #{tpu_custom_call.1} parent=87 // pred_fallthru
          _
        // Predicated region
        $region97: #{tpu_custom_call.1} parent=87 // pred_check
          %p599 = pneg %p270
        $region98: #{tpu_custom_call.1} parent=87 // pred_check_branch
          %601 = sbr.rel (%p599) target = $region100
        $region99: #{tpu_custom_call.1} parent=87 // pred_region
          %p602 = scmp.lt.s32.totalorder %s30, 1
          %s603 = scalar_select %p602, %s30, 1
          %s604 = smul.addr %s603, 2
          %s605 = scalar_lea.vmem %s10, %s604
        $region100: #{tpu_custom_call.1} parent=87 // pred_fallthru
          _
      $region88: #{tpu_custom_call.1} parent=5 // pred_fallthru
        _
      %p606 = scmp.le.s32.totalorder 1, %s30
      %p607 = scmp.lt.s32.totalorder %s30, 3
      %p608 = pnand %p606, %p607
      %p609 = pneg %p608
      // Predicated region
      $region101: #{tpu_custom_call.1} parent=5 // pred_check
        _
      $region102: #{tpu_custom_call.1} parent=5 // pred_check_branch
        %611 = sbr.rel (%p608) target = $region104
      $region103: #{tpu_custom_call.1} parent=5 // pred_region
        %s612 = ssub.s32 %s30, 1
        %p613 = scmp.lt.s32.totalorder %s35, 1
        %s614 = scalar_select %p613, %s35, 1
        %s615 = smul.addr %s614, 2
        %s616 = smul.addr %s615, 8
        %s617 = scalar_lea.vmem %s0, %s616
        %p618 = pneg %p56
        %p619 = pneg %p53
        %p620 = pneg %p77
        %p621 = pneg %p74
        %p622 = pneg %p98
        %p623 = pneg %p95
        %p624 = pneg %p119
        %p625 = pneg %p116
        %p626 = pneg %p140
        %p627 = pneg %p137
        %p628 = scmp.lt.s32.totalorder %s35, 1
        %s629 = scalar_select %p628, %s35, 1
        %s630 = scalar_lea.vmem %s5, %s629
        %p631 = pneg %p166
        %p632 = pneg %p163
        %p633 = pneg %p187
        %p634 = pneg %p184
        %p635 = pneg %p208
        %p636 = pneg %p205
        %p637 = pneg %p229
        %p638 = pneg %p226
        %p639 = pneg %p250
        %p640 = pneg %p247
        %p641 = scmp.lt.s32.totalorder %s35, 1
        %s642 = scalar_select %p641, %s35, 1
        %s643 = smul.addr %s642, 2
        %s644 = scalar_lea.vmem %s10, %s643
        %p645 = pneg %p276
        %p646 = pneg %p273
        %p647 = pneg %p297
        %p648 = pneg %p294
        %p649 = pneg %p318
        %p650 = pneg %p315
        %p651 = pneg %p339
        %p652 = pneg %p336
        %p653 = pneg %p360
        %p654 = pneg %p357
        %p655 = pneg %p381
        %p656 = pneg %p378
        %p657 = pneg %p402
        %p658 = pneg %p399
        %p659 = pneg %p423
        %p660 = pneg %p420
        %p661 = pneg %p444
        %p662 = pneg %p441
        %p663 = pneg %p465
        %p664 = pneg %p462
        %p665 = pneg %p486
        %p666 = pneg %p483
        %p667 = pneg %p512
        %p668 = pneg %p509
        %s669 = sand.u32 %s499, 1
        %s670 = scalar_lea.sflag [#allocation4], %s669
        %s671 = sand.u32 %s499, 1
        %s672 = scalar_lea.vmem [#allocation3], %s671
        %p673 = scmp.lt.s32.totalorder %s35, 1
        %s674 = scalar_select %p673, %s35, 1
        %s675 = smul.addr %s674, 2
        %s676 = smul.addr %s675, 8
        %s677 = scalar_lea.vmem %s0, %s676
        %p678 = scmp.lt.s32.totalorder %s35, 1
        %s679 = scalar_select %p678, %s35, 1
        %s680 = scalar_lea.vmem %s5, %s679
        %p681 = scmp.lt.s32.totalorder %s35, 1
        %s682 = scalar_select %p681, %s35, 1
        %s683 = smul.addr %s682, 2
        %s684 = scalar_lea.vmem %s10, %s683
        %v686 = vld [vmem:[%s677] sm:$0xff]
        %v687 = vld [vmem:[%s677 + $0x8] sm:$0xff]
        %v688 = vld [vmem:[%s1] sm:$0x77]
        %v689 = vld [vmem:[%s1 + $0x8] sm:$0x77]
        %v690 = vld [vmem:[%s1 + $0x10] sm:$0x77]
        %v691 = vld [vmem:[%s1 + $0x18] sm:$0x77]
        %693 = vset.pattern.permute.xlu0 0
        %694 = vperm.xlu0 %693, %v686
        %v695 = vpop.permute.xlu0 %694
        %698 = vset.pattern.permute.xlu0 0
        %699 = vperm.xlu0 %698, %v687
        %v700 = vpop.permute.xlu0 %699
        %v706 = vperm.slane %v688, 0
        %v707 = vperm.slane %v688, 4
        %v708 = vperm.slane %v689, 0
        %v709 = vperm.slane %v689, 4
        %v710 = vperm.slane %v690, 0
        %v711 = vperm.slane %v690, 4
        %v712 = vperm.slane %v691, 0
        %v713 = vperm.slane %v691, 4
        %v722 = vperm.slane %v706, 0
        %v723 = vperm.slane %v707, 0
        %v724 = vperm.slane %v708, 0
        %v725 = vperm.slane %v709, 0
        %v726 = vperm.slane %v710, 0
        %v727 = vperm.slane %v711, 0
        %v728 = vperm.slane %v712, 0
        %v729 = vperm.slane %v713, 0
        %v730 = vmul.f32 %v695, %v722
        %v731 = vmul.f32 %v695, %v723
        %v732 = vmul.f32 %v695, %v724
        %v733 = vmul.f32 %v695, %v725
        %v734 = vmul.f32 %v695, %v726
        %v735 = vmul.f32 %v695, %v727
        %v736 = vmul.f32 %v695, %v728
        %v737 = vmul.f32 %v695, %v729
        %v738 = vmul.f32 %v700, %v722
        %v739 = vmul.f32 %v700, %v723
        %v740 = vmul.f32 %v700, %v724
        %v741 = vmul.f32 %v700, %v725
        %v742 = vmul.f32 %v700, %v726
        %v743 = vmul.f32 %v700, %v727
        %v744 = vmul.f32 %v700, %v728
        %v745 = vmul.f32 %v700, %v729
        %746 = vset.pattern.permute.xlu0 1
        %747 = vperm.xlu0 %746, %v686
        %v748 = vpop.permute.xlu0 %747
        %750 = vset.pattern.permute.xlu0 1
        %751 = vperm.xlu0 %750, %v687
        %v752 = vpop.permute.xlu0 %751
        %v754 = vperm.slane %v688, 1
        %v755 = vperm.slane %v688, 5
        %v756 = vperm.slane %v689, 1
        %v757 = vperm.slane %v689, 5
        %v758 = vperm.slane %v690, 1
        %v759 = vperm.slane %v690, 5
        %v760 = vperm.slane %v691, 1
        %v761 = vperm.slane %v691, 5
        %v770 = vperm.slane %v754, 1
        %v771 = vperm.slane %v755, 1
        %v772 = vperm.slane %v756, 1
        %v773 = vperm.slane %v757, 1
        %v774 = vperm.slane %v758, 1
        %v775 = vperm.slane %v759, 1
        %v776 = vperm.slane %v760, 1
        %v777 = vperm.slane %v761, 1
        %v778 = vmul.f32 %v748, %v770
        %v779 = vmul.f32 %v748, %v771
        %v780 = vmul.f32 %v748, %v772
        %v781 = vmul.f32 %v748, %v773
        %v782 = vmul.f32 %v748, %v774
        %v783 = vmul.f32 %v748, %v775
        %v784 = vmul.f32 %v748, %v776
        %v785 = vmul.f32 %v748, %v777
        %v786 = vmul.f32 %v752, %v770
        %v787 = vmul.f32 %v752, %v771
        %v788 = vmul.f32 %v752, %v772
        %v789 = vmul.f32 %v752, %v773
        %v790 = vmul.f32 %v752, %v774
        %v791 = vmul.f32 %v752, %v775
        %v792 = vmul.f32 %v752, %v776
        %v793 = vmul.f32 %v752, %v777
        %v794 = vadd.f32 %v730, %v778
        %v795 = vadd.f32 %v731, %v779
        %v796 = vadd.f32 %v732, %v780
        %v797 = vadd.f32 %v733, %v781
        %v798 = vadd.f32 %v734, %v782
        %v799 = vadd.f32 %v735, %v783
        %v800 = vadd.f32 %v736, %v784
        %v801 = vadd.f32 %v737, %v785
        %v802 = vadd.f32 %v738, %v786
        %v803 = vadd.f32 %v739, %v787
        %v804 = vadd.f32 %v740, %v788
        %v805 = vadd.f32 %v741, %v789
        %v806 = vadd.f32 %v742, %v790
        %v807 = vadd.f32 %v743, %v791
        %v808 = vadd.f32 %v744, %v792
        %v809 = vadd.f32 %v745, %v793
        %810 = vset.pattern.permute.xlu0 2
        %811 = vperm.xlu0 %810, %v686
        %v812 = vpop.permute.xlu0 %811
        %814 = vset.pattern.permute.xlu0 2
        %815 = vperm.xlu0 %814, %v687
        %v816 = vpop.permute.xlu0 %815
        %v818 = vperm.slane %v688, 2
        %v819 = vperm.slane %v688, 6
        %v820 = vperm.slane %v689, 2
        %v821 = vperm.slane %v689, 6
        %v822 = vperm.slane %v690, 2
        %v823 = vperm.slane %v690, 6
        %v824 = vperm.slane %v691, 2
        %v825 = vperm.slane %v691, 6
        %v834 = vperm.slane %v818, 2
        %v835 = vperm.slane %v819, 2
        %v836 = vperm.slane %v820, 2
        %v837 = vperm.slane %v821, 2
        %v838 = vperm.slane %v822, 2
        %v839 = vperm.slane %v823, 2
        %v840 = vperm.slane %v824, 2
        %v841 = vperm.slane %v825, 2
        %v842 = vmul.f32 %v812, %v834
        %v843 = vmul.f32 %v812, %v835
        %v844 = vmul.f32 %v812, %v836
        %v845 = vmul.f32 %v812, %v837
        %v846 = vmul.f32 %v812, %v838
        %v847 = vmul.f32 %v812, %v839
        %v848 = vmul.f32 %v812, %v840
        %v849 = vmul.f32 %v812, %v841
        %v850 = vmul.f32 %v816, %v834
        %v851 = vmul.f32 %v816, %v835
        %v852 = vmul.f32 %v816, %v836
        %v853 = vmul.f32 %v816, %v837
        %v854 = vmul.f32 %v816, %v838
        %v855 = vmul.f32 %v816, %v839
        %v856 = vmul.f32 %v816, %v840
        %v857 = vmul.f32 %v816, %v841
        %v858 = vadd.f32 %v794, %v842
        %v859 = vadd.f32 %v795, %v843
        %v860 = vadd.f32 %v796, %v844
        %v861 = vadd.f32 %v797, %v845
        %v862 = vadd.f32 %v798, %v846
        %v863 = vadd.f32 %v799, %v847
        %v864 = vadd.f32 %v800, %v848
        %v865 = vadd.f32 %v801, %v849
        %v866 = vadd.f32 %v802, %v850
        %v867 = vadd.f32 %v803, %v851
        %v868 = vadd.f32 %v804, %v852
        %v869 = vadd.f32 %v805, %v853
        %v870 = vadd.f32 %v806, %v854
        %v871 = vadd.f32 %v807, %v855
        %v872 = vadd.f32 %v808, %v856
        %v873 = vadd.f32 %v809, %v857
        %v874 = vmax.f32 %v858, 0.0
        %v875 = vmax.f32 %v859, 0.0
        %v876 = vmax.f32 %v860, 0.0
        %v877 = vmax.f32 %v861, 0.0
        %v878 = vmax.f32 %v862, 0.0
        %v879 = vmax.f32 %v863, 0.0
        %v880 = vmax.f32 %v864, 0.0
        %v881 = vmax.f32 %v865, 0.0
        %v882 = vmax.f32 %v866, 0.0
        %v883 = vmax.f32 %v867, 0.0
        %v884 = vmax.f32 %v868, 0.0
        %v885 = vmax.f32 %v869, 0.0
        %v886 = vmax.f32 %v870, 0.0
        %v887 = vmax.f32 %v871, 0.0
        %v888 = vmax.f32 %v872, 0.0
        %v889 = vmax.f32 %v873, 0.0
        %v890 = vld [vmem:[%s2] sm:$0xff]
        %vm891 = vcmask 130048
        %v893 = vsel %vm891, %v890, 0
        %895 = vmatpush.msra.mxu0 0.0
        %896 = vmatpush.msra.mxu0 0.0
        %897 = vmatpush.msra.mxu0 0.0
        %898 = vmatpush.msra.mxu0 0.0
        %899 = vmatpush.msra.mxu0 0.0
        %900 = vmatpush.msra.mxu0 0.0
        %901 = vmatpush.msra.mxu0 0.0
        %902 = vmatpush.msra.mxu0 0.0
        %903 = vmatpush.msra.mxu0 0.0
        %904 = vmatpush.msra.mxu0 0.0
        %905 = vmatpush.msra.mxu0 0.0
        %906 = vmatpush.msra.mxu0 0.0
        %907 = vmatpush.msra.mxu0 0.0
        %908 = vmatpush.msra.mxu0 0.0
        %909 = vmatpush.msra.mxu0 %v882
        %910 = vmatpush.msra.mxu0 %v874
        %911 = vmatmul.f32.gmra.mxu0 %v893
        %v912 = vpop.f32.mrf.mxu0
        %v913 = vadd.f32 0.0, %v912
        %914 = vdwg.mxu0
        %915 = vmatpush.msra.mxu0 0.0
        %916 = vmatpush.msra.mxu0 0.0
        %917 = vmatpush.msra.mxu0 0.0
        %918 = vmatpush.msra.mxu0 0.0
        %919 = vmatpush.msra.mxu0 0.0
        %920 = vmatpush.msra.mxu0 0.0
        %921 = vmatpush.msra.mxu0 0.0
        %922 = vmatpush.msra.mxu0 0.0
        %923 = vmatpush.msra.mxu0 0.0
        %924 = vmatpush.msra.mxu0 0.0
        %925 = vmatpush.msra.mxu0 0.0
        %926 = vmatpush.msra.mxu0 0.0
        %927 = vmatpush.msra.mxu0 0.0
        %928 = vmatpush.msra.mxu0 0.0
        %929 = vmatpush.msra.mxu0 %v883
        %930 = vmatpush.msra.mxu0 %v875
        %931 = vmatmul.f32.gmra.mxu0 %v893
        %v932 = vpop.f32.mrf.mxu0
        %v933 = vadd.f32 0.0, %v932
        %934 = vdwg.mxu0
        %935 = vmatpush.msra.mxu0 0.0
        %936 = vmatpush.msra.mxu0 0.0
        %937 = vmatpush.msra.mxu0 0.0
        %938 = vmatpush.msra.mxu0 0.0
        %939 = vmatpush.msra.mxu0 0.0
        %940 = vmatpush.msra.mxu0 0.0
        %941 = vmatpush.msra.mxu0 0.0
        %942 = vmatpush.msra.mxu0 0.0
        %943 = vmatpush.msra.mxu0 0.0
        %944 = vmatpush.msra.mxu0 0.0
        %945 = vmatpush.msra.mxu0 0.0
        %946 = vmatpush.msra.mxu0 0.0
        %947 = vmatpush.msra.mxu0 0.0
        %948 = vmatpush.msra.mxu0 0.0
        %949 = vmatpush.msra.mxu0 %v884
        %950 = vmatpush.msra.mxu0 %v876
        %951 = vmatmul.f32.gmra.mxu0 %v893
        %v952 = vpop.f32.mrf.mxu0
        %v953 = vadd.f32 0.0, %v952
        %954 = vdwg.mxu0
        %955 = vmatpush.msra.mxu0 0.0
        %956 = vmatpush.msra.mxu0 0.0
        %957 = vmatpush.msra.mxu0 0.0
        %958 = vmatpush.msra.mxu0 0.0
        %959 = vmatpush.msra.mxu0 0.0
        %960 = vmatpush.msra.mxu0 0.0
        %961 = vmatpush.msra.mxu0 0.0
        %962 = vmatpush.msra.mxu0 0.0
        %963 = vmatpush.msra.mxu0 0.0
        %964 = vmatpush.msra.mxu0 0.0
        %965 = vmatpush.msra.mxu0 0.0
        %966 = vmatpush.msra.mxu0 0.0
        %967 = vmatpush.msra.mxu0 0.0
        %968 = vmatpush.msra.mxu0 0.0
        %969 = vmatpush.msra.mxu0 %v885
        %970 = vmatpush.msra.mxu0 %v877
        %971 = vmatmul.f32.gmra.mxu0 %v893
        %v972 = vpop.f32.mrf.mxu0
        %v973 = vadd.f32 0.0, %v972
        %974 = vdwg.mxu0
        %975 = vmatpush.msra.mxu0 0.0
        %976 = vmatpush.msra.mxu0 0.0
        %977 = vmatpush.msra.mxu0 0.0
        %978 = vmatpush.msra.mxu0 0.0
        %979 = vmatpush.msra.mxu0 0.0
        %980 = vmatpush.msra.mxu0 0.0
        %981 = vmatpush.msra.mxu0 0.0
        %982 = vmatpush.msra.mxu0 0.0
        %983 = vmatpush.msra.mxu0 0.0
        %984 = vmatpush.msra.mxu0 0.0
        %985 = vmatpush.msra.mxu0 0.0
        %986 = vmatpush.msra.mxu0 0.0
        %987 = vmatpush.msra.mxu0 0.0
        %988 = vmatpush.msra.mxu0 0.0
        %989 = vmatpush.msra.mxu0 %v886
        %990 = vmatpush.msra.mxu0 %v878
        %991 = vmatmul.f32.gmra.mxu0 %v893
        %v992 = vpop.f32.mrf.mxu0
        %v993 = vadd.f32 0.0, %v992
        %994 = vdwg.mxu0
        %995 = vmatpush.msra.mxu0 0.0
        %996 = vmatpush.msra.mxu0 0.0
        %997 = vmatpush.msra.mxu0 0.0
        %998 = vmatpush.msra.mxu0 0.0
        %999 = vmatpush.msra.mxu0 0.0
        %1000 = vmatpush.msra.mxu0 0.0
        %1001 = vmatpush.msra.mxu0 0.0
        %1002 = vmatpush.msra.mxu0 0.0
        %1003 = vmatpush.msra.mxu0 0.0
        %1004 = vmatpush.msra.mxu0 0.0
        %1005 = vmatpush.msra.mxu0 0.0
        %1006 = vmatpush.msra.mxu0 0.0
        %1007 = vmatpush.msra.mxu0 0.0
        %1008 = vmatpush.msra.mxu0 0.0
        %1009 = vmatpush.msra.mxu0 %v887
        %1010 = vmatpush.msra.mxu0 %v879
        %1011 = vmatmul.f32.gmra.mxu0 %v893
        %v1012 = vpop.f32.mrf.mxu0
        %v1013 = vadd.f32 0.0, %v1012
        %1014 = vdwg.mxu0
        %1015 = vmatpush.msra.mxu0 0.0
        %1016 = vmatpush.msra.mxu0 0.0
        %1017 = vmatpush.msra.mxu0 0.0
        %1018 = vmatpush.msra.mxu0 0.0
        %1019 = vmatpush.msra.mxu0 0.0
        %1020 = vmatpush.msra.mxu0 0.0
        %1021 = vmatpush.msra.mxu0 0.0
        %1022 = vmatpush.msra.mxu0 0.0
        %1023 = vmatpush.msra.mxu0 0.0
        %1024 = vmatpush.msra.mxu0 0.0
        %1025 = vmatpush.msra.mxu0 0.0
        %1026 = vmatpush.msra.mxu0 0.0
        %1027 = vmatpush.msra.mxu0 0.0
        %1028 = vmatpush.msra.mxu0 0.0
        %1029 = vmatpush.msra.mxu0 %v888
        %1030 = vmatpush.msra.mxu0 %v880
        %1031 = vmatmul.f32.gmra.mxu0 %v893
        %v1032 = vpop.f32.mrf.mxu0
        %v1033 = vadd.f32 0.0, %v1032
        %1034 = vdwg.mxu0
        %1035 = vmatpush.msra.mxu0 0.0
        %1036 = vmatpush.msra.mxu0 0.0
        %1037 = vmatpush.msra.mxu0 0.0
        %1038 = vmatpush.msra.mxu0 0.0
        %1039 = vmatpush.msra.mxu0 0.0
        %1040 = vmatpush.msra.mxu0 0.0
        %1041 = vmatpush.msra.mxu0 0.0
        %1042 = vmatpush.msra.mxu0 0.0
        %1043 = vmatpush.msra.mxu0 0.0
        %1044 = vmatpush.msra.mxu0 0.0
        %1045 = vmatpush.msra.mxu0 0.0
        %1046 = vmatpush.msra.mxu0 0.0
        %1047 = vmatpush.msra.mxu0 0.0
        %1048 = vmatpush.msra.mxu0 0.0
        %1049 = vmatpush.msra.mxu0 %v889
        %1050 = vmatpush.msra.mxu0 %v881
        %1051 = vmatmul.f32.gmra.mxu0 %v893
        %v1052 = vpop.f32.mrf.mxu0
        %v1053 = vadd.f32 0.0, %v1052
        %1054 = vdwg.mxu0
        %v1055 = vpack.c.bf16 %v913, %v913
        %v1056 = vpack.c.bf16 %v933, %v933
        %v1057 = vpack.c.bf16 %v953, %v953
        %v1058 = vpack.c.bf16 %v973, %v973
        %v1059 = vpack.c.bf16 %v993, %v993
        %v1060 = vpack.c.bf16 %v1013, %v1013
        %v1061 = vpack.c.bf16 %v1033, %v1033
        %v1062 = vpack.c.bf16 %v1053, %v1053
        %v1063 = vld [vmem:[%s3] sm:$0xf]
        %v1064 = vld [vmem:[%s3 + $0x4] sm:$0xf]
        %v1065 = vld [vmem:[%s3 + $0x8] sm:$0xf]
        %v1066 = vld [vmem:[%s3 + $0xc] sm:$0xf]
        %v1067 = vld [vmem:[%s3 + $0x10] sm:$0xf]
        %v1068 = vld [vmem:[%s3 + $0x14] sm:$0xf]
        %v1069 = vld [vmem:[%s3 + $0x18] sm:$0xf]
        %v1070 = vld [vmem:[%s3 + $0x1c] sm:$0xf]
        %v1071 = vld [vmem:[%s3 + $0x20] sm:$0xf]
        %v1072 = vld [vmem:[%s3 + $0x24] sm:$0xf]
        %v1073 = vld [vmem:[%s3 + $0x28] sm:$0xf]
        %v1074 = vld [vmem:[%s3 + $0x2c] sm:$0xf]
        %v1075 = vld [vmem:[%s3 + $0x30] sm:$0xf]
        %v1076 = vld [vmem:[%s3 + $0x34] sm:$0xf]
        %v1077 = vld [vmem:[%s3 + $0x38] sm:$0xf]
        %v1078 = vld [vmem:[%s3 + $0x3c] sm:$0xf]
        %v1079 = vld [vmem:[%s3 + $0x40] sm:$0xf]
        %v1080 = vld [vmem:[%s3 + $0x44] sm:$0xf]
        %v1081 = vld [vmem:[%s3 + $0x48] sm:$0xf]
        %v1082 = vld [vmem:[%s3 + $0x4c] sm:$0xf]
        %v1083 = vld [vmem:[%s3 + $0x50] sm:$0xf]
        %v1084 = vld [vmem:[%s3 + $0x54] sm:$0xf]
        %v1085 = vld [vmem:[%s3 + $0x58] sm:$0xf]
        %v1086 = vld [vmem:[%s3 + $0x5c] sm:$0xf]
        %v1087 = vld [vmem:[%s3 + $0x60] sm:$0xf]
        %v1088 = vld [vmem:[%s3 + $0x64] sm:$0xf]
        %v1089 = vld [vmem:[%s3 + $0x68] sm:$0xf]
        %v1090 = vld [vmem:[%s3 + $0x6c] sm:$0xf]
        %v1091 = vld [vmem:[%s3 + $0x70] sm:$0xf]
        %v1092 = vld [vmem:[%s3 + $0x74] sm:$0xf]
        %v1093 = vld [vmem:[%s3 + $0x78] sm:$0xf]
        %v1094 = vld [vmem:[%s3 + $0x7c] sm:$0xf]
        %v1095 = vld [vmem:[%s3 + $0x80] sm:$0xf]
        %v1096 = vld [vmem:[%s3 + $0x84] sm:$0xf]
        %v1097 = vld [vmem:[%s3 + $0x88] sm:$0xf]
        %v1098 = vld [vmem:[%s3 + $0x8c] sm:$0xf]
        %v1099 = vld [vmem:[%s3 + $0x90] sm:$0xf]
        %v1100 = vld [vmem:[%s3 + $0x94] sm:$0xf]
        %v1101 = vld [vmem:[%s3 + $0x98] sm:$0xf]
        %v1102 = vld [vmem:[%s3 + $0x9c] sm:$0xf]
        %v1103 = vld [vmem:[%s3 + $0xa0] sm:$0xf]
        %v1104 = vld [vmem:[%s3 + $0xa4] sm:$0xf]
        %v1105 = vld [vmem:[%s3 + $0xa8] sm:$0xf]
        %v1106 = vld [vmem:[%s3 + $0xac] sm:$0xf]
        %v1107 = vld [vmem:[%s3 + $0xb0] sm:$0xf]
        %v1108 = vld [vmem:[%s3 + $0xb4] sm:$0xf]
        %v1109 = vld [vmem:[%s3 + $0xb8] sm:$0xf]
        %v1110 = vld [vmem:[%s3 + $0xbc] sm:$0xf]
        %v1111 = vld [vmem:[%s3 + $0xc0] sm:$0xf]
        %v1112 = vld [vmem:[%s3 + $0xc4] sm:$0xf]
        %v1113 = vld [vmem:[%s3 + $0xc8] sm:$0xf]
        %v1114 = vld [vmem:[%s3 + $0xcc] sm:$0xf]
        %v1115 = vld [vmem:[%s3 + $0xd0] sm:$0xf]
        %v1116 = vld [vmem:[%s3 + $0xd4] sm:$0xf]
        %v1117 = vld [vmem:[%s3 + $0xd8] sm:$0xf]
        %v1118 = vld [vmem:[%s3 + $0xdc] sm:$0xf]
        %v1119 = vld [vmem:[%s3 + $0xe0] sm:$0xf]
        %v1120 = vld [vmem:[%s3 + $0xe4] sm:$0xf]
        %v1121 = vld [vmem:[%s3 + $0xe8] sm:$0xf]
        %v1122 = vld [vmem:[%s3 + $0xec] sm:$0xf]
        %v1123 = vld [vmem:[%s3 + $0xf0] sm:$0xf]
        %v1124 = vld [vmem:[%s3 + $0xf4] sm:$0xf]
        %v1125 = vld [vmem:[%s3 + $0xf8] sm:$0xf]
        %v1126 = vld [vmem:[%s3 + $0xfc] sm:$0xf]
        %v1127 = vld [vmem:[%s3 + $0x100] sm:$0xf]
        %v1128 = vld [vmem:[%s3 + $0x104] sm:$0xf]
        %v1129 = vld [vmem:[%s3 + $0x108] sm:$0xf]
        %v1130 = vld [vmem:[%s3 + $0x10c] sm:$0xf]
        %v1131 = vld [vmem:[%s3 + $0x110] sm:$0xf]
        %v1132 = vld [vmem:[%s3 + $0x114] sm:$0xf]
        %v1133 = vld [vmem:[%s3 + $0x118] sm:$0xf]
        %v1134 = vld [vmem:[%s3 + $0x11c] sm:$0xf]
        %v1135 = vld [vmem:[%s3 + $0x120] sm:$0xf]
        %v1136 = vld [vmem:[%s3 + $0x124] sm:$0xf]
        %v1137 = vld [vmem:[%s3 + $0x128] sm:$0xf]
        %v1138 = vld [vmem:[%s3 + $0x12c] sm:$0xf]
        %v1139 = vld [vmem:[%s3 + $0x130] sm:$0xf]
        %v1140 = vld [vmem:[%s3 + $0x134] sm:$0xf]
        %v1141 = vld [vmem:[%s3 + $0x138] sm:$0xf]
        %v1142 = vld [vmem:[%s3 + $0x13c] sm:$0xf]
        %v1143 = vld [vmem:[%s3 + $0x140] sm:$0xf]
        %v1144 = vld [vmem:[%s3 + $0x144] sm:$0xf]
        %v1145 = vld [vmem:[%s3 + $0x148] sm:$0xf]
        %v1146 = vld [vmem:[%s3 + $0x14c] sm:$0xf]
        %v1147 = vld [vmem:[%s3 + $0x150] sm:$0xf]
        %v1148 = vld [vmem:[%s3 + $0x154] sm:$0xf]
        %v1149 = vld [vmem:[%s3 + $0x158] sm:$0xf]
        %v1150 = vld [vmem:[%s3 + $0x15c] sm:$0xf]
        %v1151 = vld [vmem:[%s3 + $0x160] sm:$0xf]
        %v1152 = vld [vmem:[%s3 + $0x164] sm:$0xf]
        %v1153 = vld [vmem:[%s3 + $0x168] sm:$0xf]
        %v1154 = vld [vmem:[%s3 + $0x16c] sm:$0xf]
        %v1155 = vld [vmem:[%s3 + $0x170] sm:$0xf]
        %v1156 = vld [vmem:[%s3 + $0x174] sm:$0xf]
        %v1157 = vld [vmem:[%s3 + $0x178] sm:$0xf]
        %v1158 = vld [vmem:[%s3 + $0x17c] sm:$0xf]
        %v1159 = vld [vmem:[%s3 + $0x180] sm:$0xf]
        %v1160 = vld [vmem:[%s3 + $0x184] sm:$0xf]
        %v1161 = vld [vmem:[%s3 + $0x188] sm:$0xf]
        %v1162 = vld [vmem:[%s3 + $0x18c] sm:$0xf]
        %v1163 = vld [vmem:[%s3 + $0x190] sm:$0xf]
        %v1164 = vld [vmem:[%s3 + $0x194] sm:$0xf]
        %v1165 = vld [vmem:[%s3 + $0x198] sm:$0xf]
        %v1166 = vld [vmem:[%s3 + $0x19c] sm:$0xf]
        %v1167 = vld [vmem:[%s3 + $0x1a0] sm:$0xf]
        %v1168 = vld [vmem:[%s3 + $0x1a4] sm:$0xf]
        %v1169 = vld [vmem:[%s3 + $0x1a8] sm:$0xf]
        %v1170 = vld [vmem:[%s3 + $0x1ac] sm:$0xf]
        %v1171 = vld [vmem:[%s3 + $0x1b0] sm:$0xf]
        %v1172 = vld [vmem:[%s3 + $0x1b4] sm:$0xf]
        %v1173 = vld [vmem:[%s3 + $0x1b8] sm:$0xf]
        %v1174 = vld [vmem:[%s3 + $0x1bc] sm:$0xf]
        %v1175 = vld [vmem:[%s3 + $0x1c0] sm:$0xf]
        %v1176 = vld [vmem:[%s3 + $0x1c4] sm:$0xf]
        %v1177 = vld [vmem:[%s3 + $0x1c8] sm:$0xf]
        %v1178 = vld [vmem:[%s3 + $0x1cc] sm:$0xf]
        %v1179 = vld [vmem:[%s3 + $0x1d0] sm:$0xf]
        %v1180 = vld [vmem:[%s3 + $0x1d4] sm:$0xf]
        %v1181 = vld [vmem:[%s3 + $0x1d8] sm:$0xf]
        %v1182 = vld [vmem:[%s3 + $0x1dc] sm:$0xf]
        %v1183 = vld [vmem:[%s3 + $0x1e0] sm:$0xf]
        %v1184 = vld [vmem:[%s3 + $0x1e4] sm:$0xf]
        %v1185 = vld [vmem:[%s3 + $0x1e8] sm:$0xf]
        %v1186 = vld [vmem:[%s3 + $0x1ec] sm:$0xf]
        %v1187 = vld [vmem:[%s3 + $0x1f0] sm:$0xf]
        %v1188 = vld [vmem:[%s3 + $0x1f4] sm:$0xf]
        %v1189 = vld [vmem:[%s3 + $0x1f8] sm:$0xf]
        %v1190 = vld [vmem:[%s3 + $0x1fc] sm:$0xf]
        %v1191 = vld [vmem:[%s4] sm:$0x1]
        %v1193 = vperm.slane %v1191, 0
        %v1323 = vunpack.c.l.b16 %v1063
        %v1324 = vunpack.c.l.b16 %v1064
        %v1325 = vunpack.c.l.b16 %v1065
        %v1326 = vunpack.c.l.b16 %v1066
        %v1327 = vunpack.c.l.b16 %v1067
        %v1328 = vunpack.c.l.b16 %v1068
        %v1329 = vunpack.c.l.b16 %v1069
        %v1330 = vunpack.c.l.b16 %v1070
        %v1331 = vunpack.c.l.b16 %v1071
        %v1332 = vunpack.c.l.b16 %v1072
        %v1333 = vunpack.c.l.b16 %v1073
        %v1334 = vunpack.c.l.b16 %v1074
        %v1335 = vunpack.c.l.b16 %v1075
        %v1336 = vunpack.c.l.b16 %v1076
        %v1337 = vunpack.c.l.b16 %v1077
        %v1338 = vunpack.c.l.b16 %v1078
        %v1339 = vunpack.c.l.b16 %v1079
        %v1340 = vunpack.c.l.b16 %v1080
        %v1341 = vunpack.c.l.b16 %v1081
        %v1342 = vunpack.c.l.b16 %v1082
        %v1343 = vunpack.c.l.b16 %v1083
        %v1344 = vunpack.c.l.b16 %v1084
        %v1345 = vunpack.c.l.b16 %v1085
        %v1346 = vunpack.c.l.b16 %v1086
        %v1347 = vunpack.c.l.b16 %v1087
        %v1348 = vunpack.c.l.b16 %v1088
        %v1349 = vunpack.c.l.b16 %v1089
        %v1350 = vunpack.c.l.b16 %v1090
        %v1351 = vunpack.c.l.b16 %v1091
        %v1352 = vunpack.c.l.b16 %v1092
        %v1353 = vunpack.c.l.b16 %v1093
        %v1354 = vunpack.c.l.b16 %v1094
        %v1355 = vunpack.c.l.b16 %v1095
        %v1356 = vunpack.c.l.b16 %v1096
        %v1357 = vunpack.c.l.b16 %v1097
        %v1358 = vunpack.c.l.b16 %v1098
        %v1359 = vunpack.c.l.b16 %v1099
        %v1360 = vunpack.c.l.b16 %v1100
        %v1361 = vunpack.c.l.b16 %v1101
        %v1362 = vunpack.c.l.b16 %v1102
        %v1363 = vunpack.c.l.b16 %v1103
        %v1364 = vunpack.c.l.b16 %v1104
        %v1365 = vunpack.c.l.b16 %v1105
        %v1366 = vunpack.c.l.b16 %v1106
        %v1367 = vunpack.c.l.b16 %v1107
        %v1368 = vunpack.c.l.b16 %v1108
        %v1369 = vunpack.c.l.b16 %v1109
        %v1370 = vunpack.c.l.b16 %v1110
        %v1371 = vunpack.c.l.b16 %v1111
        %v1372 = vunpack.c.l.b16 %v1112
        %v1373 = vunpack.c.l.b16 %v1113
        %v1374 = vunpack.c.l.b16 %v1114
        %v1375 = vunpack.c.l.b16 %v1115
        %v1376 = vunpack.c.l.b16 %v1116
        %v1377 = vunpack.c.l.b16 %v1117
        %v1378 = vunpack.c.l.b16 %v1118
        %v1379 = vunpack.c.l.b16 %v1119
        %v1380 = vunpack.c.l.b16 %v1120
        %v1381 = vunpack.c.l.b16 %v1121
        %v1382 = vunpack.c.l.b16 %v1122
        %v1383 = vunpack.c.l.b16 %v1123
        %v1384 = vunpack.c.l.b16 %v1124
        %v1385 = vunpack.c.l.b16 %v1125
        %v1386 = vunpack.c.l.b16 %v1126
        %v1387 = vunpack.c.l.b16 %v1127
        %v1388 = vunpack.c.l.b16 %v1128
        %v1389 = vunpack.c.l.b16 %v1129
        %v1390 = vunpack.c.l.b16 %v1130
        %v1391 = vunpack.c.l.b16 %v1131
        %v1392 = vunpack.c.l.b16 %v1132
        %v1393 = vunpack.c.l.b16 %v1133
        %v1394 = vunpack.c.l.b16 %v1134
        %v1395 = vunpack.c.l.b16 %v1135
        %v1396 = vunpack.c.l.b16 %v1136
        %v1397 = vunpack.c.l.b16 %v1137
        %v1398 = vunpack.c.l.b16 %v1138
        %v1399 = vunpack.c.l.b16 %v1139
        %v1400 = vunpack.c.l.b16 %v1140
        %v1401 = vunpack.c.l.b16 %v1141
        %v1402 = vunpack.c.l.b16 %v1142
        %v1403 = vunpack.c.l.b16 %v1143
        %v1404 = vunpack.c.l.b16 %v1144
        %v1405 = vunpack.c.l.b16 %v1145
        %v1406 = vunpack.c.l.b16 %v1146
        %v1407 = vunpack.c.l.b16 %v1147
        %v1408 = vunpack.c.l.b16 %v1148
        %v1409 = vunpack.c.l.b16 %v1149
        %v1410 = vunpack.c.l.b16 %v1150
        %v1411 = vunpack.c.l.b16 %v1151
        %v1412 = vunpack.c.l.b16 %v1152
        %v1413 = vunpack.c.l.b16 %v1153
        %v1414 = vunpack.c.l.b16 %v1154
        %v1415 = vunpack.c.l.b16 %v1155
        %v1416 = vunpack.c.l.b16 %v1156
        %v1417 = vunpack.c.l.b16 %v1157
        %v1418 = vunpack.c.l.b16 %v1158
        %v1419 = vunpack.c.l.b16 %v1159
        %v1420 = vunpack.c.l.b16 %v1160
        %v1421 = vunpack.c.l.b16 %v1161
        %v1422 = vunpack.c.l.b16 %v1162
        %v1423 = vunpack.c.l.b16 %v1163
        %v1424 = vunpack.c.l.b16 %v1164
        %v1425 = vunpack.c.l.b16 %v1165
        %v1426 = vunpack.c.l.b16 %v1166
        %v1427 = vunpack.c.l.b16 %v1167
        %v1428 = vunpack.c.l.b16 %v1168
        %v1429 = vunpack.c.l.b16 %v1169
        %v1430 = vunpack.c.l.b16 %v1170
        %v1431 = vunpack.c.l.b16 %v1171
        %v1432 = vunpack.c.l.b16 %v1172
        %v1433 = vunpack.c.l.b16 %v1173
        %v1434 = vunpack.c.l.b16 %v1174
        %v1435 = vunpack.c.l.b16 %v1175
        %v1436 = vunpack.c.l.b16 %v1176
        %v1437 = vunpack.c.l.b16 %v1177
        %v1438 = vunpack.c.l.b16 %v1178
        %v1439 = vunpack.c.l.b16 %v1179
        %v1440 = vunpack.c.l.b16 %v1180
        %v1441 = vunpack.c.l.b16 %v1181
        %v1442 = vunpack.c.l.b16 %v1182
        %v1443 = vunpack.c.l.b16 %v1183
        %v1444 = vunpack.c.l.b16 %v1184
        %v1445 = vunpack.c.l.b16 %v1185
        %v1446 = vunpack.c.l.b16 %v1186
        %v1447 = vunpack.c.l.b16 %v1187
        %v1448 = vunpack.c.l.b16 %v1188
        %v1449 = vunpack.c.l.b16 %v1189
        %v1450 = vunpack.c.l.b16 %v1190
        %v1451 = vpack.c.b16 %v1324, %v1323
        %v1452 = vpack.c.b16 %v1326, %v1325
        %v1453 = vpack.c.b16 %v1328, %v1327
        %v1454 = vpack.c.b16 %v1330, %v1329
        %v1455 = vpack.c.b16 %v1332, %v1331
        %v1456 = vpack.c.b16 %v1334, %v1333
        %v1457 = vpack.c.b16 %v1336, %v1335
        %v1458 = vpack.c.b16 %v1338, %v1337
        %v1459 = vpack.c.b16 %v1340, %v1339
        %v1460 = vpack.c.b16 %v1342, %v1341
        %v1461 = vpack.c.b16 %v1344, %v1343
        %v1462 = vpack.c.b16 %v1346, %v1345
        %v1463 = vpack.c.b16 %v1348, %v1347
        %v1464 = vpack.c.b16 %v1350, %v1349
        %v1465 = vpack.c.b16 %v1352, %v1351
        %v1466 = vpack.c.b16 %v1354, %v1353
        %v1467 = vpack.c.b16 %v1356, %v1355
        %v1468 = vpack.c.b16 %v1358, %v1357
        %v1469 = vpack.c.b16 %v1360, %v1359
        %v1470 = vpack.c.b16 %v1362, %v1361
        %v1471 = vpack.c.b16 %v1364, %v1363
        %v1472 = vpack.c.b16 %v1366, %v1365
        %v1473 = vpack.c.b16 %v1368, %v1367
        %v1474 = vpack.c.b16 %v1370, %v1369
        %v1475 = vpack.c.b16 %v1372, %v1371
        %v1476 = vpack.c.b16 %v1374, %v1373
        %v1477 = vpack.c.b16 %v1376, %v1375
        %v1478 = vpack.c.b16 %v1378, %v1377
        %v1479 = vpack.c.b16 %v1380, %v1379
        %v1480 = vpack.c.b16 %v1382, %v1381
        %v1481 = vpack.c.b16 %v1384, %v1383
        %v1482 = vpack.c.b16 %v1386, %v1385
        %v1483 = vpack.c.b16 %v1388, %v1387
        %v1484 = vpack.c.b16 %v1390, %v1389
        %v1485 = vpack.c.b16 %v1392, %v1391
        %v1486 = vpack.c.b16 %v1394, %v1393
        %v1487 = vpack.c.b16 %v1396, %v1395
        %v1488 = vpack.c.b16 %v1398, %v1397
        %v1489 = vpack.c.b16 %v1400, %v1399
        %v1490 = vpack.c.b16 %v1402, %v1401
        %v1491 = vpack.c.b16 %v1404, %v1403
        %v1492 = vpack.c.b16 %v1406, %v1405
        %v1493 = vpack.c.b16 %v1408, %v1407
        %v1494 = vpack.c.b16 %v1410, %v1409
        %v1495 = vpack.c.b16 %v1412, %v1411
        %v1496 = vpack.c.b16 %v1414, %v1413
        %v1497 = vpack.c.b16 %v1416, %v1415
        %v1498 = vpack.c.b16 %v1418, %v1417
        %v1499 = vpack.c.b16 %v1420, %v1419
        %v1500 = vpack.c.b16 %v1422, %v1421
        %v1501 = vpack.c.b16 %v1424, %v1423
        %v1502 = vpack.c.b16 %v1426, %v1425
        %v1503 = vpack.c.b16 %v1428, %v1427
        %v1504 = vpack.c.b16 %v1430, %v1429
        %v1505 = vpack.c.b16 %v1432, %v1431
        %v1506 = vpack.c.b16 %v1434, %v1433
        %v1507 = vpack.c.b16 %v1436, %v1435
        %v1508 = vpack.c.b16 %v1438, %v1437
        %v1509 = vpack.c.b16 %v1440, %v1439
        %v1510 = vpack.c.b16 %v1442, %v1441
        %v1511 = vpack.c.b16 %v1444, %v1443
        %v1512 = vpack.c.b16 %v1446, %v1445
        %v1513 = vpack.c.b16 %v1448, %v1447
        %v1514 = vpack.c.b16 %v1450, %v1449
        %1579 = vmatpush.bf16.msra.mxu0 %v1458
        %1580 = vmatpush.bf16.msra.mxu0 %v1457
        %1581 = vmatpush.bf16.msra.mxu0 %v1456
        %1582 = vmatpush.bf16.msra.mxu0 %v1455
        %1583 = vmatpush.bf16.msra.mxu0 %v1454
        %1584 = vmatpush.bf16.msra.mxu0 %v1453
        %1585 = vmatpush.bf16.msra.mxu0 %v1452
        %1586 = vmatpush.bf16.msra.mxu0 %v1451
        %1587 = vmatmul.bf16.gmra.mxu0 %v1055
        %v1588 = vpop.f32.mrf.mxu0
        %v1589 = vadd.f32 %v1193, %v1588
        %v1590 = vpop.f32.mrf.mxu0
        %1591 = vdwg.mxu0
        %1592 = vmatpush.bf16.msra.mxu0 %v1466
        %1593 = vmatpush.bf16.msra.mxu0 %v1465
        %1594 = vmatpush.bf16.msra.mxu0 %v1464
        %1595 = vmatpush.bf16.msra.mxu0 %v1463
        %1596 = vmatpush.bf16.msra.mxu0 %v1462
        %1597 = vmatpush.bf16.msra.mxu0 %v1461
        %1598 = vmatpush.bf16.msra.mxu0 %v1460
        %1599 = vmatpush.bf16.msra.mxu0 %v1459
        %1600 = vmatmul.bf16.gmra.mxu0 %v1056
        %v1601 = vpop.f32.mrf.mxu0
        %v1602 = vadd.f32 %v1589, %v1601
        %v1603 = vpop.f32.mrf.mxu0
        %1604 = vdwg.mxu0
        %1605 = vmatpush.bf16.msra.mxu0 %v1474
        %1606 = vmatpush.bf16.msra.mxu0 %v1473
        %1607 = vmatpush.bf16.msra.mxu0 %v1472
        %1608 = vmatpush.bf16.msra.mxu0 %v1471
        %1609 = vmatpush.bf16.msra.mxu0 %v1470
        %1610 = vmatpush.bf16.msra.mxu0 %v1469
        %1611 = vmatpush.bf16.msra.mxu0 %v1468
        %1612 = vmatpush.bf16.msra.mxu0 %v1467
        %1613 = vmatmul.bf16.gmra.mxu0 %v1057
        %v1614 = vpop.f32.mrf.mxu0
        %v1615 = vadd.f32 %v1602, %v1614
        %v1616 = vpop.f32.mrf.mxu0
        %1617 = vdwg.mxu0
        %1618 = vmatpush.bf16.msra.mxu0 %v1482
        %1619 = vmatpush.bf16.msra.mxu0 %v1481
        %1620 = vmatpush.bf16.msra.mxu0 %v1480
        %1621 = vmatpush.bf16.msra.mxu0 %v1479
        %1622 = vmatpush.bf16.msra.mxu0 %v1478
        %1623 = vmatpush.bf16.msra.mxu0 %v1477
        %1624 = vmatpush.bf16.msra.mxu0 %v1476
        %1625 = vmatpush.bf16.msra.mxu0 %v1475
        %1626 = vmatmul.bf16.gmra.mxu0 %v1058
        %v1627 = vpop.f32.mrf.mxu0
        %v1628 = vadd.f32 %v1615, %v1627
        %v1629 = vpop.f32.mrf.mxu0
        %1630 = vdwg.mxu0
        %1631 = vmatpush.bf16.msra.mxu0 %v1490
        %1632 = vmatpush.bf16.msra.mxu0 %v1489
        %1633 = vmatpush.bf16.msra.mxu0 %v1488
        %1634 = vmatpush.bf16.msra.mxu0 %v1487
        %1635 = vmatpush.bf16.msra.mxu0 %v1486
        %1636 = vmatpush.bf16.msra.mxu0 %v1485
        %1637 = vmatpush.bf16.msra.mxu0 %v1484
        %1638 = vmatpush.bf16.msra.mxu0 %v1483
        %1639 = vmatmul.bf16.gmra.mxu0 %v1059
        %v1640 = vpop.f32.mrf.mxu0
        %v1641 = vadd.f32 %v1628, %v1640
        %v1642 = vpop.f32.mrf.mxu0
        %1643 = vdwg.mxu0
        %1644 = vmatpush.bf16.msra.mxu0 %v1498
        %1645 = vmatpush.bf16.msra.mxu0 %v1497
        %1646 = vmatpush.bf16.msra.mxu0 %v1496
        %1647 = vmatpush.bf16.msra.mxu0 %v1495
        %1648 = vmatpush.bf16.msra.mxu0 %v1494
        %1649 = vmatpush.bf16.msra.mxu0 %v1493
        %1650 = vmatpush.bf16.msra.mxu0 %v1492
        %1651 = vmatpush.bf16.msra.mxu0 %v1491
        %1652 = vmatmul.bf16.gmra.mxu0 %v1060
        %v1653 = vpop.f32.mrf.mxu0
        %v1654 = vadd.f32 %v1641, %v1653
        %v1655 = vpop.f32.mrf.mxu0
        %1656 = vdwg.mxu0
        %1657 = vmatpush.bf16.msra.mxu0 %v1506
        %1658 = vmatpush.bf16.msra.mxu0 %v1505
        %1659 = vmatpush.bf16.msra.mxu0 %v1504
        %1660 = vmatpush.bf16.msra.mxu0 %v1503
        %1661 = vmatpush.bf16.msra.mxu0 %v1502
        %1662 = vmatpush.bf16.msra.mxu0 %v1501
        %1663 = vmatpush.bf16.msra.mxu0 %v1500
        %1664 = vmatpush.bf16.msra.mxu0 %v1499
        %1665 = vmatmul.bf16.gmra.mxu0 %v1061
        %v1666 = vpop.f32.mrf.mxu0
        %v1667 = vadd.f32 %v1654, %v1666
        %v1668 = vpop.f32.mrf.mxu0
        %1669 = vdwg.mxu0
        %1670 = vmatpush.bf16.msra.mxu0 %v1514
        %1671 = vmatpush.bf16.msra.mxu0 %v1513
        %1672 = vmatpush.bf16.msra.mxu0 %v1512
        %1673 = vmatpush.bf16.msra.mxu0 %v1511
        %1674 = vmatpush.bf16.msra.mxu0 %v1510
        %1675 = vmatpush.bf16.msra.mxu0 %v1509
        %1676 = vmatpush.bf16.msra.mxu0 %v1508
        %1677 = vmatpush.bf16.msra.mxu0 %v1507
        %1678 = vmatmul.bf16.gmra.mxu0 %v1062
        %v1679 = vpop.f32.mrf.mxu0
        %v1680 = vadd.f32 %v1667, %v1679
        %v1681 = vpop.f32.mrf.mxu0
        %1682 = vdwg.mxu0
        %v1683 = vmax.f32 %v1680, 0.0
        %v1684 = vld [vmem:[%s680] sm:$0x1]
        %v1685 = vld [vmem:[%s6] sm:$0x77]
        %v1686 = vld [vmem:[%s6 + $0x8] sm:$0x77]
        %v1687 = vld [vmem:[%s6 + $0x10] sm:$0x77]
        %v1688 = vld [vmem:[%s6 + $0x18] sm:$0x77]
        %v1689 = vld [vmem:[%s6 + $0x20] sm:$0x77]
        %v1690 = vld [vmem:[%s6 + $0x28] sm:$0x77]
        %v1691 = vld [vmem:[%s6 + $0x30] sm:$0x77]
        %v1692 = vld [vmem:[%s6 + $0x38] sm:$0x77]
        %1694 = vset.pattern.permute.xlu0 0
        %1695 = vperm.xlu0 %1694, %v1684
        %v1696 = vpop.permute.xlu0 %1695
        %v1698 = vperm.slane %v1696, 0
        %v1699 = vmul.f32 %v1698, %v1685
        %v1700 = vmul.f32 %v1698, %v1686
        %v1701 = vmul.f32 %v1698, %v1687
        %v1702 = vmul.f32 %v1698, %v1688
        %v1703 = vmul.f32 %v1698, %v1689
        %v1704 = vmul.f32 %v1698, %v1690
        %v1705 = vmul.f32 %v1698, %v1691
        %v1706 = vmul.f32 %v1698, %v1692
        %1707 = vset.pattern.permute.xlu0 1
        %1708 = vperm.xlu0 %1707, %v1684
        %v1709 = vpop.permute.xlu0 %1708
        %v1711 = vperm.slane %v1709, 0
        %v1712 = vmul.f32 %v1711, %v1685
        %v1713 = vmul.f32 %v1711, %v1686
        %v1714 = vmul.f32 %v1711, %v1687
        %v1715 = vmul.f32 %v1711, %v1688
        %v1716 = vmul.f32 %v1711, %v1689
        %v1717 = vmul.f32 %v1711, %v1690
        %v1718 = vmul.f32 %v1711, %v1691
        %v1719 = vmul.f32 %v1711, %v1692
        %v1728 = vrot.slane %v1712, 5
        %v1729 = vrot.slane %v1728, 4
        %v1730 = vrot.slane %v1713, 5
        %v1731 = vrot.slane %v1730, 4
        %v1732 = vrot.slane %v1714, 5
        %v1733 = vrot.slane %v1732, 4
        %v1734 = vrot.slane %v1715, 5
        %v1735 = vrot.slane %v1734, 4
        %v1736 = vrot.slane %v1716, 5
        %v1737 = vrot.slane %v1736, 4
        %v1738 = vrot.slane %v1717, 5
        %v1739 = vrot.slane %v1738, 4
        %v1740 = vrot.slane %v1718, 5
        %v1741 = vrot.slane %v1740, 4
        %v1742 = vrot.slane %v1719, 5
        %v1743 = vrot.slane %v1742, 4
        %v1752 = vadd.f32 %v1699, %v1729
        %v1753 = vadd.f32 %v1700, %v1731
        %v1754 = vadd.f32 %v1701, %v1733
        %v1755 = vadd.f32 %v1702, %v1735
        %v1756 = vadd.f32 %v1703, %v1737
        %v1757 = vadd.f32 %v1704, %v1739
        %v1758 = vadd.f32 %v1705, %v1741
        %v1759 = vadd.f32 %v1706, %v1743
        %1760 = vset.pattern.permute.xlu0 2
        %1761 = vperm.xlu0 %1760, %v1684
        %v1762 = vpop.permute.xlu0 %1761
        %v1764 = vperm.slane %v1762, 0
        %v1765 = vmul.f32 %v1764, %v1685
        %v1766 = vmul.f32 %v1764, %v1686
        %v1767 = vmul.f32 %v1764, %v1687
        %v1768 = vmul.f32 %v1764, %v1688
        %v1769 = vmul.f32 %v1764, %v1689
        %v1770 = vmul.f32 %v1764, %v1690
        %v1771 = vmul.f32 %v1764, %v1691
        %v1772 = vmul.f32 %v1764, %v1692
        %v1781 = vrot.slane %v1765, 6
        %v1782 = vrot.slane %v1781, 4
        %v1783 = vrot.slane %v1766, 6
        %v1784 = vrot.slane %v1783, 4
        %v1785 = vrot.slane %v1767, 6
        %v1786 = vrot.slane %v1785, 4
        %v1787 = vrot.slane %v1768, 6
        %v1788 = vrot.slane %v1787, 4
        %v1789 = vrot.slane %v1769, 6
        %v1790 = vrot.slane %v1789, 4
        %v1791 = vrot.slane %v1770, 6
        %v1792 = vrot.slane %v1791, 4
        %v1793 = vrot.slane %v1771, 6
        %v1794 = vrot.slane %v1793, 4
        %v1795 = vrot.slane %v1772, 6
        %v1796 = vrot.slane %v1795, 4
        %v1805 = vadd.f32 %v1752, %v1782
        %v1806 = vadd.f32 %v1753, %v1784
        %v1807 = vadd.f32 %v1754, %v1786
        %v1808 = vadd.f32 %v1755, %v1788
        %v1809 = vadd.f32 %v1756, %v1790
        %v1810 = vadd.f32 %v1757, %v1792
        %v1811 = vadd.f32 %v1758, %v1794
        %v1812 = vadd.f32 %v1759, %v1796
        %v1813 = vmax.f32 %v1805, 0.0
        %v1814 = vmax.f32 %v1806, 0.0
        %v1815 = vmax.f32 %v1807, 0.0
        %v1816 = vmax.f32 %v1808, 0.0
        %v1817 = vmax.f32 %v1809, 0.0
        %v1818 = vmax.f32 %v1810, 0.0
        %v1819 = vmax.f32 %v1811, 0.0
        %v1820 = vmax.f32 %v1812, 0.0
        %v1829 = vperm.slane %v1813, 0
        %v1830 = vperm.slane %v1813, 4
        %v1831 = vperm.slane %v1814, 0
        %v1832 = vperm.slane %v1814, 4
        %v1833 = vperm.slane %v1815, 0
        %v1834 = vperm.slane %v1815, 4
        %v1835 = vperm.slane %v1816, 0
        %v1836 = vperm.slane %v1816, 4
        %v1837 = vperm.slane %v1817, 0
        %v1838 = vperm.slane %v1817, 4
        %v1839 = vperm.slane %v1818, 0
        %v1840 = vperm.slane %v1818, 4
        %v1841 = vperm.slane %v1819, 0
        %v1842 = vperm.slane %v1819, 4
        %v1843 = vperm.slane %v1820, 0
        %v1844 = vperm.slane %v1820, 4
        %v1861 = vpack.c.bf16 %v1829, %v1829
        %v1862 = vpack.c.bf16 %v1830, %v1830
        %v1863 = vpack.c.bf16 %v1831, %v1831
        %v1864 = vpack.c.bf16 %v1832, %v1832
        %v1865 = vpack.c.bf16 %v1833, %v1833
        %v1866 = vpack.c.bf16 %v1834, %v1834
        %v1867 = vpack.c.bf16 %v1835, %v1835
        %v1868 = vpack.c.bf16 %v1836, %v1836
        %v1869 = vpack.c.bf16 %v1837, %v1837
        %v1870 = vpack.c.bf16 %v1838, %v1838
        %v1871 = vpack.c.bf16 %v1839, %v1839
        %v1872 = vpack.c.bf16 %v1840, %v1840
        %v1873 = vpack.c.bf16 %v1841, %v1841
        %v1874 = vpack.c.bf16 %v1842, %v1842
        %v1875 = vpack.c.bf16 %v1843, %v1843
        %v1876 = vpack.c.bf16 %v1844, %v1844
        %v1877 = vld [vmem:[%s8] sm:$0xf]
        %v1878 = vld [vmem:[%s8 + $0x4] sm:$0xf]
        %v1879 = vld [vmem:[%s8 + $0x8] sm:$0xf]
        %v1880 = vld [vmem:[%s8 + $0xc] sm:$0xf]
        %v1881 = vld [vmem:[%s8 + $0x10] sm:$0xf]
        %v1882 = vld [vmem:[%s8 + $0x14] sm:$0xf]
        %v1883 = vld [vmem:[%s8 + $0x18] sm:$0xf]
        %v1884 = vld [vmem:[%s8 + $0x1c] sm:$0xf]
        %v1885 = vld [vmem:[%s8 + $0x20] sm:$0xf]
        %v1886 = vld [vmem:[%s8 + $0x24] sm:$0xf]
        %v1887 = vld [vmem:[%s8 + $0x28] sm:$0xf]
        %v1888 = vld [vmem:[%s8 + $0x2c] sm:$0xf]
        %v1889 = vld [vmem:[%s8 + $0x30] sm:$0xf]
        %v1890 = vld [vmem:[%s8 + $0x34] sm:$0xf]
        %v1891 = vld [vmem:[%s8 + $0x38] sm:$0xf]
        %v1892 = vld [vmem:[%s8 + $0x3c] sm:$0xf]
        %v1893 = vld [vmem:[%s8 + $0x40] sm:$0xf]
        %v1894 = vld [vmem:[%s8 + $0x44] sm:$0xf]
        %v1895 = vld [vmem:[%s8 + $0x48] sm:$0xf]
        %v1896 = vld [vmem:[%s8 + $0x4c] sm:$0xf]
        %v1897 = vld [vmem:[%s8 + $0x50] sm:$0xf]
        %v1898 = vld [vmem:[%s8 + $0x54] sm:$0xf]
        %v1899 = vld [vmem:[%s8 + $0x58] sm:$0xf]
        %v1900 = vld [vmem:[%s8 + $0x5c] sm:$0xf]
        %v1901 = vld [vmem:[%s8 + $0x60] sm:$0xf]
        %v1902 = vld [vmem:[%s8 + $0x64] sm:$0xf]
        %v1903 = vld [vmem:[%s8 + $0x68] sm:$0xf]
        %v1904 = vld [vmem:[%s8 + $0x6c] sm:$0xf]
        %v1905 = vld [vmem:[%s8 + $0x70] sm:$0xf]
        %v1906 = vld [vmem:[%s8 + $0x74] sm:$0xf]
        %v1907 = vld [vmem:[%s8 + $0x78] sm:$0xf]
        %v1908 = vld [vmem:[%s8 + $0x7c] sm:$0xf]
        %v1909 = vld [vmem:[%s8 + $0x80] sm:$0xf]
        %v1910 = vld [vmem:[%s8 + $0x84] sm:$0xf]
        %v1911 = vld [vmem:[%s8 + $0x88] sm:$0xf]
        %v1912 = vld [vmem:[%s8 + $0x8c] sm:$0xf]
        %v1913 = vld [vmem:[%s8 + $0x90] sm:$0xf]
        %v1914 = vld [vmem:[%s8 + $0x94] sm:$0xf]
        %v1915 = vld [vmem:[%s8 + $0x98] sm:$0xf]
        %v1916 = vld [vmem:[%s8 + $0x9c] sm:$0xf]
        %v1917 = vld [vmem:[%s8 + $0xa0] sm:$0xf]
        %v1918 = vld [vmem:[%s8 + $0xa4] sm:$0xf]
        %v1919 = vld [vmem:[%s8 + $0xa8] sm:$0xf]
        %v1920 = vld [vmem:[%s8 + $0xac] sm:$0xf]
        %v1921 = vld [vmem:[%s8 + $0xb0] sm:$0xf]
        %v1922 = vld [vmem:[%s8 + $0xb4] sm:$0xf]
        %v1923 = vld [vmem:[%s8 + $0xb8] sm:$0xf]
        %v1924 = vld [vmem:[%s8 + $0xbc] sm:$0xf]
        %v1925 = vld [vmem:[%s8 + $0xc0] sm:$0xf]
        %v1926 = vld [vmem:[%s8 + $0xc4] sm:$0xf]
        %v1927 = vld [vmem:[%s8 + $0xc8] sm:$0xf]
        %v1928 = vld [vmem:[%s8 + $0xcc] sm:$0xf]
        %v1929 = vld [vmem:[%s8 + $0xd0] sm:$0xf]
        %v1930 = vld [vmem:[%s8 + $0xd4] sm:$0xf]
        %v1931 = vld [vmem:[%s8 + $0xd8] sm:$0xf]
        %v1932 = vld [vmem:[%s8 + $0xdc] sm:$0xf]
        %v1933 = vld [vmem:[%s8 + $0xe0] sm:$0xf]
        %v1934 = vld [vmem:[%s8 + $0xe4] sm:$0xf]
        %v1935 = vld [vmem:[%s8 + $0xe8] sm:$0xf]
        %v1936 = vld [vmem:[%s8 + $0xec] sm:$0xf]
        %v1937 = vld [vmem:[%s8 + $0xf0] sm:$0xf]
        %v1938 = vld [vmem:[%s8 + $0xf4] sm:$0xf]
        %v1939 = vld [vmem:[%s8 + $0xf8] sm:$0xf]
        %v1940 = vld [vmem:[%s8 + $0xfc] sm:$0xf]
        %v1941 = vld [vmem:[%s8 + $0x100] sm:$0xf]
        %v1942 = vld [vmem:[%s8 + $0x104] sm:$0xf]
        %v1943 = vld [vmem:[%s8 + $0x108] sm:$0xf]
        %v1944 = vld [vmem:[%s8 + $0x10c] sm:$0xf]
        %v1945 = vld [vmem:[%s8 + $0x110] sm:$0xf]
        %v1946 = vld [vmem:[%s8 + $0x114] sm:$0xf]
        %v1947 = vld [vmem:[%s8 + $0x118] sm:$0xf]
        %v1948 = vld [vmem:[%s8 + $0x11c] sm:$0xf]
        %v1949 = vld [vmem:[%s8 + $0x120] sm:$0xf]
        %v1950 = vld [vmem:[%s8 + $0x124] sm:$0xf]
        %v1951 = vld [vmem:[%s8 + $0x128] sm:$0xf]
        %v1952 = vld [vmem:[%s8 + $0x12c] sm:$0xf]
        %v1953 = vld [vmem:[%s8 + $0x130] sm:$0xf]
        %v1954 = vld [vmem:[%s8 + $0x134] sm:$0xf]
        %v1955 = vld [vmem:[%s8 + $0x138] sm:$0xf]
        %v1956 = vld [vmem:[%s8 + $0x13c] sm:$0xf]
        %v1957 = vld [vmem:[%s8 + $0x140] sm:$0xf]
        %v1958 = vld [vmem:[%s8 + $0x144] sm:$0xf]
        %v1959 = vld [vmem:[%s8 + $0x148] sm:$0xf]
        %v1960 = vld [vmem:[%s8 + $0x14c] sm:$0xf]
        %v1961 = vld [vmem:[%s8 + $0x150] sm:$0xf]
        %v1962 = vld [vmem:[%s8 + $0x154] sm:$0xf]
        %v1963 = vld [vmem:[%s8 + $0x158] sm:$0xf]
        %v1964 = vld [vmem:[%s8 + $0x15c] sm:$0xf]
        %v1965 = vld [vmem:[%s8 + $0x160] sm:$0xf]
        %v1966 = vld [vmem:[%s8 + $0x164] sm:$0xf]
        %v1967 = vld [vmem:[%s8 + $0x168] sm:$0xf]
        %v1968 = vld [vmem:[%s8 + $0x16c] sm:$0xf]
        %v1969 = vld [vmem:[%s8 + $0x170] sm:$0xf]
        %v1970 = vld [vmem:[%s8 + $0x174] sm:$0xf]
        %v1971 = vld [vmem:[%s8 + $0x178] sm:$0xf]
        %v1972 = vld [vmem:[%s8 + $0x17c] sm:$0xf]
        %v1973 = vld [vmem:[%s8 + $0x180] sm:$0xf]
        %v1974 = vld [vmem:[%s8 + $0x184] sm:$0xf]
        %v1975 = vld [vmem:[%s8 + $0x188] sm:$0xf]
        %v1976 = vld [vmem:[%s8 + $0x18c] sm:$0xf]
        %v1977 = vld [vmem:[%s8 + $0x190] sm:$0xf]
        %v1978 = vld [vmem:[%s8 + $0x194] sm:$0xf]
        %v1979 = vld [vmem:[%s8 + $0x198] sm:$0xf]
        %v1980 = vld [vmem:[%s8 + $0x19c] sm:$0xf]
        %v1981 = vld [vmem:[%s8 + $0x1a0] sm:$0xf]
        %v1982 = vld [vmem:[%s8 + $0x1a4] sm:$0xf]
        %v1983 = vld [vmem:[%s8 + $0x1a8] sm:$0xf]
        %v1984 = vld [vmem:[%s8 + $0x1ac] sm:$0xf]
        %v1985 = vld [vmem:[%s8 + $0x1b0] sm:$0xf]
        %v1986 = vld [vmem:[%s8 + $0x1b4] sm:$0xf]
        %v1987 = vld [vmem:[%s8 + $0x1b8] sm:$0xf]
        %v1988 = vld [vmem:[%s8 + $0x1bc] sm:$0xf]
        %v1989 = vld [vmem:[%s8 + $0x1c0] sm:$0xf]
        %v1990 = vld [vmem:[%s8 + $0x1c4] sm:$0xf]
        %v1991 = vld [vmem:[%s8 + $0x1c8] sm:$0xf]
        %v1992 = vld [vmem:[%s8 + $0x1cc] sm:$0xf]
        %v1993 = vld [vmem:[%s8 + $0x1d0] sm:$0xf]
        %v1994 = vld [vmem:[%s8 + $0x1d4] sm:$0xf]
        %v1995 = vld [vmem:[%s8 + $0x1d8] sm:$0xf]
        %v1996 = vld [vmem:[%s8 + $0x1dc] sm:$0xf]
        %v1997 = vld [vmem:[%s8 + $0x1e0] sm:$0xf]
        %v1998 = vld [vmem:[%s8 + $0x1e4] sm:$0xf]
        %v1999 = vld [vmem:[%s8 + $0x1e8] sm:$0xf]
        %v2000 = vld [vmem:[%s8 + $0x1ec] sm:$0xf]
        %v2001 = vld [vmem:[%s8 + $0x1f0] sm:$0xf]
        %v2002 = vld [vmem:[%s8 + $0x1f4] sm:$0xf]
        %v2003 = vld [vmem:[%s8 + $0x1f8] sm:$0xf]
        %v2004 = vld [vmem:[%s8 + $0x1fc] sm:$0xf]
        %v2005 = vld [vmem:[%s8 + $0x200] sm:$0xf]
        %v2006 = vld [vmem:[%s8 + $0x204] sm:$0xf]
        %v2007 = vld [vmem:[%s8 + $0x208] sm:$0xf]
        %v2008 = vld [vmem:[%s8 + $0x20c] sm:$0xf]
        %v2009 = vld [vmem:[%s8 + $0x210] sm:$0xf]
        %v2010 = vld [vmem:[%s8 + $0x214] sm:$0xf]
        %v2011 = vld [vmem:[%s8 + $0x218] sm:$0xf]
        %v2012 = vld [vmem:[%s8 + $0x21c] sm:$0xf]
        %v2013 = vld [vmem:[%s8 + $0x220] sm:$0xf]
        %v2014 = vld [vmem:[%s8 + $0x224] sm:$0xf]
        %v2015 = vld [vmem:[%s8 + $0x228] sm:$0xf]
        %v2016 = vld [vmem:[%s8 + $0x22c] sm:$0xf]
        %v2017 = vld [vmem:[%s8 + $0x230] sm:$0xf]
        %v2018 = vld [vmem:[%s8 + $0x234] sm:$0xf]
        %v2019 = vld [vmem:[%s8 + $0x238] sm:$0xf]
        %v2020 = vld [vmem:[%s8 + $0x23c] sm:$0xf]
        %v2021 = vld [vmem:[%s8 + $0x240] sm:$0xf]
        %v2022 = vld [vmem:[%s8 + $0x244] sm:$0xf]
        %v2023 = vld [vmem:[%s8 + $0x248] sm:$0xf]
        %v2024 = vld [vmem:[%s8 + $0x24c] sm:$0xf]
        %v2025 = vld [vmem:[%s8 + $0x250] sm:$0xf]
        %v2026 = vld [vmem:[%s8 + $0x254] sm:$0xf]
        %v2027 = vld [vmem:[%s8 + $0x258] sm:$0xf]
        %v2028 = vld [vmem:[%s8 + $0x25c] sm:$0xf]
        %v2029 = vld [vmem:[%s8 + $0x260] sm:$0xf]
        %v2030 = vld [vmem:[%s8 + $0x264] sm:$0xf]
        %v2031 = vld [vmem:[%s8 + $0x268] sm:$0xf]
        %v2032 = vld [vmem:[%s8 + $0x26c] sm:$0xf]
        %v2033 = vld [vmem:[%s8 + $0x270] sm:$0xf]
        %v2034 = vld [vmem:[%s8 + $0x274] sm:$0xf]
        %v2035 = vld [vmem:[%s8 + $0x278] sm:$0xf]
        %v2036 = vld [vmem:[%s8 + $0x27c] sm:$0xf]
        %v2037 = vld [vmem:[%s8 + $0x280] sm:$0xf]
        %v2038 = vld [vmem:[%s8 + $0x284] sm:$0xf]
        %v2039 = vld [vmem:[%s8 + $0x288] sm:$0xf]
        %v2040 = vld [vmem:[%s8 + $0x28c] sm:$0xf]
        %v2041 = vld [vmem:[%s8 + $0x290] sm:$0xf]
        %v2042 = vld [vmem:[%s8 + $0x294] sm:$0xf]
        %v2043 = vld [vmem:[%s8 + $0x298] sm:$0xf]
        %v2044 = vld [vmem:[%s8 + $0x29c] sm:$0xf]
        %v2045 = vld [vmem:[%s8 + $0x2a0] sm:$0xf]
        %v2046 = vld [vmem:[%s8 + $0x2a4] sm:$0xf]
        %v2047 = vld [vmem:[%s8 + $0x2a8] sm:$0xf]
        %v2048 = vld [vmem:[%s8 + $0x2ac] sm:$0xf]
        %v2049 = vld [vmem:[%s8 + $0x2b0] sm:$0xf]
        %v2050 = vld [vmem:[%s8 + $0x2b4] sm:$0xf]
        %v2051 = vld [vmem:[%s8 + $0x2b8] sm:$0xf]
        %v2052 = vld [vmem:[%s8 + $0x2bc] sm:$0xf]
        %v2053 = vld [vmem:[%s8 + $0x2c0] sm:$0xf]
        %v2054 = vld [vmem:[%s8 + $0x2c4] sm:$0xf]
        %v2055 = vld [vmem:[%s8 + $0x2c8] sm:$0xf]
        %v2056 = vld [vmem:[%s8 + $0x2cc] sm:$0xf]
        %v2057 = vld [vmem:[%s8 + $0x2d0] sm:$0xf]
        %v2058 = vld [vmem:[%s8 + $0x2d4] sm:$0xf]
        %v2059 = vld [vmem:[%s8 + $0x2d8] sm:$0xf]
        %v2060 = vld [vmem:[%s8 + $0x2dc] sm:$0xf]
        %v2061 = vld [vmem:[%s8 + $0x2e0] sm:$0xf]
        %v2062 = vld [vmem:[%s8 + $0x2e4] sm:$0xf]
        %v2063 = vld [vmem:[%s8 + $0x2e8] sm:$0xf]
        %v2064 = vld [vmem:[%s8 + $0x2ec] sm:$0xf]
        %v2065 = vld [vmem:[%s8 + $0x2f0] sm:$0xf]
        %v2066 = vld [vmem:[%s8 + $0x2f4] sm:$0xf]
        %v2067 = vld [vmem:[%s8 + $0x2f8] sm:$0xf]
        %v2068 = vld [vmem:[%s8 + $0x2fc] sm:$0xf]
        %v2069 = vld [vmem:[%s8 + $0x300] sm:$0xf]
        %v2070 = vld [vmem:[%s8 + $0x304] sm:$0xf]
        %v2071 = vld [vmem:[%s8 + $0x308] sm:$0xf]
        %v2072 = vld [vmem:[%s8 + $0x30c] sm:$0xf]
        %v2073 = vld [vmem:[%s8 + $0x310] sm:$0xf]
        %v2074 = vld [vmem:[%s8 + $0x314] sm:$0xf]
        %v2075 = vld [vmem:[%s8 + $0x318] sm:$0xf]
        %v2076 = vld [vmem:[%s8 + $0x31c] sm:$0xf]
        %v2077 = vld [vmem:[%s8 + $0x320] sm:$0xf]
        %v2078 = vld [vmem:[%s8 + $0x324] sm:$0xf]
        %v2079 = vld [vmem:[%s8 + $0x328] sm:$0xf]
        %v2080 = vld [vmem:[%s8 + $0x32c] sm:$0xf]
        %v2081 = vld [vmem:[%s8 + $0x330] sm:$0xf]
        %v2082 = vld [vmem:[%s8 + $0x334] sm:$0xf]
        %v2083 = vld [vmem:[%s8 + $0x338] sm:$0xf]
        %v2084 = vld [vmem:[%s8 + $0x33c] sm:$0xf]
        %v2085 = vld [vmem:[%s8 + $0x340] sm:$0xf]
        %v2086 = vld [vmem:[%s8 + $0x344] sm:$0xf]
        %v2087 = vld [vmem:[%s8 + $0x348] sm:$0xf]
        %v2088 = vld [vmem:[%s8 + $0x34c] sm:$0xf]
        %v2089 = vld [vmem:[%s8 + $0x350] sm:$0xf]
        %v2090 = vld [vmem:[%s8 + $0x354] sm:$0xf]
        %v2091 = vld [vmem:[%s8 + $0x358] sm:$0xf]
        %v2092 = vld [vmem:[%s8 + $0x35c] sm:$0xf]
        %v2093 = vld [vmem:[%s8 + $0x360] sm:$0xf]
        %v2094 = vld [vmem:[%s8 + $0x364] sm:$0xf]
        %v2095 = vld [vmem:[%s8 + $0x368] sm:$0xf]
        %v2096 = vld [vmem:[%s8 + $0x36c] sm:$0xf]
        %v2097 = vld [vmem:[%s8 + $0x370] sm:$0xf]
        %v2098 = vld [vmem:[%s8 + $0x374] sm:$0xf]
        %v2099 = vld [vmem:[%s8 + $0x378] sm:$0xf]
        %v2100 = vld [vmem:[%s8 + $0x37c] sm:$0xf]
        %v2101 = vld [vmem:[%s8 + $0x380] sm:$0xf]
        %v2102 = vld [vmem:[%s8 + $0x384] sm:$0xf]
        %v2103 = vld [vmem:[%s8 + $0x388] sm:$0xf]
        %v2104 = vld [vmem:[%s8 + $0x38c] sm:$0xf]
        %v2105 = vld [vmem:[%s8 + $0x390] sm:$0xf]
        %v2106 = vld [vmem:[%s8 + $0x394] sm:$0xf]
        %v2107 = vld [vmem:[%s8 + $0x398] sm:$0xf]
        %v2108 = vld [vmem:[%s8 + $0x39c] sm:$0xf]
        %v2109 = vld [vmem:[%s8 + $0x3a0] sm:$0xf]
        %v2110 = vld [vmem:[%s8 + $0x3a4] sm:$0xf]
        %v2111 = vld [vmem:[%s8 + $0x3a8] sm:$0xf]
        %v2112 = vld [vmem:[%s8 + $0x3ac] sm:$0xf]
        %v2113 = vld [vmem:[%s8 + $0x3b0] sm:$0xf]
        %v2114 = vld [vmem:[%s8 + $0x3b4] sm:$0xf]
        %v2115 = vld [vmem:[%s8 + $0x3b8] sm:$0xf]
        %v2116 = vld [vmem:[%s8 + $0x3bc] sm:$0xf]
        %v2117 = vld [vmem:[%s8 + $0x3c0] sm:$0xf]
        %v2118 = vld [vmem:[%s8 + $0x3c4] sm:$0xf]
        %v2119 = vld [vmem:[%s8 + $0x3c8] sm:$0xf]
        %v2120 = vld [vmem:[%s8 + $0x3cc] sm:$0xf]
        %v2121 = vld [vmem:[%s8 + $0x3d0] sm:$0xf]
        %v2122 = vld [vmem:[%s8 + $0x3d4] sm:$0xf]
        %v2123 = vld [vmem:[%s8 + $0x3d8] sm:$0xf]
        %v2124 = vld [vmem:[%s8 + $0x3dc] sm:$0xf]
        %v2125 = vld [vmem:[%s8 + $0x3e0] sm:$0xf]
        %v2126 = vld [vmem:[%s8 + $0x3e4] sm:$0xf]
        %v2127 = vld [vmem:[%s8 + $0x3e8] sm:$0xf]
        %v2128 = vld [vmem:[%s8 + $0x3ec] sm:$0xf]
        %v2129 = vld [vmem:[%s8 + $0x3f0] sm:$0xf]
        %v2130 = vld [vmem:[%s8 + $0x3f4] sm:$0xf]
        %v2131 = vld [vmem:[%s8 + $0x3f8] sm:$0xf]
        %v2132 = vld [vmem:[%s8 + $0x3fc] sm:$0xf]
        %v2389 = vunpack.c.l.b16 %v1877
        %v2390 = vunpack.c.l.b16 %v1878
        %v2391 = vunpack.c.l.b16 %v1879
        %v2392 = vunpack.c.l.b16 %v1880
        %v2393 = vunpack.c.l.b16 %v1881
        %v2394 = vunpack.c.l.b16 %v1882
        %v2395 = vunpack.c.l.b16 %v1883
        %v2396 = vunpack.c.l.b16 %v1884
        %v2397 = vunpack.c.l.b16 %v1885
        %v2398 = vunpack.c.l.b16 %v1886
        %v2399 = vunpack.c.l.b16 %v1887
        %v2400 = vunpack.c.l.b16 %v1888
        %v2401 = vunpack.c.l.b16 %v1889
        %v2402 = vunpack.c.l.b16 %v1890
        %v2403 = vunpack.c.l.b16 %v1891
        %v2404 = vunpack.c.l.b16 %v1892
        %v2405 = vunpack.c.l.b16 %v1893
        %v2406 = vunpack.c.l.b16 %v1894
        %v2407 = vunpack.c.l.b16 %v1895
        %v2408 = vunpack.c.l.b16 %v1896
        %v2409 = vunpack.c.l.b16 %v1897
        %v2410 = vunpack.c.l.b16 %v1898
        %v2411 = vunpack.c.l.b16 %v1899
        %v2412 = vunpack.c.l.b16 %v1900
        %v2413 = vunpack.c.l.b16 %v1901
        %v2414 = vunpack.c.l.b16 %v1902
        %v2415 = vunpack.c.l.b16 %v1903
        %v2416 = vunpack.c.l.b16 %v1904
        %v2417 = vunpack.c.l.b16 %v1905
        %v2418 = vunpack.c.l.b16 %v1906
        %v2419 = vunpack.c.l.b16 %v1907
        %v2420 = vunpack.c.l.b16 %v1908
        %v2421 = vunpack.c.l.b16 %v1909
        %v2422 = vunpack.c.l.b16 %v1910
        %v2423 = vunpack.c.l.b16 %v1911
        %v2424 = vunpack.c.l.b16 %v1912
        %v2425 = vunpack.c.l.b16 %v1913
        %v2426 = vunpack.c.l.b16 %v1914
        %v2427 = vunpack.c.l.b16 %v1915
        %v2428 = vunpack.c.l.b16 %v1916
        %v2429 = vunpack.c.l.b16 %v1917
        %v2430 = vunpack.c.l.b16 %v1918
        %v2431 = vunpack.c.l.b16 %v1919
        %v2432 = vunpack.c.l.b16 %v1920
        %v2433 = vunpack.c.l.b16 %v1921
        %v2434 = vunpack.c.l.b16 %v1922
        %v2435 = vunpack.c.l.b16 %v1923
        %v2436 = vunpack.c.l.b16 %v1924
        %v2437 = vunpack.c.l.b16 %v1925
        %v2438 = vunpack.c.l.b16 %v1926
        %v2439 = vunpack.c.l.b16 %v1927
        %v2440 = vunpack.c.l.b16 %v1928
        %v2441 = vunpack.c.l.b16 %v1929
        %v2442 = vunpack.c.l.b16 %v1930
        %v2443 = vunpack.c.l.b16 %v1931
        %v2444 = vunpack.c.l.b16 %v1932
        %v2445 = vunpack.c.l.b16 %v1933
        %v2446 = vunpack.c.l.b16 %v1934
        %v2447 = vunpack.c.l.b16 %v1935
        %v2448 = vunpack.c.l.b16 %v1936
        %v2449 = vunpack.c.l.b16 %v1937
        %v2450 = vunpack.c.l.b16 %v1938
        %v2451 = vunpack.c.l.b16 %v1939
        %v2452 = vunpack.c.l.b16 %v1940
        %v2453 = vunpack.c.l.b16 %v1941
        %v2454 = vunpack.c.l.b16 %v1942
        %v2455 = vunpack.c.l.b16 %v1943
        %v2456 = vunpack.c.l.b16 %v1944
        %v2457 = vunpack.c.l.b16 %v1945
        %v2458 = vunpack.c.l.b16 %v1946
        %v2459 = vunpack.c.l.b16 %v1947
        %v2460 = vunpack.c.l.b16 %v1948
        %v2461 = vunpack.c.l.b16 %v1949
        %v2462 = vunpack.c.l.b16 %v1950
        %v2463 = vunpack.c.l.b16 %v1951
        %v2464 = vunpack.c.l.b16 %v1952
        %v2465 = vunpack.c.l.b16 %v1953
        %v2466 = vunpack.c.l.b16 %v1954
        %v2467 = vunpack.c.l.b16 %v1955
        %v2468 = vunpack.c.l.b16 %v1956
        %v2469 = vunpack.c.l.b16 %v1957
        %v2470 = vunpack.c.l.b16 %v1958
        %v2471 = vunpack.c.l.b16 %v1959
        %v2472 = vunpack.c.l.b16 %v1960
        %v2473 = vunpack.c.l.b16 %v1961
        %v2474 = vunpack.c.l.b16 %v1962
        %v2475 = vunpack.c.l.b16 %v1963
        %v2476 = vunpack.c.l.b16 %v1964
        %v2477 = vunpack.c.l.b16 %v1965
        %v2478 = vunpack.c.l.b16 %v1966
        %v2479 = vunpack.c.l.b16 %v1967
        %v2480 = vunpack.c.l.b16 %v1968
        %v2481 = vunpack.c.l.b16 %v1969
        %v2482 = vunpack.c.l.b16 %v1970
        %v2483 = vunpack.c.l.b16 %v1971
        %v2484 = vunpack.c.l.b16 %v1972
        %v2485 = vunpack.c.l.b16 %v1973
        %v2486 = vunpack.c.l.b16 %v1974
        %v2487 = vunpack.c.l.b16 %v1975
        %v2488 = vunpack.c.l.b16 %v1976
        %v2489 = vunpack.c.l.b16 %v1977
        %v2490 = vunpack.c.l.b16 %v1978
        %v2491 = vunpack.c.l.b16 %v1979
        %v2492 = vunpack.c.l.b16 %v1980
        %v2493 = vunpack.c.l.b16 %v1981
        %v2494 = vunpack.c.l.b16 %v1982
        %v2495 = vunpack.c.l.b16 %v1983
        %v2496 = vunpack.c.l.b16 %v1984
        %v2497 = vunpack.c.l.b16 %v1985
        %v2498 = vunpack.c.l.b16 %v1986
        %v2499 = vunpack.c.l.b16 %v1987
        %v2500 = vunpack.c.l.b16 %v1988
        %v2501 = vunpack.c.l.b16 %v1989
        %v2502 = vunpack.c.l.b16 %v1990
        %v2503 = vunpack.c.l.b16 %v1991
        %v2504 = vunpack.c.l.b16 %v1992
        %v2505 = vunpack.c.l.b16 %v1993
        %v2506 = vunpack.c.l.b16 %v1994
        %v2507 = vunpack.c.l.b16 %v1995
        %v2508 = vunpack.c.l.b16 %v1996
        %v2509 = vunpack.c.l.b16 %v1997
        %v2510 = vunpack.c.l.b16 %v1998
        %v2511 = vunpack.c.l.b16 %v1999
        %v2512 = vunpack.c.l.b16 %v2000
        %v2513 = vunpack.c.l.b16 %v2001
        %v2514 = vunpack.c.l.b16 %v2002
        %v2515 = vunpack.c.l.b16 %v2003
        %v2516 = vunpack.c.l.b16 %v2004
        %v2517 = vunpack.c.l.b16 %v2005
        %v2518 = vunpack.c.l.b16 %v2006
        %v2519 = vunpack.c.l.b16 %v2007
        %v2520 = vunpack.c.l.b16 %v2008
        %v2521 = vunpack.c.l.b16 %v2009
        %v2522 = vunpack.c.l.b16 %v2010
        %v2523 = vunpack.c.l.b16 %v2011
        %v2524 = vunpack.c.l.b16 %v2012
        %v2525 = vunpack.c.l.b16 %v2013
        %v2526 = vunpack.c.l.b16 %v2014
        %v2527 = vunpack.c.l.b16 %v2015
        %v2528 = vunpack.c.l.b16 %v2016
        %v2529 = vunpack.c.l.b16 %v2017
        %v2530 = vunpack.c.l.b16 %v2018
        %v2531 = vunpack.c.l.b16 %v2019
        %v2532 = vunpack.c.l.b16 %v2020
        %v2533 = vunpack.c.l.b16 %v2021
        %v2534 = vunpack.c.l.b16 %v2022
        %v2535 = vunpack.c.l.b16 %v2023
        %v2536 = vunpack.c.l.b16 %v2024
        %v2537 = vunpack.c.l.b16 %v2025
        %v2538 = vunpack.c.l.b16 %v2026
        %v2539 = vunpack.c.l.b16 %v2027
        %v2540 = vunpack.c.l.b16 %v2028
        %v2541 = vunpack.c.l.b16 %v2029
        %v2542 = vunpack.c.l.b16 %v2030
        %v2543 = vunpack.c.l.b16 %v2031
        %v2544 = vunpack.c.l.b16 %v2032
        %v2545 = vunpack.c.l.b16 %v2033
        %v2546 = vunpack.c.l.b16 %v2034
        %v2547 = vunpack.c.l.b16 %v2035
        %v2548 = vunpack.c.l.b16 %v2036
        %v2549 = vunpack.c.l.b16 %v2037
        %v2550 = vunpack.c.l.b16 %v2038
        %v2551 = vunpack.c.l.b16 %v2039
        %v2552 = vunpack.c.l.b16 %v2040
        %v2553 = vunpack.c.l.b16 %v2041
        %v2554 = vunpack.c.l.b16 %v2042
        %v2555 = vunpack.c.l.b16 %v2043
        %v2556 = vunpack.c.l.b16 %v2044
        %v2557 = vunpack.c.l.b16 %v2045
        %v2558 = vunpack.c.l.b16 %v2046
        %v2559 = vunpack.c.l.b16 %v2047
        %v2560 = vunpack.c.l.b16 %v2048
        %v2561 = vunpack.c.l.b16 %v2049
        %v2562 = vunpack.c.l.b16 %v2050
        %v2563 = vunpack.c.l.b16 %v2051
        %v2564 = vunpack.c.l.b16 %v2052
        %v2565 = vunpack.c.l.b16 %v2053
        %v2566 = vunpack.c.l.b16 %v2054
        %v2567 = vunpack.c.l.b16 %v2055
        %v2568 = vunpack.c.l.b16 %v2056
        %v2569 = vunpack.c.l.b16 %v2057
        %v2570 = vunpack.c.l.b16 %v2058
        %v2571 = vunpack.c.l.b16 %v2059
        %v2572 = vunpack.c.l.b16 %v2060
        %v2573 = vunpack.c.l.b16 %v2061
        %v2574 = vunpack.c.l.b16 %v2062
        %v2575 = vunpack.c.l.b16 %v2063
        %v2576 = vunpack.c.l.b16 %v2064
        %v2577 = vunpack.c.l.b16 %v2065
        %v2578 = vunpack.c.l.b16 %v2066
        %v2579 = vunpack.c.l.b16 %v2067
        %v2580 = vunpack.c.l.b16 %v2068
        %v2581 = vunpack.c.l.b16 %v2069
        %v2582 = vunpack.c.l.b16 %v2070
        %v2583 = vunpack.c.l.b16 %v2071
        %v2584 = vunpack.c.l.b16 %v2072
        %v2585 = vunpack.c.l.b16 %v2073
        %v2586 = vunpack.c.l.b16 %v2074
        %v2587 = vunpack.c.l.b16 %v2075
        %v2588 = vunpack.c.l.b16 %v2076
        %v2589 = vunpack.c.l.b16 %v2077
        %v2590 = vunpack.c.l.b16 %v2078
        %v2591 = vunpack.c.l.b16 %v2079
        %v2592 = vunpack.c.l.b16 %v2080
        %v2593 = vunpack.c.l.b16 %v2081
        %v2594 = vunpack.c.l.b16 %v2082
        %v2595 = vunpack.c.l.b16 %v2083
        %v2596 = vunpack.c.l.b16 %v2084
        %v2597 = vunpack.c.l.b16 %v2085
        %v2598 = vunpack.c.l.b16 %v2086
        %v2599 = vunpack.c.l.b16 %v2087
        %v2600 = vunpack.c.l.b16 %v2088
        %v2601 = vunpack.c.l.b16 %v2089
        %v2602 = vunpack.c.l.b16 %v2090
        %v2603 = vunpack.c.l.b16 %v2091
        %v2604 = vunpack.c.l.b16 %v2092
        %v2605 = vunpack.c.l.b16 %v2093
        %v2606 = vunpack.c.l.b16 %v2094
        %v2607 = vunpack.c.l.b16 %v2095
        %v2608 = vunpack.c.l.b16 %v2096
        %v2609 = vunpack.c.l.b16 %v2097
        %v2610 = vunpack.c.l.b16 %v2098
        %v2611 = vunpack.c.l.b16 %v2099
        %v2612 = vunpack.c.l.b16 %v2100
        %v2613 = vunpack.c.l.b16 %v2101
        %v2614 = vunpack.c.l.b16 %v2102
        %v2615 = vunpack.c.l.b16 %v2103
        %v2616 = vunpack.c.l.b16 %v2104
        %v2617 = vunpack.c.l.b16 %v2105
        %v2618 = vunpack.c.l.b16 %v2106
        %v2619 = vunpack.c.l.b16 %v2107
        %v2620 = vunpack.c.l.b16 %v2108
        %v2621 = vunpack.c.l.b16 %v2109
        %v2622 = vunpack.c.l.b16 %v2110
        %v2623 = vunpack.c.l.b16 %v2111
        %v2624 = vunpack.c.l.b16 %v2112
        %v2625 = vunpack.c.l.b16 %v2113
        %v2626 = vunpack.c.l.b16 %v2114
        %v2627 = vunpack.c.l.b16 %v2115
        %v2628 = vunpack.c.l.b16 %v2116
        %v2629 = vunpack.c.l.b16 %v2117
        %v2630 = vunpack.c.l.b16 %v2118
        %v2631 = vunpack.c.l.b16 %v2119
        %v2632 = vunpack.c.l.b16 %v2120
        %v2633 = vunpack.c.l.b16 %v2121
        %v2634 = vunpack.c.l.b16 %v2122
        %v2635 = vunpack.c.l.b16 %v2123
        %v2636 = vunpack.c.l.b16 %v2124
        %v2637 = vunpack.c.l.b16 %v2125
        %v2638 = vunpack.c.l.b16 %v2126
        %v2639 = vunpack.c.l.b16 %v2127
        %v2640 = vunpack.c.l.b16 %v2128
        %v2641 = vunpack.c.l.b16 %v2129
        %v2642 = vunpack.c.l.b16 %v2130
        %v2643 = vunpack.c.l.b16 %v2131
        %v2644 = vunpack.c.l.b16 %v2132
        %v2645 = vpack.c.b16 %v2390, %v2389
        %v2646 = vpack.c.b16 %v2392, %v2391
        %v2647 = vpack.c.b16 %v2394, %v2393
        %v2648 = vpack.c.b16 %v2396, %v2395
        %v2649 = vpack.c.b16 %v2398, %v2397
        %v2650 = vpack.c.b16 %v2400, %v2399
        %v2651 = vpack.c.b16 %v2402, %v2401
        %v2652 = vpack.c.b16 %v2404, %v2403
        %v2653 = vpack.c.b16 %v2406, %v2405
        %v2654 = vpack.c.b16 %v2408, %v2407
        %v2655 = vpack.c.b16 %v2410, %v2409
        %v2656 = vpack.c.b16 %v2412, %v2411
        %v2657 = vpack.c.b16 %v2414, %v2413
        %v2658 = vpack.c.b16 %v2416, %v2415
        %v2659 = vpack.c.b16 %v2418, %v2417
        %v2660 = vpack.c.b16 %v2420, %v2419
        %v2661 = vpack.c.b16 %v2422, %v2421
        %v2662 = vpack.c.b16 %v2424, %v2423
        %v2663 = vpack.c.b16 %v2426, %v2425
        %v2664 = vpack.c.b16 %v2428, %v2427
        %v2665 = vpack.c.b16 %v2430, %v2429
        %v2666 = vpack.c.b16 %v2432, %v2431
        %v2667 = vpack.c.b16 %v2434, %v2433
        %v2668 = vpack.c.b16 %v2436, %v2435
        %v2669 = vpack.c.b16 %v2438, %v2437
        %v2670 = vpack.c.b16 %v2440, %v2439
        %v2671 = vpack.c.b16 %v2442, %v2441
        %v2672 = vpack.c.b16 %v2444, %v2443
        %v2673 = vpack.c.b16 %v2446, %v2445
        %v2674 = vpack.c.b16 %v2448, %v2447
        %v2675 = vpack.c.b16 %v2450, %v2449
        %v2676 = vpack.c.b16 %v2452, %v2451
        %v2677 = vpack.c.b16 %v2454, %v2453
        %v2678 = vpack.c.b16 %v2456, %v2455
        %v2679 = vpack.c.b16 %v2458, %v2457
        %v2680 = vpack.c.b16 %v2460, %v2459
        %v2681 = vpack.c.b16 %v2462, %v2461
        %v2682 = vpack.c.b16 %v2464, %v2463
        %v2683 = vpack.c.b16 %v2466, %v2465
        %v2684 = vpack.c.b16 %v2468, %v2467
        %v2685 = vpack.c.b16 %v2470, %v2469
        %v2686 = vpack.c.b16 %v2472, %v2471
        %v2687 = vpack.c.b16 %v2474, %v2473
        %v2688 = vpack.c.b16 %v2476, %v2475
        %v2689 = vpack.c.b16 %v2478, %v2477
        %v2690 = vpack.c.b16 %v2480, %v2479
        %v2691 = vpack.c.b16 %v2482, %v2481
        %v2692 = vpack.c.b16 %v2484, %v2483
        %v2693 = vpack.c.b16 %v2486, %v2485
        %v2694 = vpack.c.b16 %v2488, %v2487
        %v2695 = vpack.c.b16 %v2490, %v2489
        %v2696 = vpack.c.b16 %v2492, %v2491
        %v2697 = vpack.c.b16 %v2494, %v2493
        %v2698 = vpack.c.b16 %v2496, %v2495
        %v2699 = vpack.c.b16 %v2498, %v2497
        %v2700 = vpack.c.b16 %v2500, %v2499
        %v2701 = vpack.c.b16 %v2502, %v2501
        %v2702 = vpack.c.b16 %v2504, %v2503
        %v2703 = vpack.c.b16 %v2506, %v2505
        %v2704 = vpack.c.b16 %v2508, %v2507
        %v2705 = vpack.c.b16 %v2510, %v2509
        %v2706 = vpack.c.b16 %v2512, %v2511
        %v2707 = vpack.c.b16 %v2514, %v2513
        %v2708 = vpack.c.b16 %v2516, %v2515
        %v2709 = vpack.c.b16 %v2518, %v2517
        %v2710 = vpack.c.b16 %v2520, %v2519
        %v2711 = vpack.c.b16 %v2522, %v2521
        %v2712 = vpack.c.b16 %v2524, %v2523
        %v2713 = vpack.c.b16 %v2526, %v2525
        %v2714 = vpack.c.b16 %v2528, %v2527
        %v2715 = vpack.c.b16 %v2530, %v2529
        %v2716 = vpack.c.b16 %v2532, %v2531
        %v2717 = vpack.c.b16 %v2534, %v2533
        %v2718 = vpack.c.b16 %v2536, %v2535
        %v2719 = vpack.c.b16 %v2538, %v2537
        %v2720 = vpack.c.b16 %v2540, %v2539
        %v2721 = vpack.c.b16 %v2542, %v2541
        %v2722 = vpack.c.b16 %v2544, %v2543
        %v2723 = vpack.c.b16 %v2546, %v2545
        %v2724 = vpack.c.b16 %v2548, %v2547
        %v2725 = vpack.c.b16 %v2550, %v2549
        %v2726 = vpack.c.b16 %v2552, %v2551
        %v2727 = vpack.c.b16 %v2554, %v2553
        %v2728 = vpack.c.b16 %v2556, %v2555
        %v2729 = vpack.c.b16 %v2558, %v2557
        %v2730 = vpack.c.b16 %v2560, %v2559
        %v2731 = vpack.c.b16 %v2562, %v2561
        %v2732 = vpack.c.b16 %v2564, %v2563
        %v2733 = vpack.c.b16 %v2566, %v2565
        %v2734 = vpack.c.b16 %v2568, %v2567
        %v2735 = vpack.c.b16 %v2570, %v2569
        %v2736 = vpack.c.b16 %v2572, %v2571
        %v2737 = vpack.c.b16 %v2574, %v2573
        %v2738 = vpack.c.b16 %v2576, %v2575
        %v2739 = vpack.c.b16 %v2578, %v2577
        %v2740 = vpack.c.b16 %v2580, %v2579
        %v2741 = vpack.c.b16 %v2582, %v2581
        %v2742 = vpack.c.b16 %v2584, %v2583
        %v2743 = vpack.c.b16 %v2586, %v2585
        %v2744 = vpack.c.b16 %v2588, %v2587
        %v2745 = vpack.c.b16 %v2590, %v2589
        %v2746 = vpack.c.b16 %v2592, %v2591
        %v2747 = vpack.c.b16 %v2594, %v2593
        %v2748 = vpack.c.b16 %v2596, %v2595
        %v2749 = vpack.c.b16 %v2598, %v2597
        %v2750 = vpack.c.b16 %v2600, %v2599
        %v2751 = vpack.c.b16 %v2602, %v2601
        %v2752 = vpack.c.b16 %v2604, %v2603
        %v2753 = vpack.c.b16 %v2606, %v2605
        %v2754 = vpack.c.b16 %v2608, %v2607
        %v2755 = vpack.c.b16 %v2610, %v2609
        %v2756 = vpack.c.b16 %v2612, %v2611
        %v2757 = vpack.c.b16 %v2614, %v2613
        %v2758 = vpack.c.b16 %v2616, %v2615
        %v2759 = vpack.c.b16 %v2618, %v2617
        %v2760 = vpack.c.b16 %v2620, %v2619
        %v2761 = vpack.c.b16 %v2622, %v2621
        %v2762 = vpack.c.b16 %v2624, %v2623
        %v2763 = vpack.c.b16 %v2626, %v2625
        %v2764 = vpack.c.b16 %v2628, %v2627
        %v2765 = vpack.c.b16 %v2630, %v2629
        %v2766 = vpack.c.b16 %v2632, %v2631
        %v2767 = vpack.c.b16 %v2634, %v2633
        %v2768 = vpack.c.b16 %v2636, %v2635
        %v2769 = vpack.c.b16 %v2638, %v2637
        %v2770 = vpack.c.b16 %v2640, %v2639
        %v2771 = vpack.c.b16 %v2642, %v2641
        %v2772 = vpack.c.b16 %v2644, %v2643
        %2901 = vmatpush.bf16.msra.mxu0 %v2652
        %2902 = vmatpush.bf16.msra.mxu0 %v2651
        %2903 = vmatpush.bf16.msra.mxu0 %v2650
        %2904 = vmatpush.bf16.msra.mxu0 %v2649
        %2905 = vmatpush.bf16.msra.mxu0 %v2648
        %2906 = vmatpush.bf16.msra.mxu0 %v2647
        %2907 = vmatpush.bf16.msra.mxu0 %v2646
        %2908 = vmatpush.bf16.msra.mxu0 %v2645
        %2909 = vmatmul.bf16.gmra.mxu0 %v1861
        %v2910 = vpop.f32.mrf.mxu0
        %v2911 = vadd.f32 0.0, %v2910
        %v2912 = vpop.f32.mrf.mxu0
        %2913 = vdwg.mxu0
        %2914 = vmatpush.bf16.msra.mxu0 %v2660
        %2915 = vmatpush.bf16.msra.mxu0 %v2659
        %2916 = vmatpush.bf16.msra.mxu0 %v2658
        %2917 = vmatpush.bf16.msra.mxu0 %v2657
        %2918 = vmatpush.bf16.msra.mxu0 %v2656
        %2919 = vmatpush.bf16.msra.mxu0 %v2655
        %2920 = vmatpush.bf16.msra.mxu0 %v2654
        %2921 = vmatpush.bf16.msra.mxu0 %v2653
        %2922 = vmatmul.bf16.gmra.mxu0 %v1862
        %v2923 = vpop.f32.mrf.mxu0
        %v2924 = vadd.f32 %v2911, %v2923
        %v2925 = vpop.f32.mrf.mxu0
        %2926 = vdwg.mxu0
        %2927 = vmatpush.bf16.msra.mxu0 %v2668
        %2928 = vmatpush.bf16.msra.mxu0 %v2667
        %2929 = vmatpush.bf16.msra.mxu0 %v2666
        %2930 = vmatpush.bf16.msra.mxu0 %v2665
        %2931 = vmatpush.bf16.msra.mxu0 %v2664
        %2932 = vmatpush.bf16.msra.mxu0 %v2663
        %2933 = vmatpush.bf16.msra.mxu0 %v2662
        %2934 = vmatpush.bf16.msra.mxu0 %v2661
        %2935 = vmatmul.bf16.gmra.mxu0 %v1863
        %v2936 = vpop.f32.mrf.mxu0
        %v2937 = vadd.f32 %v2924, %v2936
        %v2938 = vpop.f32.mrf.mxu0
        %2939 = vdwg.mxu0
        %2940 = vmatpush.bf16.msra.mxu0 %v2676
        %2941 = vmatpush.bf16.msra.mxu0 %v2675
        %2942 = vmatpush.bf16.msra.mxu0 %v2674
        %2943 = vmatpush.bf16.msra.mxu0 %v2673
        %2944 = vmatpush.bf16.msra.mxu0 %v2672
        %2945 = vmatpush.bf16.msra.mxu0 %v2671
        %2946 = vmatpush.bf16.msra.mxu0 %v2670
        %2947 = vmatpush.bf16.msra.mxu0 %v2669
        %2948 = vmatmul.bf16.gmra.mxu0 %v1864
        %v2949 = vpop.f32.mrf.mxu0
        %v2950 = vadd.f32 %v2937, %v2949
        %v2951 = vpop.f32.mrf.mxu0
        %2952 = vdwg.mxu0
        %2953 = vmatpush.bf16.msra.mxu0 %v2684
        %2954 = vmatpush.bf16.msra.mxu0 %v2683
        %2955 = vmatpush.bf16.msra.mxu0 %v2682
        %2956 = vmatpush.bf16.msra.mxu0 %v2681
        %2957 = vmatpush.bf16.msra.mxu0 %v2680
        %2958 = vmatpush.bf16.msra.mxu0 %v2679
        %2959 = vmatpush.bf16.msra.mxu0 %v2678
        %2960 = vmatpush.bf16.msra.mxu0 %v2677
        %2961 = vmatmul.bf16.gmra.mxu0 %v1865
        %v2962 = vpop.f32.mrf.mxu0
        %v2963 = vadd.f32 %v2950, %v2962
        %v2964 = vpop.f32.mrf.mxu0
        %2965 = vdwg.mxu0
        %2966 = vmatpush.bf16.msra.mxu0 %v2692
        %2967 = vmatpush.bf16.msra.mxu0 %v2691
        %2968 = vmatpush.bf16.msra.mxu0 %v2690
        %2969 = vmatpush.bf16.msra.mxu0 %v2689
        %2970 = vmatpush.bf16.msra.mxu0 %v2688
        %2971 = vmatpush.bf16.msra.mxu0 %v2687
        %2972 = vmatpush.bf16.msra.mxu0 %v2686
        %2973 = vmatpush.bf16.msra.mxu0 %v2685
        %2974 = vmatmul.bf16.gmra.mxu0 %v1866
        %v2975 = vpop.f32.mrf.mxu0
        %v2976 = vadd.f32 %v2963, %v2975
        %v2977 = vpop.f32.mrf.mxu0
        %2978 = vdwg.mxu0
        %2979 = vmatpush.bf16.msra.mxu0 %v2700
        %2980 = vmatpush.bf16.msra.mxu0 %v2699
        %2981 = vmatpush.bf16.msra.mxu0 %v2698
        %2982 = vmatpush.bf16.msra.mxu0 %v2697
        %2983 = vmatpush.bf16.msra.mxu0 %v2696
        %2984 = vmatpush.bf16.msra.mxu0 %v2695
        %2985 = vmatpush.bf16.msra.mxu0 %v2694
        %2986 = vmatpush.bf16.msra.mxu0 %v2693
        %2987 = vmatmul.bf16.gmra.mxu0 %v1867
        %v2988 = vpop.f32.mrf.mxu0
        %v2989 = vadd.f32 %v2976, %v2988
        %v2990 = vpop.f32.mrf.mxu0
        %2991 = vdwg.mxu0
        %2992 = vmatpush.bf16.msra.mxu0 %v2708
        %2993 = vmatpush.bf16.msra.mxu0 %v2707
        %2994 = vmatpush.bf16.msra.mxu0 %v2706
        %2995 = vmatpush.bf16.msra.mxu0 %v2705
        %2996 = vmatpush.bf16.msra.mxu0 %v2704
        %2997 = vmatpush.bf16.msra.mxu0 %v2703
        %2998 = vmatpush.bf16.msra.mxu0 %v2702
        %2999 = vmatpush.bf16.msra.mxu0 %v2701
        %3000 = vmatmul.bf16.gmra.mxu0 %v1868
        %v3001 = vpop.f32.mrf.mxu0
        %v3002 = vadd.f32 %v2989, %v3001
        %v3003 = vpop.f32.mrf.mxu0
        %3004 = vdwg.mxu0
        %3005 = vmatpush.bf16.msra.mxu0 %v2716
        %3006 = vmatpush.bf16.msra.mxu0 %v2715
        %3007 = vmatpush.bf16.msra.mxu0 %v2714
        %3008 = vmatpush.bf16.msra.mxu0 %v2713
        %3009 = vmatpush.bf16.msra.mxu0 %v2712
        %3010 = vmatpush.bf16.msra.mxu0 %v2711
        %3011 = vmatpush.bf16.msra.mxu0 %v2710
        %3012 = vmatpush.bf16.msra.mxu0 %v2709
        %3013 = vmatmul.bf16.gmra.mxu0 %v1869
        %v3014 = vpop.f32.mrf.mxu0
        %v3015 = vadd.f32 %v3002, %v3014
        %v3016 = vpop.f32.mrf.mxu0
        %3017 = vdwg.mxu0
        %3018 = vmatpush.bf16.msra.mxu0 %v2724
        %3019 = vmatpush.bf16.msra.mxu0 %v2723
        %3020 = vmatpush.bf16.msra.mxu0 %v2722
        %3021 = vmatpush.bf16.msra.mxu0 %v2721
        %3022 = vmatpush.bf16.msra.mxu0 %v2720
        %3023 = vmatpush.bf16.msra.mxu0 %v2719
        %3024 = vmatpush.bf16.msra.mxu0 %v2718
        %3025 = vmatpush.bf16.msra.mxu0 %v2717
        %3026 = vmatmul.bf16.gmra.mxu0 %v1870
        %v3027 = vpop.f32.mrf.mxu0
        %v3028 = vadd.f32 %v3015, %v3027
        %v3029 = vpop.f32.mrf.mxu0
        %3030 = vdwg.mxu0
        %3031 = vmatpush.bf16.msra.mxu0 %v2732
        %3032 = vmatpush.bf16.msra.mxu0 %v2731
        %3033 = vmatpush.bf16.msra.mxu0 %v2730
        %3034 = vmatpush.bf16.msra.mxu0 %v2729
        %3035 = vmatpush.bf16.msra.mxu0 %v2728
        %3036 = vmatpush.bf16.msra.mxu0 %v2727
        %3037 = vmatpush.bf16.msra.mxu0 %v2726
        %3038 = vmatpush.bf16.msra.mxu0 %v2725
        %3039 = vmatmul.bf16.gmra.mxu0 %v1871
        %v3040 = vpop.f32.mrf.mxu0
        %v3041 = vadd.f32 %v3028, %v3040
        %v3042 = vpop.f32.mrf.mxu0
        %3043 = vdwg.mxu0
        %3044 = vmatpush.bf16.msra.mxu0 %v2740
        %3045 = vmatpush.bf16.msra.mxu0 %v2739
        %3046 = vmatpush.bf16.msra.mxu0 %v2738
        %3047 = vmatpush.bf16.msra.mxu0 %v2737
        %3048 = vmatpush.bf16.msra.mxu0 %v2736
        %3049 = vmatpush.bf16.msra.mxu0 %v2735
        %3050 = vmatpush.bf16.msra.mxu0 %v2734
        %3051 = vmatpush.bf16.msra.mxu0 %v2733
        %3052 = vmatmul.bf16.gmra.mxu0 %v1872
        %v3053 = vpop.f32.mrf.mxu0
        %v3054 = vadd.f32 %v3041, %v3053
        %v3055 = vpop.f32.mrf.mxu0
        %3056 = vdwg.mxu0
        %3057 = vmatpush.bf16.msra.mxu0 %v2748
        %3058 = vmatpush.bf16.msra.mxu0 %v2747
        %3059 = vmatpush.bf16.msra.mxu0 %v2746
        %3060 = vmatpush.bf16.msra.mxu0 %v2745
        %3061 = vmatpush.bf16.msra.mxu0 %v2744
        %3062 = vmatpush.bf16.msra.mxu0 %v2743
        %3063 = vmatpush.bf16.msra.mxu0 %v2742
        %3064 = vmatpush.bf16.msra.mxu0 %v2741
        %3065 = vmatmul.bf16.gmra.mxu0 %v1873
        %v3066 = vpop.f32.mrf.mxu0
        %v3067 = vadd.f32 %v3054, %v3066
        %v3068 = vpop.f32.mrf.mxu0
        %3069 = vdwg.mxu0
        %3070 = vmatpush.bf16.msra.mxu0 %v2756
        %3071 = vmatpush.bf16.msra.mxu0 %v2755
        %3072 = vmatpush.bf16.msra.mxu0 %v2754
        %3073 = vmatpush.bf16.msra.mxu0 %v2753
        %3074 = vmatpush.bf16.msra.mxu0 %v2752
        %3075 = vmatpush.bf16.msra.mxu0 %v2751
        %3076 = vmatpush.bf16.msra.mxu0 %v2750
        %3077 = vmatpush.bf16.msra.mxu0 %v2749
        %3078 = vmatmul.bf16.gmra.mxu0 %v1874
        %v3079 = vpop.f32.mrf.mxu0
        %v3080 = vadd.f32 %v3067, %v3079
        %v3081 = vpop.f32.mrf.mxu0
        %3082 = vdwg.mxu0
        %3083 = vmatpush.bf16.msra.mxu0 %v2764
        %3084 = vmatpush.bf16.msra.mxu0 %v2763
        %3085 = vmatpush.bf16.msra.mxu0 %v2762
        %3086 = vmatpush.bf16.msra.mxu0 %v2761
        %3087 = vmatpush.bf16.msra.mxu0 %v2760
        %3088 = vmatpush.bf16.msra.mxu0 %v2759
        %3089 = vmatpush.bf16.msra.mxu0 %v2758
        %3090 = vmatpush.bf16.msra.mxu0 %v2757
        %3091 = vmatmul.bf16.gmra.mxu0 %v1875
        %v3092 = vpop.f32.mrf.mxu0
        %v3093 = vadd.f32 %v3080, %v3092
        %v3094 = vpop.f32.mrf.mxu0
        %3095 = vdwg.mxu0
        %3096 = vmatpush.bf16.msra.mxu0 %v2772
        %3097 = vmatpush.bf16.msra.mxu0 %v2771
        %3098 = vmatpush.bf16.msra.mxu0 %v2770
        %3099 = vmatpush.bf16.msra.mxu0 %v2769
        %3100 = vmatpush.bf16.msra.mxu0 %v2768
        %3101 = vmatpush.bf16.msra.mxu0 %v2767
        %3102 = vmatpush.bf16.msra.mxu0 %v2766
        %3103 = vmatpush.bf16.msra.mxu0 %v2765
        %3104 = vmatmul.bf16.gmra.mxu0 %v1876
        %v3105 = vpop.f32.mrf.mxu0
        %v3106 = vadd.f32 %v3093, %v3105
        %v3107 = vpop.f32.mrf.mxu0
        %3108 = vdwg.mxu0
        %v3109 = vld [vmem:[%s7] sm:$0xff]
        %3111 = vset.pattern.permute.xlu0 0
        %3112 = vperm.xlu0 %3111, %v3109
        %v3113 = vpop.permute.xlu0 %3112
        %v3115 = vperm.slane %v3106, 0
        %v3116 = vmul.f32 %v3113, %v3115
        %v3117 = vld [vmem:[%s9] sm:$0x1]
        %v3119 = vperm.slane %v3117, 0
        %v3121 = vadd.f32 %v3116, %v3119
        %v3122 = vmax.f32 %v3121, 0.0
        %v3123 = vld [vmem:[%s684] sm:$0x3]
        %v3124 = vld [vmem:[%s11] sm:$0x77]
        %v3125 = vld [vmem:[%s11 + $0x8] sm:$0x77]
        %3127 = vset.pattern.permute.xlu0 0
        %3128 = vperm.xlu0 %3127, %v3123
        %v3129 = vpop.permute.xlu0 %3128
        %v3133 = vperm.slane %v3124, 0
        %v3134 = vperm.slane %v3124, 4
        %v3135 = vperm.slane %v3125, 0
        %v3136 = vperm.slane %v3125, 4
        %v3141 = vperm.slane %v3133, 0
        %v3142 = vperm.slane %v3134, 0
        %v3143 = vperm.slane %v3135, 0
        %v3144 = vperm.slane %v3136, 0
        %v3145 = vmul.f32 %v3129, %v3141
        %v3146 = vmul.f32 %v3129, %v3142
        %v3147 = vmul.f32 %v3129, %v3143
        %v3148 = vmul.f32 %v3129, %v3144
        %3149 = vset.pattern.permute.xlu0 1
        %3150 = vperm.xlu0 %3149, %v3123
        %v3151 = vpop.permute.xlu0 %3150
        %v3153 = vperm.slane %v3124, 1
        %v3154 = vperm.slane %v3124, 5
        %v3155 = vperm.slane %v3125, 1
        %v3156 = vperm.slane %v3125, 5
        %v3161 = vperm.slane %v3153, 1
        %v3162 = vperm.slane %v3154, 1
        %v3163 = vperm.slane %v3155, 1
        %v3164 = vperm.slane %v3156, 1
        %v3165 = vmul.f32 %v3151, %v3161
        %v3166 = vmul.f32 %v3151, %v3162
        %v3167 = vmul.f32 %v3151, %v3163
        %v3168 = vmul.f32 %v3151, %v3164
        %v3169 = vadd.f32 %v3145, %v3165
        %v3170 = vadd.f32 %v3146, %v3166
        %v3171 = vadd.f32 %v3147, %v3167
        %v3172 = vadd.f32 %v3148, %v3168
        %3173 = vset.pattern.permute.xlu0 2
        %3174 = vperm.xlu0 %3173, %v3123
        %v3175 = vpop.permute.xlu0 %3174
        %v3177 = vperm.slane %v3124, 2
        %v3178 = vperm.slane %v3124, 6
        %v3179 = vperm.slane %v3125, 2
        %v3180 = vperm.slane %v3125, 6
        %v3185 = vperm.slane %v3177, 2
        %v3186 = vperm.slane %v3178, 2
        %v3187 = vperm.slane %v3179, 2
        %v3188 = vperm.slane %v3180, 2
        %v3189 = vmul.f32 %v3175, %v3185
        %v3190 = vmul.f32 %v3175, %v3186
        %v3191 = vmul.f32 %v3175, %v3187
        %v3192 = vmul.f32 %v3175, %v3188
        %v3193 = vadd.f32 %v3169, %v3189
        %v3194 = vadd.f32 %v3170, %v3190
        %v3195 = vadd.f32 %v3171, %v3191
        %v3196 = vadd.f32 %v3172, %v3192
        %v3197 = vmax.f32 %v3193, 0.0
        %v3198 = vmax.f32 %v3194, 0.0
        %v3199 = vmax.f32 %v3195, 0.0
        %v3200 = vmax.f32 %v3196, 0.0
        %v3201 = vpack.c.bf16 %v3197, %v3197
        %v3202 = vpack.c.bf16 %v3198, %v3198
        %v3203 = vpack.c.bf16 %v3199, %v3199
        %v3204 = vpack.c.bf16 %v3200, %v3200
        %v3205 = vld [vmem:[%s13] sm:$0xf]
        %v3206 = vld [vmem:[%s13 + $0x4] sm:$0xf]
        %v3207 = vld [vmem:[%s13 + $0x8] sm:$0xf]
        %v3208 = vld [vmem:[%s13 + $0xc] sm:$0xf]
        %v3209 = vld [vmem:[%s13 + $0x10] sm:$0xf]
        %v3210 = vld [vmem:[%s13 + $0x14] sm:$0xf]
        %v3211 = vld [vmem:[%s13 + $0x18] sm:$0xf]
        %v3212 = vld [vmem:[%s13 + $0x1c] sm:$0xf]
        %v3213 = vld [vmem:[%s13 + $0x20] sm:$0xf]
        %v3214 = vld [vmem:[%s13 + $0x24] sm:$0xf]
        %v3215 = vld [vmem:[%s13 + $0x28] sm:$0xf]
        %v3216 = vld [vmem:[%s13 + $0x2c] sm:$0xf]
        %v3217 = vld [vmem:[%s13 + $0x30] sm:$0xf]
        %v3218 = vld [vmem:[%s13 + $0x34] sm:$0xf]
        %v3219 = vld [vmem:[%s13 + $0x38] sm:$0xf]
        %v3220 = vld [vmem:[%s13 + $0x3c] sm:$0xf]
        %v3221 = vld [vmem:[%s13 + $0x40] sm:$0xf]
        %v3222 = vld [vmem:[%s13 + $0x44] sm:$0xf]
        %v3223 = vld [vmem:[%s13 + $0x48] sm:$0xf]
        %v3224 = vld [vmem:[%s13 + $0x4c] sm:$0xf]
        %v3225 = vld [vmem:[%s13 + $0x50] sm:$0xf]
        %v3226 = vld [vmem:[%s13 + $0x54] sm:$0xf]
        %v3227 = vld [vmem:[%s13 + $0x58] sm:$0xf]
        %v3228 = vld [vmem:[%s13 + $0x5c] sm:$0xf]
        %v3229 = vld [vmem:[%s13 + $0x60] sm:$0xf]
        %v3230 = vld [vmem:[%s13 + $0x64] sm:$0xf]
        %v3231 = vld [vmem:[%s13 + $0x68] sm:$0xf]
        %v3232 = vld [vmem:[%s13 + $0x6c] sm:$0xf]
        %v3233 = vld [vmem:[%s13 + $0x70] sm:$0xf]
        %v3234 = vld [vmem:[%s13 + $0x74] sm:$0xf]
        %v3235 = vld [vmem:[%s13 + $0x78] sm:$0xf]
        %v3236 = vld [vmem:[%s13 + $0x7c] sm:$0xf]
        %v3237 = vld [vmem:[%s13 + $0x80] sm:$0xf]
        %v3238 = vld [vmem:[%s13 + $0x84] sm:$0xf]
        %v3239 = vld [vmem:[%s13 + $0x88] sm:$0xf]
        %v3240 = vld [vmem:[%s13 + $0x8c] sm:$0xf]
        %v3241 = vld [vmem:[%s13 + $0x90] sm:$0xf]
        %v3242 = vld [vmem:[%s13 + $0x94] sm:$0xf]
        %v3243 = vld [vmem:[%s13 + $0x98] sm:$0xf]
        %v3244 = vld [vmem:[%s13 + $0x9c] sm:$0xf]
        %v3245 = vld [vmem:[%s13 + $0xa0] sm:$0xf]
        %v3246 = vld [vmem:[%s13 + $0xa4] sm:$0xf]
        %v3247 = vld [vmem:[%s13 + $0xa8] sm:$0xf]
        %v3248 = vld [vmem:[%s13 + $0xac] sm:$0xf]
        %v3249 = vld [vmem:[%s13 + $0xb0] sm:$0xf]
        %v3250 = vld [vmem:[%s13 + $0xb4] sm:$0xf]
        %v3251 = vld [vmem:[%s13 + $0xb8] sm:$0xf]
        %v3252 = vld [vmem:[%s13 + $0xbc] sm:$0xf]
        %v3253 = vld [vmem:[%s13 + $0xc0] sm:$0xf]
        %v3254 = vld [vmem:[%s13 + $0xc4] sm:$0xf]
        %v3255 = vld [vmem:[%s13 + $0xc8] sm:$0xf]
        %v3256 = vld [vmem:[%s13 + $0xcc] sm:$0xf]
        %v3257 = vld [vmem:[%s13 + $0xd0] sm:$0xf]
        %v3258 = vld [vmem:[%s13 + $0xd4] sm:$0xf]
        %v3259 = vld [vmem:[%s13 + $0xd8] sm:$0xf]
        %v3260 = vld [vmem:[%s13 + $0xdc] sm:$0xf]
        %v3261 = vld [vmem:[%s13 + $0xe0] sm:$0xf]
        %v3262 = vld [vmem:[%s13 + $0xe4] sm:$0xf]
        %v3263 = vld [vmem:[%s13 + $0xe8] sm:$0xf]
        %v3264 = vld [vmem:[%s13 + $0xec] sm:$0xf]
        %v3265 = vld [vmem:[%s13 + $0xf0] sm:$0xf]
        %v3266 = vld [vmem:[%s13 + $0xf4] sm:$0xf]
        %v3267 = vld [vmem:[%s13 + $0xf8] sm:$0xf]
        %v3268 = vld [vmem:[%s13 + $0xfc] sm:$0xf]
        %v3333 = vunpack.c.l.b16 %v3205
        %v3334 = vunpack.c.l.b16 %v3206
        %v3335 = vunpack.c.l.b16 %v3207
        %v3336 = vunpack.c.l.b16 %v3208
        %v3337 = vunpack.c.l.b16 %v3209
        %v3338 = vunpack.c.l.b16 %v3210
        %v3339 = vunpack.c.l.b16 %v3211
        %v3340 = vunpack.c.l.b16 %v3212
        %v3341 = vunpack.c.l.b16 %v3213
        %v3342 = vunpack.c.l.b16 %v3214
        %v3343 = vunpack.c.l.b16 %v3215
        %v3344 = vunpack.c.l.b16 %v3216
        %v3345 = vunpack.c.l.b16 %v3217
        %v3346 = vunpack.c.l.b16 %v3218
        %v3347 = vunpack.c.l.b16 %v3219
        %v3348 = vunpack.c.l.b16 %v3220
        %v3349 = vunpack.c.l.b16 %v3221
        %v3350 = vunpack.c.l.b16 %v3222
        %v3351 = vunpack.c.l.b16 %v3223
        %v3352 = vunpack.c.l.b16 %v3224
        %v3353 = vunpack.c.l.b16 %v3225
        %v3354 = vunpack.c.l.b16 %v3226
        %v3355 = vunpack.c.l.b16 %v3227
        %v3356 = vunpack.c.l.b16 %v3228
        %v3357 = vunpack.c.l.b16 %v3229
        %v3358 = vunpack.c.l.b16 %v3230
        %v3359 = vunpack.c.l.b16 %v3231
        %v3360 = vunpack.c.l.b16 %v3232
        %v3361 = vunpack.c.l.b16 %v3233
        %v3362 = vunpack.c.l.b16 %v3234
        %v3363 = vunpack.c.l.b16 %v3235
        %v3364 = vunpack.c.l.b16 %v3236
        %v3365 = vunpack.c.l.b16 %v3237
        %v3366 = vunpack.c.l.b16 %v3238
        %v3367 = vunpack.c.l.b16 %v3239
        %v3368 = vunpack.c.l.b16 %v3240
        %v3369 = vunpack.c.l.b16 %v3241
        %v3370 = vunpack.c.l.b16 %v3242
        %v3371 = vunpack.c.l.b16 %v3243
        %v3372 = vunpack.c.l.b16 %v3244
        %v3373 = vunpack.c.l.b16 %v3245
        %v3374 = vunpack.c.l.b16 %v3246
        %v3375 = vunpack.c.l.b16 %v3247
        %v3376 = vunpack.c.l.b16 %v3248
        %v3377 = vunpack.c.l.b16 %v3249
        %v3378 = vunpack.c.l.b16 %v3250
        %v3379 = vunpack.c.l.b16 %v3251
        %v3380 = vunpack.c.l.b16 %v3252
        %v3381 = vunpack.c.l.b16 %v3253
        %v3382 = vunpack.c.l.b16 %v3254
        %v3383 = vunpack.c.l.b16 %v3255
        %v3384 = vunpack.c.l.b16 %v3256
        %v3385 = vunpack.c.l.b16 %v3257
        %v3386 = vunpack.c.l.b16 %v3258
        %v3387 = vunpack.c.l.b16 %v3259
        %v3388 = vunpack.c.l.b16 %v3260
        %v3389 = vunpack.c.l.b16 %v3261
        %v3390 = vunpack.c.l.b16 %v3262
        %v3391 = vunpack.c.l.b16 %v3263
        %v3392 = vunpack.c.l.b16 %v3264
        %v3393 = vunpack.c.l.b16 %v3265
        %v3394 = vunpack.c.l.b16 %v3266
        %v3395 = vunpack.c.l.b16 %v3267
        %v3396 = vunpack.c.l.b16 %v3268
        %v3397 = vpack.c.b16 %v3334, %v3333
        %v3398 = vpack.c.b16 %v3336, %v3335
        %v3399 = vpack.c.b16 %v3338, %v3337
        %v3400 = vpack.c.b16 %v3340, %v3339
        %v3401 = vpack.c.b16 %v3342, %v3341
        %v3402 = vpack.c.b16 %v3344, %v3343
        %v3403 = vpack.c.b16 %v3346, %v3345
        %v3404 = vpack.c.b16 %v3348, %v3347
        %v3405 = vpack.c.b16 %v3350, %v3349
        %v3406 = vpack.c.b16 %v3352, %v3351
        %v3407 = vpack.c.b16 %v3354, %v3353
        %v3408 = vpack.c.b16 %v3356, %v3355
        %v3409 = vpack.c.b16 %v3358, %v3357
        %v3410 = vpack.c.b16 %v3360, %v3359
        %v3411 = vpack.c.b16 %v3362, %v3361
        %v3412 = vpack.c.b16 %v3364, %v3363
        %v3413 = vpack.c.b16 %v3366, %v3365
        %v3414 = vpack.c.b16 %v3368, %v3367
        %v3415 = vpack.c.b16 %v3370, %v3369
        %v3416 = vpack.c.b16 %v3372, %v3371
        %v3417 = vpack.c.b16 %v3374, %v3373
        %v3418 = vpack.c.b16 %v3376, %v3375
        %v3419 = vpack.c.b16 %v3378, %v3377
        %v3420 = vpack.c.b16 %v3380, %v3379
        %v3421 = vpack.c.b16 %v3382, %v3381
        %v3422 = vpack.c.b16 %v3384, %v3383
        %v3423 = vpack.c.b16 %v3386, %v3385
        %v3424 = vpack.c.b16 %v3388, %v3387
        %v3425 = vpack.c.b16 %v3390, %v3389
        %v3426 = vpack.c.b16 %v3392, %v3391
        %v3427 = vpack.c.b16 %v3394, %v3393
        %v3428 = vpack.c.b16 %v3396, %v3395
        %3461 = vmatpush.bf16.msra.mxu0 %v3404
        %3462 = vmatpush.bf16.msra.mxu0 %v3403
        %3463 = vmatpush.bf16.msra.mxu0 %v3402
        %3464 = vmatpush.bf16.msra.mxu0 %v3401
        %3465 = vmatpush.bf16.msra.mxu0 %v3400
        %3466 = vmatpush.bf16.msra.mxu0 %v3399
        %3467 = vmatpush.bf16.msra.mxu0 %v3398
        %3468 = vmatpush.bf16.msra.mxu0 %v3397
        %3469 = vmatmul.bf16.gmra.mxu0 %v3201
        %v3470 = vpop.f32.mrf.mxu0
        %v3471 = vadd.f32 0.0, %v3470
        %v3472 = vpop.f32.mrf.mxu0
        %3473 = vdwg.mxu0
        %3474 = vmatpush.bf16.msra.mxu0 %v3412
        %3475 = vmatpush.bf16.msra.mxu0 %v3411
        %3476 = vmatpush.bf16.msra.mxu0 %v3410
        %3477 = vmatpush.bf16.msra.mxu0 %v3409
        %3478 = vmatpush.bf16.msra.mxu0 %v3408
        %3479 = vmatpush.bf16.msra.mxu0 %v3407
        %3480 = vmatpush.bf16.msra.mxu0 %v3406
        %3481 = vmatpush.bf16.msra.mxu0 %v3405
        %3482 = vmatmul.bf16.gmra.mxu0 %v3202
        %v3483 = vpop.f32.mrf.mxu0
        %v3484 = vadd.f32 %v3471, %v3483
        %v3485 = vpop.f32.mrf.mxu0
        %3486 = vdwg.mxu0
        %3487 = vmatpush.bf16.msra.mxu0 %v3420
        %3488 = vmatpush.bf16.msra.mxu0 %v3419
        %3489 = vmatpush.bf16.msra.mxu0 %v3418
        %3490 = vmatpush.bf16.msra.mxu0 %v3417
        %3491 = vmatpush.bf16.msra.mxu0 %v3416
        %3492 = vmatpush.bf16.msra.mxu0 %v3415
        %3493 = vmatpush.bf16.msra.mxu0 %v3414
        %3494 = vmatpush.bf16.msra.mxu0 %v3413
        %3495 = vmatmul.bf16.gmra.mxu0 %v3203
        %v3496 = vpop.f32.mrf.mxu0
        %v3497 = vadd.f32 %v3484, %v3496
        %v3498 = vpop.f32.mrf.mxu0
        %3499 = vdwg.mxu0
        %3500 = vmatpush.bf16.msra.mxu0 %v3428
        %3501 = vmatpush.bf16.msra.mxu0 %v3427
        %3502 = vmatpush.bf16.msra.mxu0 %v3426
        %3503 = vmatpush.bf16.msra.mxu0 %v3425
        %3504 = vmatpush.bf16.msra.mxu0 %v3424
        %3505 = vmatpush.bf16.msra.mxu0 %v3423
        %3506 = vmatpush.bf16.msra.mxu0 %v3422
        %3507 = vmatpush.bf16.msra.mxu0 %v3421
        %3508 = vmatmul.bf16.gmra.mxu0 %v3204
        %v3509 = vpop.f32.mrf.mxu0
        %v3510 = vadd.f32 %v3497, %v3509
        %v3511 = vpop.f32.mrf.mxu0
        %3512 = vdwg.mxu0
        %v3513 = vld [vmem:[%s12] sm:$0xff]
        %3515 = vset.pattern.permute.xlu0 0
        %3516 = vperm.xlu0 %3515, %v3513
        %v3517 = vpop.permute.xlu0 %3516
        %v3519 = vperm.slane %v3510, 0
        %v3520 = vmul.f32 %v3517, %v3519
        %3521 = vset.pattern.permute.xlu0 1
        %3522 = vperm.xlu0 %3521, %v3513
        %v3523 = vpop.permute.xlu0 %3522
        %v3525 = vperm.slane %v3510, 1
        %v3526 = vmul.f32 %v3523, %v3525
        %v3527 = vadd.f32 %v3520, %v3526
        %v3528 = vld [vmem:[%s14] sm:$0x1]
        %v3530 = vperm.slane %v3528, 0
        %v3532 = vadd.f32 %v3527, %v3530
        %v3533 = vmax.f32 %v3532, 0.0
        %v3534 = vpack.c.bf16 %v1683, %v1683
        %v3535 = vld [vmem:[%s15] sm:$0xf]
        %v3536 = vld [vmem:[%s15 + $0x4] sm:$0xf]
        %v3537 = vld [vmem:[%s15 + $0x8] sm:$0xf]
        %v3538 = vld [vmem:[%s15 + $0xc] sm:$0xf]
        %v3543 = vunpack.c.l.b16 %v3535
        %v3544 = vunpack.c.l.b16 %v3536
        %v3545 = vunpack.c.l.b16 %v3537
        %v3546 = vunpack.c.l.b16 %v3538
        %v3547 = vpack.c.b16 %v3544, %v3543
        %v3548 = vpack.c.b16 %v3546, %v3545
        %vm3551 = vcmask 261120
        %v3553 = vsel %vm3551, %v3534, 0
        %3555 = vmatpush.bf16.msra.mxu0 0
        %3556 = vmatpush.bf16.msra.mxu0 0
        %3557 = vmatpush.bf16.msra.mxu0 0
        %3558 = vmatpush.bf16.msra.mxu0 0
        %3559 = vmatpush.bf16.msra.mxu0 0
        %3560 = vmatpush.bf16.msra.mxu0 0
        %3561 = vmatpush.bf16.msra.mxu0 %v3548
        %3562 = vmatpush.bf16.msra.mxu0 %v3547
        %3563 = vmatmul.bf16.gmra.mxu0 %v3553
        %v3564 = vpop.f32.mrf.mxu0
        %v3565 = vadd.f32 0.0, %v3564
        %v3566 = vpop.f32.mrf.mxu0
        %3567 = vdwg.mxu0
        %v3568 = vpack.c.bf16 %v3533, %v3533
        %v3569 = vld [vmem:[%s16] sm:$0xf]
        %v3570 = vld [vmem:[%s16 + $0x4] sm:$0xf]
        %v3571 = vld [vmem:[%s16 + $0x8] sm:$0xf]
        %v3572 = vld [vmem:[%s16 + $0xc] sm:$0xf]
        %v3577 = vunpack.c.l.b16 %v3569
        %v3578 = vunpack.c.l.b16 %v3570
        %v3579 = vunpack.c.l.b16 %v3571
        %v3580 = vunpack.c.l.b16 %v3572
        %v3581 = vpack.c.b16 %v3578, %v3577
        %v3582 = vpack.c.b16 %v3580, %v3579
        %v3586 = vsel %vm3551, %v3568, 0
        %3588 = vmatpush.bf16.msra.mxu0 0
        %3589 = vmatpush.bf16.msra.mxu0 0
        %3590 = vmatpush.bf16.msra.mxu0 0
        %3591 = vmatpush.bf16.msra.mxu0 0
        %3592 = vmatpush.bf16.msra.mxu0 0
        %3593 = vmatpush.bf16.msra.mxu0 0
        %3594 = vmatpush.bf16.msra.mxu0 %v3582
        %3595 = vmatpush.bf16.msra.mxu0 %v3581
        %3596 = vmatmul.bf16.gmra.mxu0 %v3586
        %v3597 = vpop.f32.mrf.mxu0
        %v3598 = vadd.f32 0.0, %v3597
        %v3599 = vpop.f32.mrf.mxu0
        %3600 = vdwg.mxu0
        %v3602 = vsel %vm3551, %v3565, 0
        %v3605 = vsel %vm3551, %v3598, 0
        %3607 = vmatpush.xpose.msra.mxu0 0.0
        %3608 = vmatpush.xpose.msra.mxu0 0.0
        %3609 = vmatpush.xpose.msra.mxu0 0.0
        %3610 = vmatpush.xpose.msra.mxu0 0.0
        %3611 = vmatpush.xpose.msra.mxu0 0.0
        %3612 = vmatpush.xpose.msra.mxu0 0.0
        %3613 = vmatpush.xpose.msra.mxu0 0.0
        %3614 = vmatpush.xpose.msra.mxu0 0.0
        %3615 = vmatpush.xpose.msra.mxu0 0.0
        %3616 = vmatpush.xpose.msra.mxu0 0.0
        %3617 = vmatpush.xpose.msra.mxu0 0.0
        %3618 = vmatpush.xpose.msra.mxu0 0.0
        %3619 = vmatpush.xpose.msra.mxu0 0.0
        %3620 = vmatpush.xpose.msra.mxu0 0.0
        %3621 = vmatpush.xpose.msra.mxu0 0.0
        %3622 = vmatpush.xpose.msra.mxu0 %v3605
        %3623 = vmatmul.f32.gmra.mxu0 %v3602
        %v3624 = vpop.f32.mrf.mxu0
        %v3625 = vadd.f32 0.0, %v3624
        %3626 = vdwg.mxu0
        %v3627 = vmul.f32 %v3625, 0.17677669
        %vm3628 = vcmask 64512
        %v3629 = vsel %vm3628, %v3627, -inf
        %3630 = vmax.xlane.f32.xlu0 %v3629
        %v3631 = vpop.xlane.xlu0 %3630
        %v3632 = vsub.f32 %v3627, %v3631
        %v3633 = vmul.f32 %v3632, 1.442695
        %v3634 = vpow.pop %v3633
        %v3635 = vsel %vm3628, %v3634, 0.0
        %3636 = vadd.xlane.f32.xlu0 %v3635
        %v3637 = vpop.xlane.xlu0 %3636
        %v3638 = vrcp.pop %v3637
        %v3639 = vmul.f32 %v3634, %v3638
        %3640 = vrot.lane.b32.xlu0 %v3598, 96
        %v3641 = vpop.permute.xlu0 %3640
        %v3644 = vsel %vm3628, %v3639, 0
        %3646 = vmatpush.msra.mxu0 0.0
        %3647 = vmatpush.msra.mxu0 0.0
        %3648 = vmatpush.msra.mxu0 0.0
        %3649 = vmatpush.msra.mxu0 0.0
        %3650 = vmatpush.msra.mxu0 0.0
        %3651 = vmatpush.msra.mxu0 0.0
        %3652 = vmatpush.msra.mxu0 0.0
        %3653 = vmatpush.msra.mxu0 0.0
        %3654 = vmatpush.msra.mxu0 0.0
        %3655 = vmatpush.msra.mxu0 0.0
        %3656 = vmatpush.msra.mxu0 0.0
        %3657 = vmatpush.msra.mxu0 0.0
        %3658 = vmatpush.msra.mxu0 0.0
        %3659 = vmatpush.msra.mxu0 0.0
        %3660 = vmatpush.msra.mxu0 0.0
        %3661 = vmatpush.msra.mxu0 %v3641
        %3662 = vmatmul.f32.gmra.mxu0 %v3644
        %v3663 = vpop.f32.mrf.mxu0
        %v3664 = vadd.f32 0.0, %v3663
        %3665 = vdwg.mxu0
        %v3666 = vpack.c.bf16 %v3122, %v3122
        %v3667 = vld [vmem:[%s17] sm:$0xf]
        %v3668 = vld [vmem:[%s17 + $0x4] sm:$0xf]
        %v3669 = vld [vmem:[%s17 + $0x8] sm:$0xf]
        %v3670 = vld [vmem:[%s17 + $0xc] sm:$0xf]
        %v3675 = vunpack.c.l.b16 %v3667
        %v3676 = vunpack.c.l.b16 %v3668
        %v3677 = vunpack.c.l.b16 %v3669
        %v3678 = vunpack.c.l.b16 %v3670
        %v3679 = vpack.c.b16 %v3676, %v3675
        %v3680 = vpack.c.b16 %v3678, %v3677
        %v3684 = vsel %vm3551, %v3666, 0
        %3686 = vmatpush.bf16.msra.mxu0 0
        %3687 = vmatpush.bf16.msra.mxu0 0
        %3688 = vmatpush.bf16.msra.mxu0 0
        %3689 = vmatpush.bf16.msra.mxu0 0
        %3690 = vmatpush.bf16.msra.mxu0 0
        %3691 = vmatpush.bf16.msra.mxu0 0
        %3692 = vmatpush.bf16.msra.mxu0 %v3680
        %3693 = vmatpush.bf16.msra.mxu0 %v3679
        %3694 = vmatmul.bf16.gmra.mxu0 %v3684
        %v3695 = vpop.f32.mrf.mxu0
        %v3696 = vadd.f32 0.0, %v3695
        %v3697 = vpop.f32.mrf.mxu0
        %3698 = vdwg.mxu0
        %v3699 = vpack.c.bf16 %v3664, %v3664
        %v3700 = vld [vmem:[%s18] sm:$0xf]
        %v3701 = vld [vmem:[%s18 + $0x4] sm:$0xf]
        %v3702 = vld [vmem:[%s18 + $0x8] sm:$0xf]
        %v3703 = vld [vmem:[%s18 + $0xc] sm:$0xf]
        %v3708 = vunpack.c.l.b16 %v3700
        %v3709 = vunpack.c.l.b16 %v3701
        %v3710 = vunpack.c.l.b16 %v3702
        %v3711 = vunpack.c.l.b16 %v3703
        %v3712 = vpack.c.b16 %v3709, %v3708
        %v3713 = vpack.c.b16 %v3711, %v3710
        %v3717 = vsel %vm3551, %v3699, 0
        %3719 = vmatpush.bf16.msra.mxu0 0
        %3720 = vmatpush.bf16.msra.mxu0 0
        %3721 = vmatpush.bf16.msra.mxu0 0
        %3722 = vmatpush.bf16.msra.mxu0 0
        %3723 = vmatpush.bf16.msra.mxu0 0
        %3724 = vmatpush.bf16.msra.mxu0 0
        %3725 = vmatpush.bf16.msra.mxu0 %v3713
        %3726 = vmatpush.bf16.msra.mxu0 %v3712
        %3727 = vmatmul.bf16.gmra.mxu0 %v3717
        %v3728 = vpop.f32.mrf.mxu0
        %v3729 = vadd.f32 0.0, %v3728
        %v3730 = vpop.f32.mrf.mxu0
        %3731 = vdwg.mxu0
        %v3733 = vsel %vm3551, %v3696, 0
        %v3736 = vsel %vm3551, %v3729, 0
        %3738 = vmatpush.xpose.msra.mxu0 0.0
        %3739 = vmatpush.xpose.msra.mxu0 0.0
        %3740 = vmatpush.xpose.msra.mxu0 0.0
        %3741 = vmatpush.xpose.msra.mxu0 0.0
        %3742 = vmatpush.xpose.msra.mxu0 0.0
        %3743 = vmatpush.xpose.msra.mxu0 0.0
        %3744 = vmatpush.xpose.msra.mxu0 0.0
        %3745 = vmatpush.xpose.msra.mxu0 0.0
        %3746 = vmatpush.xpose.msra.mxu0 0.0
        %3747 = vmatpush.xpose.msra.mxu0 0.0
        %3748 = vmatpush.xpose.msra.mxu0 0.0
        %3749 = vmatpush.xpose.msra.mxu0 0.0
        %3750 = vmatpush.xpose.msra.mxu0 0.0
        %3751 = vmatpush.xpose.msra.mxu0 0.0
        %3752 = vmatpush.xpose.msra.mxu0 0.0
        %3753 = vmatpush.xpose.msra.mxu0 %v3736
        %3754 = vmatmul.f32.gmra.mxu0 %v3733
        %v3755 = vpop.f32.mrf.mxu0
        %v3756 = vadd.f32 0.0, %v3755
        %3757 = vdwg.mxu0
        %v3758 = vmul.f32 %v3756, 0.17677669
        %v3759 = vsel %vm3628, %v3758, -inf
        %3760 = vmax.xlane.f32.xlu0 %v3759
        %v3761 = vpop.xlane.xlu0 %3760
        %v3762 = vsub.f32 %v3758, %v3761
        %v3763 = vmul.f32 %v3762, 1.442695
        %v3764 = vpow.pop %v3763
        %v3765 = vsel %vm3628, %v3764, 0.0
        %3766 = vadd.xlane.f32.xlu0 %v3765
        %v3767 = vpop.xlane.xlu0 %3766
        %v3768 = vrcp.pop %v3767
        %v3769 = vmul.f32 %v3764, %v3768
        %3770 = vrot.lane.b32.xlu0 %v3729, 96
        %v3771 = vpop.permute.xlu0 %3770
        %v3774 = vsel %vm3628, %v3769, 0
        %3776 = vmatpush.msra.mxu0 0.0
        %3777 = vmatpush.msra.mxu0 0.0
        %3778 = vmatpush.msra.mxu0 0.0
        %3779 = vmatpush.msra.mxu0 0.0
        %3780 = vmatpush.msra.mxu0 0.0
        %3781 = vmatpush.msra.mxu0 0.0
        %3782 = vmatpush.msra.mxu0 0.0
        %3783 = vmatpush.msra.mxu0 0.0
        %3784 = vmatpush.msra.mxu0 0.0
        %3785 = vmatpush.msra.mxu0 0.0
        %3786 = vmatpush.msra.mxu0 0.0
        %3787 = vmatpush.msra.mxu0 0.0
        %3788 = vmatpush.msra.mxu0 0.0
        %3789 = vmatpush.msra.mxu0 0.0
        %3790 = vmatpush.msra.mxu0 0.0
        %3791 = vmatpush.msra.mxu0 %v3771
        %3792 = vmatmul.f32.gmra.mxu0 %v3774
        %v3793 = vpop.f32.mrf.mxu0
        %v3794 = vadd.f32 0.0, %v3793
        %3795 = vdwg.mxu0
        %v3796 = vlaneseq
        %vm3797 = vcmp.ge.s32.totalorder %v3796, 0
        %vm3798 = vcmp.lt.s32.totalorder %v3796, 32
        %vm3799 = vmand %vm3797, %vm3798
        %3800 = vst.msk [vmem:[#allocation2] sm:$0x1] %vm3799, %v3664
        %3802 = vst [vmem:[#allocation1] sm:$0xff] %v3664
        %s3803 = scalar_lea.vmem [#allocation1], 1
        %v3804 = vld [vmem:[%s3803] ss:$9 sm:$0xff]
        %3805 = vrot.lane.b32.xlu0 %v3804, 32
        %v3806 = vpop.permute.xlu0 %3805
        %vm3808 = vcmp.ge.s32.totalorder %v3796, 32
        %vm3809 = vcmp.lt.s32.totalorder %v3796, 64
        %vm3810 = vmand %vm3808, %vm3809
        %3811 = vst.msk [vmem:[#allocation2] sm:$0x1] %vm3810, %v3806
        %3812 = vst [vmem:[#allocation1] sm:$0xff] %v3664
        %s3813 = scalar_lea.vmem [#allocation1], 2
        %v3814 = vld [vmem:[%s3813] ss:$9 sm:$0xff]
        %3815 = vrot.lane.b32.xlu0 %v3814, 64
        %v3816 = vpop.permute.xlu0 %3815
        %vm3818 = vcmp.ge.s32.totalorder %v3796, 64
        %vm3819 = vcmp.lt.s32.totalorder %v3796, 96
        %vm3820 = vmand %vm3818, %vm3819
        %3821 = vst.msk [vmem:[#allocation2] sm:$0x1] %vm3820, %v3816
        %3822 = vst [vmem:[#allocation1] sm:$0xff] %v3664
        %s3823 = scalar_lea.vmem [#allocation1], 3
        %v3824 = vld [vmem:[%s3823] ss:$9 sm:$0xff]
        %3825 = vrot.lane.b32.xlu0 %v3824, 96
        %v3826 = vpop.permute.xlu0 %3825
        %vm3828 = vcmp.ge.s32.totalorder %v3796, 96
        %vm3829 = vcmp.lt.s32.totalorder %v3796, 128
        %vm3830 = vmand %vm3828, %vm3829
        %3831 = vst.msk [vmem:[#allocation2] sm:$0x1] %vm3830, %v3826
        %3832 = vst [vmem:[#allocation1] sm:$0xff] %v3664
        %s3833 = scalar_lea.vmem [#allocation1], 4
        %v3834 = vld [vmem:[%s3833] ss:$9 sm:$0xff]
        %3836 = vst.msk [vmem:[#allocation2 + $0x1] sm:$0x1] %vm3799, %v3834
        %3837 = vst [vmem:[#allocation1] sm:$0xff] %v3664
        %s3838 = scalar_lea.vmem [#allocation1], 5
        %v3839 = vld [vmem:[%s3838] ss:$9 sm:$0xff]
        %3840 = vrot.lane.b32.xlu0 %v3839, 32
        %v3841 = vpop.permute.xlu0 %3840
        %3843 = vst.msk [vmem:[#allocation2 + $0x1] sm:$0x1] %vm3810, %v3841
        %3844 = vst [vmem:[#allocation1] sm:$0xff] %v3664
        %s3845 = scalar_lea.vmem [#allocation1], 6
        %v3846 = vld [vmem:[%s3845] ss:$9 sm:$0xff]
        %3847 = vrot.lane.b32.xlu0 %v3846, 64
        %v3848 = vpop.permute.xlu0 %3847
        %3850 = vst.msk [vmem:[#allocation2 + $0x1] sm:$0x1] %vm3820, %v3848
        %3851 = vst [vmem:[#allocation1] sm:$0xff] %v3664
        %s3852 = scalar_lea.vmem [#allocation1], 7
        %v3853 = vld [vmem:[%s3852] ss:$9 sm:$0xff]
        %3854 = vrot.lane.b32.xlu0 %v3853, 96
        %v3855 = vpop.permute.xlu0 %3854
        %3857 = vst.msk [vmem:[#allocation2 + $0x1] sm:$0x1] %vm3830, %v3855
        %3858 = vst.msk [vmem:[#allocation2 + $0x2] sm:$0x1] %vm3799, %v3794
        %3860 = vst [vmem:[#allocation1] sm:$0xff] %v3794
        %s3861 = scalar_lea.vmem [#allocation1], 1
        %v3862 = vld [vmem:[%s3861] ss:$9 sm:$0xff]
        %3863 = vrot.lane.b32.xlu0 %v3862, 32
        %v3864 = vpop.permute.xlu0 %3863
        %3866 = vst.msk [vmem:[#allocation2 + $0x2] sm:$0x1] %vm3810, %v3864
        %3867 = vst [vmem:[#allocation1] sm:$0xff] %v3794
        %s3868 = scalar_lea.vmem [#allocation1], 2
        %v3869 = vld [vmem:[%s3868] ss:$9 sm:$0xff]
        %3870 = vrot.lane.b32.xlu0 %v3869, 64
        %v3871 = vpop.permute.xlu0 %3870
        %3873 = vst.msk [vmem:[#allocation2 + $0x2] sm:$0x1] %vm3820, %v3871
        %3874 = vst [vmem:[#allocation1] sm:$0xff] %v3794
        %s3875 = scalar_lea.vmem [#allocation1], 3
        %v3876 = vld [vmem:[%s3875] ss:$9 sm:$0xff]
        %3877 = vrot.lane.b32.xlu0 %v3876, 96
        %v3878 = vpop.permute.xlu0 %3877
        %3880 = vst.msk [vmem:[#allocation2 + $0x2] sm:$0x1] %vm3830, %v3878
        %3881 = vst [vmem:[#allocation1] sm:$0xff] %v3794
        %s3882 = scalar_lea.vmem [#allocation1], 4
        %v3883 = vld [vmem:[%s3882] ss:$9 sm:$0xff]
        %3885 = vst.msk [vmem:[#allocation2 + $0x3] sm:$0x1] %vm3799, %v3883
        %3886 = vst [vmem:[#allocation1] sm:$0xff] %v3794
        %s3887 = scalar_lea.vmem [#allocation1], 5
        %v3888 = vld [vmem:[%s3887] ss:$9 sm:$0xff]
        %3889 = vrot.lane.b32.xlu0 %v3888, 32
        %v3890 = vpop.permute.xlu0 %3889
        %3892 = vst.msk [vmem:[#allocation2 + $0x3] sm:$0x1] %vm3810, %v3890
        %3893 = vst [vmem:[#allocation1] sm:$0xff] %v3794
        %s3894 = scalar_lea.vmem [#allocation1], 6
        %v3895 = vld [vmem:[%s3894] ss:$9 sm:$0xff]
        %3896 = vrot.lane.b32.xlu0 %v3895, 64
        %v3897 = vpop.permute.xlu0 %3896
        %3899 = vst.msk [vmem:[#allocation2 + $0x3] sm:$0x1] %vm3820, %v3897
        %3900 = vst [vmem:[#allocation1] sm:$0xff] %v3794
        %s3901 = scalar_lea.vmem [#allocation1], 7
        %v3902 = vld [vmem:[%s3901] ss:$9 sm:$0xff]
        %3903 = vrot.lane.b32.xlu0 %v3902, 96
        %v3904 = vpop.permute.xlu0 %3903
        %3906 = vst.msk [vmem:[#allocation2 + $0x3] sm:$0x1] %vm3830, %v3904
        %v3907 = vld [vmem:[#allocation2] sm:$0xf]
        %v3909 = vperm.slane %v3907, 0
        %v3910 = vperm.slane %v3907, 1
        %v3911 = vperm.slane %v3907, 2
        %v3912 = vperm.slane %v3907, 3
        %v3917 = vpack.c.bf16 %v3909, %v3909
        %v3918 = vpack.c.bf16 %v3910, %v3910
        %v3919 = vpack.c.bf16 %v3911, %v3911
        %v3920 = vpack.c.bf16 %v3912, %v3912
        %v3921 = vld [vmem:[%s19] sm:$0xf]
        %v3922 = vld [vmem:[%s19 + $0x4] sm:$0xf]
        %v3923 = vld [vmem:[%s19 + $0x8] sm:$0xf]
        %v3924 = vld [vmem:[%s19 + $0xc] sm:$0xf]
        %v3925 = vld [vmem:[%s19 + $0x10] sm:$0xf]
        %v3926 = vld [vmem:[%s19 + $0x14] sm:$0xf]
        %v3927 = vld [vmem:[%s19 + $0x18] sm:$0xf]
        %v3928 = vld [vmem:[%s19 + $0x1c] sm:$0xf]
        %v3929 = vld [vmem:[%s19 + $0x20] sm:$0xf]
        %v3930 = vld [vmem:[%s19 + $0x24] sm:$0xf]
        %v3931 = vld [vmem:[%s19 + $0x28] sm:$0xf]
        %v3932 = vld [vmem:[%s19 + $0x2c] sm:$0xf]
        %v3933 = vld [vmem:[%s19 + $0x30] sm:$0xf]
        %v3934 = vld [vmem:[%s19 + $0x34] sm:$0xf]
        %v3935 = vld [vmem:[%s19 + $0x38] sm:$0xf]
        %v3936 = vld [vmem:[%s19 + $0x3c] sm:$0xf]
        %v3937 = vld [vmem:[%s19 + $0x40] sm:$0xf]
        %v3938 = vld [vmem:[%s19 + $0x44] sm:$0xf]
        %v3939 = vld [vmem:[%s19 + $0x48] sm:$0xf]
        %v3940 = vld [vmem:[%s19 + $0x4c] sm:$0xf]
        %v3941 = vld [vmem:[%s19 + $0x50] sm:$0xf]
        %v3942 = vld [vmem:[%s19 + $0x54] sm:$0xf]
        %v3943 = vld [vmem:[%s19 + $0x58] sm:$0xf]
        %v3944 = vld [vmem:[%s19 + $0x5c] sm:$0xf]
        %v3945 = vld [vmem:[%s19 + $0x60] sm:$0xf]
        %v3946 = vld [vmem:[%s19 + $0x64] sm:$0xf]
        %v3947 = vld [vmem:[%s19 + $0x68] sm:$0xf]
        %v3948 = vld [vmem:[%s19 + $0x6c] sm:$0xf]
        %v3949 = vld [vmem:[%s19 + $0x70] sm:$0xf]
        %v3950 = vld [vmem:[%s19 + $0x74] sm:$0xf]
        %v3951 = vld [vmem:[%s19 + $0x78] sm:$0xf]
        %v3952 = vld [vmem:[%s19 + $0x7c] sm:$0xf]
        %v3953 = vld [vmem:[%s19 + $0x80] sm:$0xf]
        %v3954 = vld [vmem:[%s19 + $0x84] sm:$0xf]
        %v3955 = vld [vmem:[%s19 + $0x88] sm:$0xf]
        %v3956 = vld [vmem:[%s19 + $0x8c] sm:$0xf]
        %v3957 = vld [vmem:[%s19 + $0x90] sm:$0xf]
        %v3958 = vld [vmem:[%s19 + $0x94] sm:$0xf]
        %v3959 = vld [vmem:[%s19 + $0x98] sm:$0xf]
        %v3960 = vld [vmem:[%s19 + $0x9c] sm:$0xf]
        %v3961 = vld [vmem:[%s19 + $0xa0] sm:$0xf]
        %v3962 = vld [vmem:[%s19 + $0xa4] sm:$0xf]
        %v3963 = vld [vmem:[%s19 + $0xa8] sm:$0xf]
        %v3964 = vld [vmem:[%s19 + $0xac] sm:$0xf]
        %v3965 = vld [vmem:[%s19 + $0xb0] sm:$0xf]
        %v3966 = vld [vmem:[%s19 + $0xb4] sm:$0xf]
        %v3967 = vld [vmem:[%s19 + $0xb8] sm:$0xf]
        %v3968 = vld [vmem:[%s19 + $0xbc] sm:$0xf]
        %v3969 = vld [vmem:[%s19 + $0xc0] sm:$0xf]
        %v3970 = vld [vmem:[%s19 + $0xc4] sm:$0xf]
        %v3971 = vld [vmem:[%s19 + $0xc8] sm:$0xf]
        %v3972 = vld [vmem:[%s19 + $0xcc] sm:$0xf]
        %v3973 = vld [vmem:[%s19 + $0xd0] sm:$0xf]
        %v3974 = vld [vmem:[%s19 + $0xd4] sm:$0xf]
        %v3975 = vld [vmem:[%s19 + $0xd8] sm:$0xf]
        %v3976 = vld [vmem:[%s19 + $0xdc] sm:$0xf]
        %v3977 = vld [vmem:[%s19 + $0xe0] sm:$0xf]
        %v3978 = vld [vmem:[%s19 + $0xe4] sm:$0xf]
        %v3979 = vld [vmem:[%s19 + $0xe8] sm:$0xf]
        %v3980 = vld [vmem:[%s19 + $0xec] sm:$0xf]
        %v3981 = vld [vmem:[%s19 + $0xf0] sm:$0xf]
        %v3982 = vld [vmem:[%s19 + $0xf4] sm:$0xf]
        %v3983 = vld [vmem:[%s19 + $0xf8] sm:$0xf]
        %v3984 = vld [vmem:[%s19 + $0xfc] sm:$0xf]
        %v3985 = vld [vmem:[%s20] sm:$0x1]
        %v4050 = vunpack.c.l.b16 %v3921
        %v4051 = vunpack.c.l.b16 %v3922
        %v4052 = vunpack.c.l.b16 %v3923
        %v4053 = vunpack.c.l.b16 %v3924
        %v4054 = vunpack.c.l.b16 %v3925
        %v4055 = vunpack.c.l.b16 %v3926
        %v4056 = vunpack.c.l.b16 %v3927
        %v4057 = vunpack.c.l.b16 %v3928
        %v4058 = vunpack.c.l.b16 %v3929
        %v4059 = vunpack.c.l.b16 %v3930
        %v4060 = vunpack.c.l.b16 %v3931
        %v4061 = vunpack.c.l.b16 %v3932
        %v4062 = vunpack.c.l.b16 %v3933
        %v4063 = vunpack.c.l.b16 %v3934
        %v4064 = vunpack.c.l.b16 %v3935
        %v4065 = vunpack.c.l.b16 %v3936
        %v4066 = vunpack.c.l.b16 %v3937
        %v4067 = vunpack.c.l.b16 %v3938
        %v4068 = vunpack.c.l.b16 %v3939
        %v4069 = vunpack.c.l.b16 %v3940
        %v4070 = vunpack.c.l.b16 %v3941
        %v4071 = vunpack.c.l.b16 %v3942
        %v4072 = vunpack.c.l.b16 %v3943
        %v4073 = vunpack.c.l.b16 %v3944
        %v4074 = vunpack.c.l.b16 %v3945
        %v4075 = vunpack.c.l.b16 %v3946
        %v4076 = vunpack.c.l.b16 %v3947
        %v4077 = vunpack.c.l.b16 %v3948
        %v4078 = vunpack.c.l.b16 %v3949
        %v4079 = vunpack.c.l.b16 %v3950
        %v4080 = vunpack.c.l.b16 %v3951
        %v4081 = vunpack.c.l.b16 %v3952
        %v4082 = vunpack.c.l.b16 %v3953
        %v4083 = vunpack.c.l.b16 %v3954
        %v4084 = vunpack.c.l.b16 %v3955
        %v4085 = vunpack.c.l.b16 %v3956
        %v4086 = vunpack.c.l.b16 %v3957
        %v4087 = vunpack.c.l.b16 %v3958
        %v4088 = vunpack.c.l.b16 %v3959
        %v4089 = vunpack.c.l.b16 %v3960
        %v4090 = vunpack.c.l.b16 %v3961
        %v4091 = vunpack.c.l.b16 %v3962
        %v4092 = vunpack.c.l.b16 %v3963
        %v4093 = vunpack.c.l.b16 %v3964
        %v4094 = vunpack.c.l.b16 %v3965
        %v4095 = vunpack.c.l.b16 %v3966
        %v4096 = vunpack.c.l.b16 %v3967
        %v4097 = vunpack.c.l.b16 %v3968
        %v4098 = vunpack.c.l.b16 %v3969
        %v4099 = vunpack.c.l.b16 %v3970
        %v4100 = vunpack.c.l.b16 %v3971
        %v4101 = vunpack.c.l.b16 %v3972
        %v4102 = vunpack.c.l.b16 %v3973
        %v4103 = vunpack.c.l.b16 %v3974
        %v4104 = vunpack.c.l.b16 %v3975
        %v4105 = vunpack.c.l.b16 %v3976
        %v4106 = vunpack.c.l.b16 %v3977
        %v4107 = vunpack.c.l.b16 %v3978
        %v4108 = vunpack.c.l.b16 %v3979
        %v4109 = vunpack.c.l.b16 %v3980
        %v4110 = vunpack.c.l.b16 %v3981
        %v4111 = vunpack.c.l.b16 %v3982
        %v4112 = vunpack.c.l.b16 %v3983
        %v4113 = vunpack.c.l.b16 %v3984
        %v4114 = vpack.c.b16 %v4051, %v4050
        %v4115 = vpack.c.b16 %v4053, %v4052
        %v4116 = vpack.c.b16 %v4055, %v4054
        %v4117 = vpack.c.b16 %v4057, %v4056
        %v4118 = vpack.c.b16 %v4059, %v4058
        %v4119 = vpack.c.b16 %v4061, %v4060
        %v4120 = vpack.c.b16 %v4063, %v4062
        %v4121 = vpack.c.b16 %v4065, %v4064
        %v4122 = vpack.c.b16 %v4067, %v4066
        %v4123 = vpack.c.b16 %v4069, %v4068
        %v4124 = vpack.c.b16 %v4071, %v4070
        %v4125 = vpack.c.b16 %v4073, %v4072
        %v4126 = vpack.c.b16 %v4075, %v4074
        %v4127 = vpack.c.b16 %v4077, %v4076
        %v4128 = vpack.c.b16 %v4079, %v4078
        %v4129 = vpack.c.b16 %v4081, %v4080
        %v4130 = vpack.c.b16 %v4083, %v4082
        %v4131 = vpack.c.b16 %v4085, %v4084
        %v4132 = vpack.c.b16 %v4087, %v4086
        %v4133 = vpack.c.b16 %v4089, %v4088
        %v4134 = vpack.c.b16 %v4091, %v4090
        %v4135 = vpack.c.b16 %v4093, %v4092
        %v4136 = vpack.c.b16 %v4095, %v4094
        %v4137 = vpack.c.b16 %v4097, %v4096
        %v4138 = vpack.c.b16 %v4099, %v4098
        %v4139 = vpack.c.b16 %v4101, %v4100
        %v4140 = vpack.c.b16 %v4103, %v4102
        %v4141 = vpack.c.b16 %v4105, %v4104
        %v4142 = vpack.c.b16 %v4107, %v4106
        %v4143 = vpack.c.b16 %v4109, %v4108
        %v4144 = vpack.c.b16 %v4111, %v4110
        %v4145 = vpack.c.b16 %v4113, %v4112
        %4178 = vmatpush.bf16.msra.mxu0 %v4121
        %4179 = vmatpush.bf16.msra.mxu0 %v4120
        %4180 = vmatpush.bf16.msra.mxu0 %v4119
        %4181 = vmatpush.bf16.msra.mxu0 %v4118
        %4182 = vmatpush.bf16.msra.mxu0 %v4117
        %4183 = vmatpush.bf16.msra.mxu0 %v4116
        %4184 = vmatpush.bf16.msra.mxu0 %v4115
        %4185 = vmatpush.bf16.msra.mxu0 %v4114
        %4186 = vmatmul.bf16.gmra.mxu0 %v3917
        %v4187 = vpop.f32.mrf.mxu0
        %v4188 = vadd.f32 %v3985, %v4187
        %v4189 = vpop.f32.mrf.mxu0
        %4190 = vdwg.mxu0
        %4191 = vmatpush.bf16.msra.mxu0 %v4129
        %4192 = vmatpush.bf16.msra.mxu0 %v4128
        %4193 = vmatpush.bf16.msra.mxu0 %v4127
        %4194 = vmatpush.bf16.msra.mxu0 %v4126
        %4195 = vmatpush.bf16.msra.mxu0 %v4125
        %4196 = vmatpush.bf16.msra.mxu0 %v4124
        %4197 = vmatpush.bf16.msra.mxu0 %v4123
        %4198 = vmatpush.bf16.msra.mxu0 %v4122
        %4199 = vmatmul.bf16.gmra.mxu0 %v3918
        %v4200 = vpop.f32.mrf.mxu0
        %v4201 = vadd.f32 %v4188, %v4200
        %v4202 = vpop.f32.mrf.mxu0
        %4203 = vdwg.mxu0
        %4204 = vmatpush.bf16.msra.mxu0 %v4137
        %4205 = vmatpush.bf16.msra.mxu0 %v4136
        %4206 = vmatpush.bf16.msra.mxu0 %v4135
        %4207 = vmatpush.bf16.msra.mxu0 %v4134
        %4208 = vmatpush.bf16.msra.mxu0 %v4133
        %4209 = vmatpush.bf16.msra.mxu0 %v4132
        %4210 = vmatpush.bf16.msra.mxu0 %v4131
        %4211 = vmatpush.bf16.msra.mxu0 %v4130
        %4212 = vmatmul.bf16.gmra.mxu0 %v3919
        %v4213 = vpop.f32.mrf.mxu0
        %v4214 = vadd.f32 %v4201, %v4213
        %v4215 = vpop.f32.mrf.mxu0
        %4216 = vdwg.mxu0
        %4217 = vmatpush.bf16.msra.mxu0 %v4145
        %4218 = vmatpush.bf16.msra.mxu0 %v4144
        %4219 = vmatpush.bf16.msra.mxu0 %v4143
        %4220 = vmatpush.bf16.msra.mxu0 %v4142
        %4221 = vmatpush.bf16.msra.mxu0 %v4141
        %4222 = vmatpush.bf16.msra.mxu0 %v4140
        %4223 = vmatpush.bf16.msra.mxu0 %v4139
        %4224 = vmatpush.bf16.msra.mxu0 %v4138
        %4225 = vmatmul.bf16.gmra.mxu0 %v3920
        %v4226 = vpop.f32.mrf.mxu0
        %v4227 = vadd.f32 %v4214, %v4226
        %v4228 = vpop.f32.mrf.mxu0
        %4229 = vdwg.mxu0
        %vm4230 = vcmask 73728
        %4231 = vst.msk [vmem:[%s672] sm:$0x1] %vm4230, %v4227
        %s4232 = sand.u32 %s499, 1
        %s4233 = scalar_lea.sflag [#allocation4], %s4232
        %s4234 = sand.u32 %s499, 1
        %s4235 = scalar_lea.vmem [#allocation3], %s4234
        // Predicated region
        $region105: #{tpu_custom_call.1} parent=103 // pred_check
          %p4236 = pneg %p509
        $region106: #{tpu_custom_call.1} parent=103 // pred_check_branch
          %4238 = sbr.rel (%p4236) target = $region108
        $region107: #{tpu_custom_call.1} parent=103 // pred_region
          %4240 = vsyncadd %s4233, 0
          %s4241 = scalar_lea.hbm %s21, %s35
          %s4243 = sshll.u32 %s4235, 4
          %s4244 = int_to_ptr.vmem [resolvable:$true] %s4243
          %s4245 = sshll.u32 %s4241, 4
          %s4246 = int_to_ptr.hbm [resolvable:$true] %s4245
          %4248 = dma.vmem_to_hbm [thread:$0]  %s4244, 16, %s4246, %s4233
        $region108: #{tpu_custom_call.1} parent=103 // pred_fallthru
          _
      $region104: #{tpu_custom_call.1} parent=5 // pred_fallthru
        _
      %p4249 = scmp.le.s32.totalorder 2, %s30
      // Predicated region
      $region109: #{tpu_custom_call.1} parent=5 // pred_check
        %p4250 = pneg %p4249
      $region110: #{tpu_custom_call.1} parent=5 // pred_check_branch
        %4252 = sbr.rel (%p4250) target = $region112
      $region111: #{tpu_custom_call.1} parent=5 // pred_region
        %s4253 = ssub.s32 %s30, 2
        // Predicated region
        $region113: #{tpu_custom_call.1} parent=111 // pred_check
          %p4254 = pneg %p515
        $region114: #{tpu_custom_call.1} parent=111 // pred_check_branch
          %4256 = sbr.rel (%p4254) target = $region116
        $region115: #{tpu_custom_call.1} parent=111 // pred_region
          %s4257 = sand.u32 %s500, 1
          %s4258 = scalar_lea.sflag [#allocation4], %s4257
          %s4259 = sand.u32 %s500, 1
          %s4260 = scalar_lea.vmem [#allocation3], %s4259
          %4262 = dma.done %s4258, 16
        $region116: #{tpu_custom_call.1} parent=111 // pred_fallthru
          _
      $region112: #{tpu_custom_call.1} parent=5 // pred_fallthru
        _
    $region6: #{tpu_custom_call.1} parent=1 // loop_footer
      %s34 = sadd.s32 1, %s30
    $region7: #{tpu_custom_call.1} parent=1 // loop_footer_branch
      %29 = sbr.rel target = $region3
    $region8: #{tpu_custom_call.1} parent=1 // loop_exit
      _
    %4263 = vsyncpa [#allocation4], 1
    %s4264 = scalar_lea.sflag [#allocation4], 1
    %4265 = vsyncpa %s4264, 1

</llo_original>
